<compile_context>
chip_gen: v5e
topology: v5e:2x2
jax: 0.10.0
libtpu: 0.0.40
codegen_flags: <defaults>
</compile_context>

<pallas_src>
import math

import jax
import jax.numpy as jnp
from jax.experimental import pallas as pl
from jax.experimental.pallas import tpu as pltpu


# ----------------------------------------------------------------------------
# Fused kernel factory
# ----------------------------------------------------------------------------
def _make_fused_kernel(*, dim_input, dim_hidden, num_heads, num_sabs, use_ln, tb, n):
    di, dh = dim_input, dim_hidden
    H = num_heads
    assert dh % H == 0
    hd = dh // H
    TB, N = tb, n
    M = TB * N                       # node rows per grid step (TB graphs x N)
    f32 = jnp.float32

    def kernel(x_ref, seed_ref, wqkv_ref, bqkv_ref, wo_ref, vec_ref, fc_ref, o_ref):

        def _ln(x, g, b):
            mu = jnp.mean(x, axis=-1, keepdims=True)
            var = jnp.mean((x - mu) ** 2, axis=-1, keepdims=True)
            return (x - mu) * jax.lax.rsqrt(var + 1e-5) * g + b

        def _qkv(x2, l, d_in):
            # fused Q|K|V projection: one MXU pass, 3*dh output lanes.
            w = wqkv_ref[l, :d_in, :]
            return jnp.dot(x2.astype(w.dtype), w,
                           preferred_element_type=f32) + bqkv_ref[l]

        def _attn(qp3, kp3, vp3):
            # per-graph batched attention; 1/sqrt(dh) already folded into K.
            # qp3: [TB, Nq, dh]; kp3/vp3: [TB, N, dh]  (f32)
            outs = []
            for hh in range(H):
                sl = slice(hh * hd, (hh + 1) * hd)
                qh, kh, vh = qp3[..., sl], kp3[..., sl], vp3[..., sl]
                s = jnp.einsum("bqd,bkd->bqk", qh, kh,
                               preferred_element_type=f32)
                s = s - jnp.max(s, axis=-1, keepdims=True)
                p = jnp.exp(s)
                inv = pl.reciprocal(jnp.sum(p, axis=-1, keepdims=True),
                                    approx=True)
                outs.append(jnp.einsum("bqk,bkd->bqd", p * inv, vh,
                                       preferred_element_type=f32))
            return jnp.concatenate(outs, axis=-1)          # [TB, Nq, dh]

        def _ffn_ln(o, l):
            bo = vec_ref[l, 0:1, :]
            g0 = vec_ref[l, 1:2, :]; b0 = vec_ref[l, 2:3, :]
            g1 = vec_ref[l, 3:4, :]; b1 = vec_ref[l, 4:5, :]
            wo = wo_ref[l]
            if use_ln:
                o = _ln(o, g0, b0)
            o = o + jnp.maximum(
                jnp.dot(o.astype(wo.dtype), wo, preferred_element_type=f32) + bo,
                0.0)
            if use_ln:
                o = _ln(o, g1, b1)
            return o

        # ---------------- encoder: num_sabs x SAB ----------------
        h = x_ref[0].astype(f32)                            # [M, di]
        for l in range(num_sabs):
            d_in = di if l == 0 else dh
            qkv = _qkv(h, l, d_in)                          # [M, 3*dh]
            qp = qkv[:, :dh]
            kp = qkv[:, dh:2 * dh]
            vp = qkv[:, 2 * dh:]
            att = _attn(qp.reshape(TB, N, dh), kp.reshape(TB, N, dh),
                        vp.reshape(TB, N, dh))              # [TB, N, dh]
            h = _ffn_ln(qp + att.reshape(M, dh), l)

        # ---------------- decoder: PMA -> 2 x SAB ----------------
        l = num_sabs
        kv = _qkv(h, l, dh)                                 # [M, 3*dh] (Q lanes unused)
        kp = kv[:, dh:2 * dh]
        vp = kv[:, 2 * dh:]
        # seed query is shared by every graph: project once, broadcast in VMEM.
        qseed = _qkv(seed_ref[...], l, dh)[:, :dh]          # [1, dh]
        qp3 = jnp.broadcast_to(qseed.reshape(1, 1, dh), (TB, 1, dh))
        att = _attn(qp3, kp.reshape(TB, N, dh), vp.reshape(TB, N, dh))  # [TB,1,dh]
        g = _ffn_ln((qp3 + att).reshape(TB, dh), l)         # [TB, dh]

        # 2 decoder SABs over a single element per graph: the softmax weight is
        # identically 1, so the attention output is exactly V' (no softmax).
        for l in (num_sabs + 1, num_sabs + 2):
            qkv = _qkv(g, l, dh)
            g = _ffn_ln(qkv[:, :dh] + qkv[:, 2 * dh:], l)

        # ------ final Linear(dh -> di); mean over the size-1 set axis --------
        y = (jnp.dot(g, fc_ref[:dh, :], preferred_element_type=f32)
             + fc_ref[dh:dh + 1, :])                        # [TB, di]
        # lane-dense writeback: one (1, TB*di) row per grid step instead of a
        # (TB, di)=(TB,16) block (avoids masked partial stores).
        row = jnp.concatenate([y[t:t + 1, :] for t in range(TB)], axis=1)
        o_ref[0] = row.astype(o_ref.dtype)

    return kernel


# ----------------------------------------------------------------------------
# Wrapper
# ----------------------------------------------------------------------------
def set_transformer_readout(x_dense, params, num_heads, layer_norm, mask=None,
                            batch_block=None):
    """Fused SetTransformerReadout forward.  `mask` is accepted but unused,
    matching the PyTorch module (which ignores it)."""
    del mask
    B, N, di = x_dense.shape
    L, d_max, dh3 = params["wqkv_all"].shape
    dh = dh3 // 3
    num_sabs = L - 3

    # TB graphs per grid step: target >=256 matmul rows per step (MXU fill,
    # amortizes the ~0.35us per-step overhead), while keeping >=2 even grid
    # steps when the batch allows it so the "parallel" axis can shard across
    # v7x's two TensorCores.
    if batch_block is None:
        TB = max(1, min(B, pl.cdiv(256, N)))
    else:
        TB = max(1, min(B, batch_block))
    nblk = pl.cdiv(B, TB)
    if nblk > 1:
        TB = pl.cdiv(B, nblk)            # even out block sizes across steps
        nblk = pl.cdiv(B, TB)
    Bp = nblk * TB

    # ship activations as bf16 (numerically identical: the kernel re-rounds to
    # bf16 in front of the first MXU op anyway); halves the input DMA.
    x3 = x_dense.astype(params["wqkv_all"].dtype)
    if Bp != B:
        x3 = jnp.pad(x3, ((0, Bp - B), (0, 0), (0, 0)))
    x3 = x3.reshape(nblk, TB * N, di)

    kernel = _make_fused_kernel(dim_input=di, dim_hidden=dh, num_heads=num_heads,
                                num_sabs=num_sabs, use_ln=layer_norm, tb=TB, n=N)

    def full_spec(arr):
        nd = arr.ndim
        return pl.BlockSpec(arr.shape, lambda i, _nd=nd: (0,) * _nd)

    weights = (params["pma_seed"], params["wqkv_all"], params["bqkv_all"],
               params["wo_all"], params["vec_all"], params["fc_all"])

    out = pl.pallas_call(
        kernel,
        out_shape=jax.ShapeDtypeStruct((nblk, 1, TB * di), jnp.float32),
        grid=(nblk,),
        in_specs=[pl.BlockSpec((1, TB * N, di), lambda i: (i, 0, 0))]
                 + [full_spec(w) for w in weights],
        out_specs=pl.BlockSpec((1, 1, TB * di), lambda i: (i, 0, 0)),
        compiler_params=pltpu.CompilerParams(dimension_semantics=("parallel",)),
    )(x3, *weights)
    return out.reshape(Bp, di)[:B]


# ----------------------------------------------------------------------------
# Parameter initialization (pre-transposed, QKV-fused, K-scale-folded slabs)
# ----------------------------------------------------------------------------
def init_set_transformer_readout(key, dim_input, dim_hidden, num_heads, num_sabs,
                                 weight_dtype=jnp.bfloat16):
    assert dim_hidden % num_heads == 0
    assert num_sabs >= 1
    d_max = max(dim_input, dim_hidden)
    L = num_sabs + 3                       # encoder SABs + PMA + 2 decoder SABs
    scale = 1.0 / math.sqrt(dim_hidden)    # MAB scales logits by sqrt(dim_V)
    keys = jax.random.split(key, L + 2)

    def linear_t(k, fan_in, fan_out):
        # nn.Linear default init, stored transposed as [in, out]
        k1, k2 = jax.random.split(k)
        lim = 1.0 / math.sqrt(fan_in)
        wt = jax.random.uniform(k1, (fan_in, fan_out), jnp.float32, -lim, lim)
        b = jax.random.uniform(k2, (fan_out,), jnp.float32, -lim, lim)
        return wt, b

    wqkv_l, bqkv_l, wo_l, vec_l = [], [], [], []
    ones = jnp.ones((dim_hidden,), jnp.float32)
    zeros = jnp.zeros((dim_hidden,), jnp.float32)
    for l in range(L):
        d_in = dim_input if l == 0 else dim_hidden
        kq, kk, kv, ko = jax.random.split(keys[l], 4)
        wq, bq = linear_t(kq, d_in, dim_hidden)
        wk, bk = linear_t(kk, d_in, dim_hidden)
        wv, bv = linear_t(kv, d_in, dim_hidden)
        wo, bo = linear_t(ko, dim_hidden, dim_hidden)
        wk = wk * scale                     # fold softmax scale into K proj
        bk = bk * scale
        wqkv = jnp.concatenate([wq, wk, wv], axis=1)            # [d_in, 3*dh]
        wqkv_l.append(jnp.pad(wqkv, ((0, d_max - d_in), (0, 0))))
        bqkv_l.append(jnp.concatenate([bq, bk, bv])[None, :])    # [1, 3*dh]
        wo_l.append(wo)
        # rows: bo, LN0 gamma/beta, LN1 gamma/beta, padding
        vec_l.append(jnp.stack([bo, ones, zeros, ones, zeros,
                                zeros, zeros, zeros], axis=0))

    # PMA seed (xavier-uniform style; minor init-distribution fidelity note only)
    lim = math.sqrt(6.0 / (1 + dim_hidden))
    pma_seed = jax.random.uniform(keys[L], (1, dim_hidden), jnp.float32, -lim, lim)

    fcw, fcb = linear_t(keys[L + 1], dim_hidden, dim_input)
    fc_all = jnp.concatenate([fcw, fcb[None, :]], axis=0)        # [dh+1, di]

    return dict(
        pma_seed=pma_seed,                                        # f32 [1, dh]
        wqkv_all=jnp.stack(wqkv_l).astype(weight_dtype),          # [L, d_max, 3dh]
        bqkv_all=jnp.stack(bqkv_l),                               # f32 [L, 1, 3dh]
        wo_all=jnp.stack(wo_l).astype(weight_dtype),              # [L, dh, dh]
        vec_all=jnp.stack(vec_l),                                 # f32 [L, 8, dh]
        fc_all=fc_all,                                            # f32 [dh+1, di]
    )


# ----------------------------------------------------------------------------
# Pure-JAX reference (same packed params; mirrors the kernel's bf16 MXU casts)
# ----------------------------------------------------------------------------
def reference_forward(x_dense, params, num_heads, layer_norm):
    B, N, di = x_dense.shape
    L, d_max, dh3 = params["wqkv_all"].shape
    dh = dh3 // 3
    num_sabs = L - 3
    H, hd = num_heads, dh // num_heads
    wdt = params["wqkv_all"].dtype
    wqkv, bqkv = params["wqkv_all"], params["bqkv_all"]
    wo_all, vec_all, fc_all = params["wo_all"], params["vec_all"], params["fc_all"]

    def mm(a, w):
        return jnp.matmul(a.astype(wdt).astype(jnp.float32), w.astype(jnp.float32))

    def ln(x, g, b):
        mu = x.mean(-1, keepdims=True)
        var = ((x - mu) ** 2).mean(-1, keepdims=True)
        return (x - mu) / jnp.sqrt(var + 1e-5) * g + b

    def mab(q, k, l, dq, dk):
        qkv_q = mm(q, wqkv[l, :dq]) + bqkv[l, 0]
        qkv_k = mm(k, wqkv[l, :dk]) + bqkv[l, 0]
        qp = qkv_q[..., :dh]
        kp = qkv_k[..., dh:2 * dh]
        vp = qkv_k[..., 2 * dh:]
        Bq, Nq, _ = qp.shape
        Nk = kp.shape[1]
        qh = qp.reshape(Bq, Nq, H, hd).transpose(0, 2, 1, 3)
        kh = kp.reshape(Bq, Nk, H, hd).transpose(0, 2, 1, 3)
        vh = vp.reshape(Bq, Nk, H, hd).transpose(0, 2, 1, 3)
        # 1/sqrt(dh) already folded into the K projection
        attn = jax.nn.softmax(jnp.einsum("bhqd,bhkd->bhqk", qh, kh), axis=-1)
        ah = jnp.einsum("bhqk,bhkd->bhqd", attn, vh)
        o = qp + ah.transpose(0, 2, 1, 3).reshape(Bq, Nq, dh)
        bo, g0, b0, g1, b1 = [vec_all[l, i] for i in range(5)]
        if layer_norm:
            o = ln(o, g0, b0)
        o = o + jax.nn.relu(mm(o, wo_all[l]) + bo)
        if layer_norm:
            o = ln(o, g1, b1)
        return o

    h = x_dense.astype(jnp.float32)
    for l in range(num_sabs):
        d_in = di if l == 0 else dh
        h = mab(h, h, l, d_in, d_in)
    seed = jnp.broadcast_to(params["pma_seed"][None, :, :], (B, 1, dh))
    h = mab(seed, h, num_sabs, dh, dh)
    h = mab(h, h, num_sabs + 1, dh, dh)
    h = mab(h, h, num_sabs + 2, dh, dh)
    y = jnp.matmul(h, fc_all[:dh].astype(jnp.float32)) + fc_all[dh]
    return y.mean(axis=1)


# ----------------------------------------------------------------------------
if __name__ == "__main__":
    dim_input, dim_hidden = 16, 32
    num_heads, num_sabs = 4, 2
    layer_norm = True

    key = jax.random.PRNGKey(0)
    k_params, k_x1, k_x2 = jax.random.split(key, 3)
    params = init_set_transformer_readout(k_params, dim_input, dim_hidden,
                                          num_heads, num_sabs,
                                          weight_dtype=jnp.bfloat16)

    fwd = jax.jit(lambda x, p: set_transformer_readout(x, p, num_heads, layer_norm))
    fwd_blk = jax.jit(lambda x, p: set_transformer_readout(x, p, num_heads,
                                                           layer_norm,
                                                           batch_block=2))

    # 1) small single-block case: B=2 graphs, N=8 nodes each
    x1 = jax.random.normal(k_x1, (2, 8, dim_input), jnp.float32)
    out1 = jax.block_until_ready(fwd(x1, params))
    assert out1.shape == (2, dim_input), out1.shape
    assert bool(jnp.all(jnp.isfinite(out1)))
    ref1 = reference_forward(x1, params, num_heads, layer_norm)
    err1 = float(jnp.max(jnp.abs(out1 - ref1)))
    # bf16 matmul operands + approx-reciprocal softmax vs exact-f32 reference
    assert err1 < 6e-2, f"max abs err vs reference (single block): {err1}"

    # 2) multi-block grid with batch padding: B=5, TB=2 -> grid=(3,), Bp=6
    x2 = jax.random.normal(k_x2, (5, 8, dim_input), jnp.float32)
    out2 = jax.block_until_ready(fwd_blk(x2, params))
    assert out2.shape == (5, dim_input), out2.shape
    assert bool(jnp.all(jnp.isfinite(out2)))
    ref2 = reference_forward(x2, params, num_heads, layer_norm)
    err2 = float(jnp.max(jnp.abs(out2 - ref2)))
    assert err2 < 6e-2, f"max abs err vs reference (multi block): {err2}"

    print("KERNEL_OK")
</pallas_src>

<mosaic_0001>
module attributes {stable_mosaic.version = 11 : i64} {
  func.func @kernel(%arg0: i32, %arg1: memref<1x16x16xbf16, #tpu.memory_space<vmem>>, %arg2: memref<1x32xf32, #tpu.memory_space<vmem>>, %arg3: memref<5x32x96xbf16, #tpu.memory_space<vmem>>, %arg4: memref<5x1x96xf32, #tpu.memory_space<vmem>>, %arg5: memref<5x32x32xbf16, #tpu.memory_space<vmem>>, %arg6: memref<5x8x32xf32, #tpu.memory_space<vmem>>, %arg7: memref<33x16xf32, #tpu.memory_space<vmem>>, %arg8: memref<1x1x32xf32, #tpu.memory_space<vmem>>) attributes {dimension_semantics = [#tpu.dimension_semantics<parallel>], iteration_bounds = array<i64: 1>, scalar_prefetch = 0 : i64, scratch_operands = 0 : i64, tpu.core_type = #tpu.core_type<tc>, window_params = [{transform_indices = @transform_0, window_bounds = array<i64: 1, 16, 16>}, {pipeline_mode = #tpu.pipeline_mode<synchronous>, transform_indices = @transform_1, window_bounds = array<i64: 1, 32>}, {pipeline_mode = #tpu.pipeline_mode<synchronous>, transform_indices = @transform_2, window_bounds = array<i64: 5, 32, 96>}, {pipeline_mode = #tpu.pipeline_mode<synchronous>, transform_indices = @transform_3, window_bounds = array<i64: 5, 1, 96>}, {pipeline_mode = #tpu.pipeline_mode<synchronous>, transform_indices = @transform_4, window_bounds = array<i64: 5, 32, 32>}, {pipeline_mode = #tpu.pipeline_mode<synchronous>, transform_indices = @transform_5, window_bounds = array<i64: 5, 8, 32>}, {pipeline_mode = #tpu.pipeline_mode<synchronous>, transform_indices = @transform_6, window_bounds = array<i64: 33, 16>}, {transform_indices = @transform_7, window_bounds = array<i64: 1, 1, 32>}]} {
    %c0 = arith.constant 0 : index
    %c0_0 = arith.constant 0 : index
    %c0_1 = arith.constant 0 : index
    %0 = vector.load %arg1[%c0, %c0_0, %c0_1] : memref<1x16x16xbf16, #tpu.memory_space<vmem>>, vector<1x16x16xbf16>
    %1 = vector.shape_cast %0 : vector<1x16x16xbf16> to vector<16x16xbf16>
    %2 = arith.extf %1 : vector<16x16xbf16> to vector<16x16xf32>
    %c0_2 = arith.constant 0 : index
    %c0_3 = arith.constant 0 : index
    %c0_4 = arith.constant 0 : index
    %3 = vector.load %arg3[%c0_2, %c0_3, %c0_4] : memref<5x32x96xbf16, #tpu.memory_space<vmem>>, vector<1x16x96xbf16>
    %4 = vector.shape_cast %3 : vector<1x16x96xbf16> to vector<16x96xbf16>
    %5 = arith.truncf %2 : vector<16x16xf32> to vector<16x16xbf16>
    %cst = arith.constant dense<0.000000e+00> : vector<16x96xf32>
    %6 = tpu.matmul %5, %4, %cst {dimension_numbers = #tpu.dot_dimension_numbers<[1], [0], [0], [1], [0, 0, 1, 1], [], []>} : vector<16x16xbf16>, vector<16x96xbf16>, vector<16x96xf32> -> vector<16x96xf32>
    %c0_5 = arith.constant 0 : index
    %c0_6 = arith.constant 0 : index
    %c0_7 = arith.constant 0 : index
    %7 = vector.load %arg4[%c0_5, %c0_6, %c0_7] : memref<5x1x96xf32, #tpu.memory_space<vmem>>, vector<1x1x96xf32>
    %8 = vector.shape_cast %7 : vector<1x1x96xf32> to vector<1x96xf32>
    %9 = vector.broadcast %8 : vector<1x96xf32> to vector<16x96xf32>
    %10 = arith.addf %6, %9 : vector<16x96xf32>
    %11 = vector.extract_strided_slice %10 {offsets = [0, 0], sizes = [16, 32], strides = [1, 1]} : vector<16x96xf32> to vector<16x32xf32>
    %12 = vector.extract_strided_slice %10 {offsets = [0, 32], sizes = [16, 32], strides = [1, 1]} : vector<16x96xf32> to vector<16x32xf32>
    %13 = vector.extract_strided_slice %10 {offsets = [0, 64], sizes = [16, 32], strides = [1, 1]} : vector<16x96xf32> to vector<16x32xf32>
    %14 = vector.shape_cast %11 : vector<16x32xf32> to vector<2x8x32xf32>
    %15 = vector.shape_cast %12 : vector<16x32xf32> to vector<2x8x32xf32>
    %16 = vector.shape_cast %13 : vector<16x32xf32> to vector<2x8x32xf32>
    %17 = vector.extract_strided_slice %14 {offsets = [0, 0, 0], sizes = [2, 8, 8], strides = [1, 1, 1]} : vector<2x8x32xf32> to vector<2x8x8xf32>
    %18 = vector.extract_strided_slice %15 {offsets = [0, 0, 0], sizes = [2, 8, 8], strides = [1, 1, 1]} : vector<2x8x32xf32> to vector<2x8x8xf32>
    %19 = vector.extract_strided_slice %16 {offsets = [0, 0, 0], sizes = [2, 8, 8], strides = [1, 1, 1]} : vector<2x8x32xf32> to vector<2x8x8xf32>
    "tpu.trace_start"() <{level = 10 : i32, message = "bqd,bkd->bqk"}> : () -> ()
    %cst_8 = arith.constant dense<0.000000e+00> : vector<2x8x8xf32>
    %20 = tpu.matmul %17, %18, %cst_8 {dimension_numbers = #tpu.dot_dimension_numbers<[2], [2], [1], [1], [0, 0, 0, 1, 1, 1], [0], [0]>} : vector<2x8x8xf32>, vector<2x8x8xf32>, vector<2x8x8xf32> -> vector<2x8x8xf32>
    "tpu.trace_stop"() : () -> ()
    %cst_9 = arith.constant dense<0xFF800000> : vector<2x8xf32>
    %21 = vector.multi_reduction <maximumf>, %20, %cst_9 [2] : vector<2x8x8xf32> to vector<2x8xf32>
    %22 = vector.shape_cast %21 : vector<2x8xf32> to vector<2x8x1xf32>
    %23 = vector.broadcast %22 : vector<2x8x1xf32> to vector<2x8x8xf32>
    %24 = arith.subf %20, %23 : vector<2x8x8xf32>
    %25 = math.exp %24 : vector<2x8x8xf32>
    %cst_10 = arith.constant dense<0.000000e+00> : vector<2x8xf32>
    %26 = vector.multi_reduction <add>, %25, %cst_10 [2] : vector<2x8x8xf32> to vector<2x8xf32>
    %27 = vector.shape_cast %26 : vector<2x8xf32> to vector<2x8x1xf32>
    %28 = tpu.reciprocal %27 {approx = true} : vector<2x8x1xf32> -> vector<2x8x1xf32>
    %29 = vector.broadcast %28 : vector<2x8x1xf32> to vector<2x8x8xf32>
    %30 = arith.mulf %25, %29 : vector<2x8x8xf32>
    "tpu.trace_start"() <{level = 10 : i32, message = "bqk,bkd->bqd"}> : () -> ()
    %cst_11 = arith.constant dense<0.000000e+00> : vector<2x8x8xf32>
    %31 = tpu.matmul %30, %19, %cst_11 {dimension_numbers = #tpu.dot_dimension_numbers<[2], [1], [1], [2], [0, 0, 0, 1, 1, 2], [0], [0]>} : vector<2x8x8xf32>, vector<2x8x8xf32>, vector<2x8x8xf32> -> vector<2x8x8xf32>
    "tpu.trace_stop"() : () -> ()
    %32 = vector.extract_strided_slice %14 {offsets = [0, 0, 8], sizes = [2, 8, 8], strides = [1, 1, 1]} : vector<2x8x32xf32> to vector<2x8x8xf32>
    %33 = vector.extract_strided_slice %15 {offsets = [0, 0, 8], sizes = [2, 8, 8], strides = [1, 1, 1]} : vector<2x8x32xf32> to vector<2x8x8xf32>
    %34 = vector.extract_strided_slice %16 {offsets = [0, 0, 8], sizes = [2, 8, 8], strides = [1, 1, 1]} : vector<2x8x32xf32> to vector<2x8x8xf32>
    "tpu.trace_start"() <{level = 10 : i32, message = "bqd,bkd->bqk"}> : () -> ()
    %cst_12 = arith.constant dense<0.000000e+00> : vector<2x8x8xf32>
    %35 = tpu.matmul %32, %33, %cst_12 {dimension_numbers = #tpu.dot_dimension_numbers<[2], [2], [1], [1], [0, 0, 0, 1, 1, 1], [0], [0]>} : vector<2x8x8xf32>, vector<2x8x8xf32>, vector<2x8x8xf32> -> vector<2x8x8xf32>
    "tpu.trace_stop"() : () -> ()
    %cst_13 = arith.constant dense<0xFF800000> : vector<2x8xf32>
    %36 = vector.multi_reduction <maximumf>, %35, %cst_13 [2] : vector<2x8x8xf32> to vector<2x8xf32>
    %37 = vector.shape_cast %36 : vector<2x8xf32> to vector<2x8x1xf32>
    %38 = vector.broadcast %37 : vector<2x8x1xf32> to vector<2x8x8xf32>
    %39 = arith.subf %35, %38 : vector<2x8x8xf32>
    %40 = math.exp %39 : vector<2x8x8xf32>
    %cst_14 = arith.constant dense<0.000000e+00> : vector<2x8xf32>
    %41 = vector.multi_reduction <add>, %40, %cst_14 [2] : vector<2x8x8xf32> to vector<2x8xf32>
    %42 = vector.shape_cast %41 : vector<2x8xf32> to vector<2x8x1xf32>
    %43 = tpu.reciprocal %42 {approx = true} : vector<2x8x1xf32> -> vector<2x8x1xf32>
    %44 = vector.broadcast %43 : vector<2x8x1xf32> to vector<2x8x8xf32>
    %45 = arith.mulf %40, %44 : vector<2x8x8xf32>
    "tpu.trace_start"() <{level = 10 : i32, message = "bqk,bkd->bqd"}> : () -> ()
    %cst_15 = arith.constant dense<0.000000e+00> : vector<2x8x8xf32>
    %46 = tpu.matmul %45, %34, %cst_15 {dimension_numbers = #tpu.dot_dimension_numbers<[2], [1], [1], [2], [0, 0, 0, 1, 1, 2], [0], [0]>} : vector<2x8x8xf32>, vector<2x8x8xf32>, vector<2x8x8xf32> -> vector<2x8x8xf32>
    "tpu.trace_stop"() : () -> ()
    %47 = vector.extract_strided_slice %14 {offsets = [0, 0, 16], sizes = [2, 8, 8], strides = [1, 1, 1]} : vector<2x8x32xf32> to vector<2x8x8xf32>
    %48 = vector.extract_strided_slice %15 {offsets = [0, 0, 16], sizes = [2, 8, 8], strides = [1, 1, 1]} : vector<2x8x32xf32> to vector<2x8x8xf32>
    %49 = vector.extract_strided_slice %16 {offsets = [0, 0, 16], sizes = [2, 8, 8], strides = [1, 1, 1]} : vector<2x8x32xf32> to vector<2x8x8xf32>
    "tpu.trace_start"() <{level = 10 : i32, message = "bqd,bkd->bqk"}> : () -> ()
    %cst_16 = arith.constant dense<0.000000e+00> : vector<2x8x8xf32>
    %50 = tpu.matmul %47, %48, %cst_16 {dimension_numbers = #tpu.dot_dimension_numbers<[2], [2], [1], [1], [0, 0, 0, 1, 1, 1], [0], [0]>} : vector<2x8x8xf32>, vector<2x8x8xf32>, vector<2x8x8xf32> -> vector<2x8x8xf32>
    "tpu.trace_stop"() : () -> ()
    %cst_17 = arith.constant dense<0xFF800000> : vector<2x8xf32>
    %51 = vector.multi_reduction <maximumf>, %50, %cst_17 [2] : vector<2x8x8xf32> to vector<2x8xf32>
    %52 = vector.shape_cast %51 : vector<2x8xf32> to vector<2x8x1xf32>
    %53 = vector.broadcast %52 : vector<2x8x1xf32> to vector<2x8x8xf32>
    %54 = arith.subf %50, %53 : vector<2x8x8xf32>
    %55 = math.exp %54 : vector<2x8x8xf32>
    %cst_18 = arith.constant dense<0.000000e+00> : vector<2x8xf32>
    %56 = vector.multi_reduction <add>, %55, %cst_18 [2] : vector<2x8x8xf32> to vector<2x8xf32>
    %57 = vector.shape_cast %56 : vector<2x8xf32> to vector<2x8x1xf32>
    %58 = tpu.reciprocal %57 {approx = true} : vector<2x8x1xf32> -> vector<2x8x1xf32>
    %59 = vector.broadcast %58 : vector<2x8x1xf32> to vector<2x8x8xf32>
    %60 = arith.mulf %55, %59 : vector<2x8x8xf32>
    "tpu.trace_start"() <{level = 10 : i32, message = "bqk,bkd->bqd"}> : () -> ()
    %cst_19 = arith.constant dense<0.000000e+00> : vector<2x8x8xf32>
    %61 = tpu.matmul %60, %49, %cst_19 {dimension_numbers = #tpu.dot_dimension_numbers<[2], [1], [1], [2], [0, 0, 0, 1, 1, 2], [0], [0]>} : vector<2x8x8xf32>, vector<2x8x8xf32>, vector<2x8x8xf32> -> vector<2x8x8xf32>
    "tpu.trace_stop"() : () -> ()
    %62 = vector.extract_strided_slice %14 {offsets = [0, 0, 24], sizes = [2, 8, 8], strides = [1, 1, 1]} : vector<2x8x32xf32> to vector<2x8x8xf32>
    %63 = vector.extract_strided_slice %15 {offsets = [0, 0, 24], sizes = [2, 8, 8], strides = [1, 1, 1]} : vector<2x8x32xf32> to vector<2x8x8xf32>
    %64 = vector.extract_strided_slice %16 {offsets = [0, 0, 24], sizes = [2, 8, 8], strides = [1, 1, 1]} : vector<2x8x32xf32> to vector<2x8x8xf32>
    "tpu.trace_start"() <{level = 10 : i32, message = "bqd,bkd->bqk"}> : () -> ()
    %cst_20 = arith.constant dense<0.000000e+00> : vector<2x8x8xf32>
    %65 = tpu.matmul %62, %63, %cst_20 {dimension_numbers = #tpu.dot_dimension_numbers<[2], [2], [1], [1], [0, 0, 0, 1, 1, 1], [0], [0]>} : vector<2x8x8xf32>, vector<2x8x8xf32>, vector<2x8x8xf32> -> vector<2x8x8xf32>
    "tpu.trace_stop"() : () -> ()
    %cst_21 = arith.constant dense<0xFF800000> : vector<2x8xf32>
    %66 = vector.multi_reduction <maximumf>, %65, %cst_21 [2] : vector<2x8x8xf32> to vector<2x8xf32>
    %67 = vector.shape_cast %66 : vector<2x8xf32> to vector<2x8x1xf32>
    %68 = vector.broadcast %67 : vector<2x8x1xf32> to vector<2x8x8xf32>
    %69 = arith.subf %65, %68 : vector<2x8x8xf32>
    %70 = math.exp %69 : vector<2x8x8xf32>
    %cst_22 = arith.constant dense<0.000000e+00> : vector<2x8xf32>
    %71 = vector.multi_reduction <add>, %70, %cst_22 [2] : vector<2x8x8xf32> to vector<2x8xf32>
    %72 = vector.shape_cast %71 : vector<2x8xf32> to vector<2x8x1xf32>
    %73 = tpu.reciprocal %72 {approx = true} : vector<2x8x1xf32> -> vector<2x8x1xf32>
    %74 = vector.broadcast %73 : vector<2x8x1xf32> to vector<2x8x8xf32>
    %75 = arith.mulf %70, %74 : vector<2x8x8xf32>
    "tpu.trace_start"() <{level = 10 : i32, message = "bqk,bkd->bqd"}> : () -> ()
    %cst_23 = arith.constant dense<0.000000e+00> : vector<2x8x8xf32>
    %76 = tpu.matmul %75, %64, %cst_23 {dimension_numbers = #tpu.dot_dimension_numbers<[2], [1], [1], [2], [0, 0, 0, 1, 1, 2], [0], [0]>} : vector<2x8x8xf32>, vector<2x8x8xf32>, vector<2x8x8xf32> -> vector<2x8x8xf32>
    "tpu.trace_stop"() : () -> ()
    %77 = tpu.concatenate %31, %46, %61, %76 in 2 : vector<2x8x8xf32>, vector<2x8x8xf32>, vector<2x8x8xf32>, vector<2x8x8xf32> -> vector<2x8x32xf32>
    %78 = vector.shape_cast %77 : vector<2x8x32xf32> to vector<16x32xf32>
    %79 = arith.addf %11, %78 : vector<16x32xf32>
    %c0_24 = arith.constant 0 : index
    %c0_25 = arith.constant 0 : index
    %c0_26 = arith.constant 0 : index
    %80 = vector.load %arg6[%c0_24, %c0_25, %c0_26] : memref<5x8x32xf32, #tpu.memory_space<vmem>>, vector<1x1x32xf32>
    %81 = vector.shape_cast %80 : vector<1x1x32xf32> to vector<1x32xf32>
    %c0_27 = arith.constant 0 : index
    %c1 = arith.constant 1 : index
    %c0_28 = arith.constant 0 : index
    %82 = vector.load %arg6[%c0_27, %c1, %c0_28] : memref<5x8x32xf32, #tpu.memory_space<vmem>>, vector<1x1x32xf32>
    %83 = vector.shape_cast %82 : vector<1x1x32xf32> to vector<1x32xf32>
    %c0_29 = arith.constant 0 : index
    %c2 = arith.constant 2 : index
    %c0_30 = arith.constant 0 : index
    %84 = vector.load %arg6[%c0_29, %c2, %c0_30] : memref<5x8x32xf32, #tpu.memory_space<vmem>>, vector<1x1x32xf32>
    %85 = vector.shape_cast %84 : vector<1x1x32xf32> to vector<1x32xf32>
    %c0_31 = arith.constant 0 : index
    %c3 = arith.constant 3 : index
    %c0_32 = arith.constant 0 : index
    %86 = vector.load %arg6[%c0_31, %c3, %c0_32] : memref<5x8x32xf32, #tpu.memory_space<vmem>>, vector<1x1x32xf32>
    %87 = vector.shape_cast %86 : vector<1x1x32xf32> to vector<1x32xf32>
    %c0_33 = arith.constant 0 : index
    %c4 = arith.constant 4 : index
    %c0_34 = arith.constant 0 : index
    %88 = vector.load %arg6[%c0_33, %c4, %c0_34] : memref<5x8x32xf32, #tpu.memory_space<vmem>>, vector<1x1x32xf32>
    %89 = vector.shape_cast %88 : vector<1x1x32xf32> to vector<1x32xf32>
    %c0_35 = arith.constant 0 : index
    %c0_36 = arith.constant 0 : index
    %c0_37 = arith.constant 0 : index
    %90 = vector.load %arg5[%c0_35, %c0_36, %c0_37] : memref<5x32x32xbf16, #tpu.memory_space<vmem>>, vector<1x32x32xbf16>
    %91 = vector.shape_cast %90 : vector<1x32x32xbf16> to vector<32x32xbf16>
    %cst_38 = arith.constant dense<0.000000e+00> : vector<16xf32>
    %92 = vector.multi_reduction <add>, %79, %cst_38 [1] : vector<16x32xf32> to vector<16xf32>
    %93 = vector.shape_cast %92 : vector<16xf32> to vector<16x1xf32>
    %cst_39 = arith.constant 3.200000e+01 : f32
    %94 = vector.broadcast %cst_39 : f32 to vector<16x1xf32>
    %95 = arith.divf %93, %94 : vector<16x1xf32>
    %96 = vector.broadcast %95 : vector<16x1xf32> to vector<16x32xf32>
    %97 = arith.subf %79, %96 : vector<16x32xf32>
    %98 = arith.mulf %97, %97 : vector<16x32xf32>
    %cst_40 = arith.constant dense<0.000000e+00> : vector<16xf32>
    %99 = vector.multi_reduction <add>, %98, %cst_40 [1] : vector<16x32xf32> to vector<16xf32>
    %100 = vector.shape_cast %99 : vector<16xf32> to vector<16x1xf32>
    %cst_41 = arith.constant 3.200000e+01 : f32
    %101 = vector.broadcast %cst_41 : f32 to vector<16x1xf32>
    %102 = arith.divf %100, %101 : vector<16x1xf32>
    %103 = vector.broadcast %95 : vector<16x1xf32> to vector<16x32xf32>
    %104 = arith.subf %79, %103 : vector<16x32xf32>
    %cst_42 = arith.constant 9.99999974E-6 : f32
    %105 = vector.broadcast %cst_42 : f32 to vector<16x1xf32>
    %106 = arith.addf %102, %105 : vector<16x1xf32>
    %107 = math.rsqrt %106 : vector<16x1xf32>
    %108 = vector.broadcast %107 : vector<16x1xf32> to vector<16x32xf32>
    %109 = arith.mulf %104, %108 : vector<16x32xf32>
    %110 = vector.broadcast %83 : vector<1x32xf32> to vector<16x32xf32>
    %111 = arith.mulf %109, %110 : vector<16x32xf32>
    %112 = vector.broadcast %85 : vector<1x32xf32> to vector<16x32xf32>
    %113 = arith.addf %111, %112 : vector<16x32xf32>
    %114 = arith.truncf %113 : vector<16x32xf32> to vector<16x32xbf16>
    %cst_43 = arith.constant dense<0.000000e+00> : vector<16x32xf32>
    %115 = tpu.matmul %114, %91, %cst_43 {dimension_numbers = #tpu.dot_dimension_numbers<[1], [0], [0], [1], [0, 0, 1, 1], [], []>} : vector<16x32xbf16>, vector<32x32xbf16>, vector<16x32xf32> -> vector<16x32xf32>
    %116 = vector.broadcast %81 : vector<1x32xf32> to vector<16x32xf32>
    %117 = arith.addf %115, %116 : vector<16x32xf32>
    %cst_44 = arith.constant 0.000000e+00 : f32
    %118 = vector.broadcast %cst_44 : f32 to vector<16x32xf32>
    %119 = arith.maximumf %117, %118 : vector<16x32xf32>
    %120 = arith.addf %113, %119 : vector<16x32xf32>
    %cst_45 = arith.constant dense<0.000000e+00> : vector<16xf32>
    %121 = vector.multi_reduction <add>, %120, %cst_45 [1] : vector<16x32xf32> to vector<16xf32>
    %122 = vector.shape_cast %121 : vector<16xf32> to vector<16x1xf32>
    %cst_46 = arith.constant 3.200000e+01 : f32
    %123 = vector.broadcast %cst_46 : f32 to vector<16x1xf32>
    %124 = arith.divf %122, %123 : vector<16x1xf32>
    %125 = vector.broadcast %124 : vector<16x1xf32> to vector<16x32xf32>
    %126 = arith.subf %120, %125 : vector<16x32xf32>
    %127 = arith.mulf %126, %126 : vector<16x32xf32>
    %cst_47 = arith.constant dense<0.000000e+00> : vector<16xf32>
    %128 = vector.multi_reduction <add>, %127, %cst_47 [1] : vector<16x32xf32> to vector<16xf32>
    %129 = vector.shape_cast %128 : vector<16xf32> to vector<16x1xf32>
    %cst_48 = arith.constant 3.200000e+01 : f32
    %130 = vector.broadcast %cst_48 : f32 to vector<16x1xf32>
    %131 = arith.divf %129, %130 : vector<16x1xf32>
    %132 = vector.broadcast %124 : vector<16x1xf32> to vector<16x32xf32>
    %133 = arith.subf %120, %132 : vector<16x32xf32>
    %cst_49 = arith.constant 9.99999974E-6 : f32
    %134 = vector.broadcast %cst_49 : f32 to vector<16x1xf32>
    %135 = arith.addf %131, %134 : vector<16x1xf32>
    %136 = math.rsqrt %135 : vector<16x1xf32>
    %137 = vector.broadcast %136 : vector<16x1xf32> to vector<16x32xf32>
    %138 = arith.mulf %133, %137 : vector<16x32xf32>
    %139 = vector.broadcast %87 : vector<1x32xf32> to vector<16x32xf32>
    %140 = arith.mulf %138, %139 : vector<16x32xf32>
    %141 = vector.broadcast %89 : vector<1x32xf32> to vector<16x32xf32>
    %142 = arith.addf %140, %141 : vector<16x32xf32>
    %c1_50 = arith.constant 1 : index
    %c0_51 = arith.constant 0 : index
    %c0_52 = arith.constant 0 : index
    %143 = vector.load %arg3[%c1_50, %c0_51, %c0_52] : memref<5x32x96xbf16, #tpu.memory_space<vmem>>, vector<1x32x96xbf16>
    %144 = vector.shape_cast %143 : vector<1x32x96xbf16> to vector<32x96xbf16>
    %145 = arith.truncf %142 : vector<16x32xf32> to vector<16x32xbf16>
    %cst_53 = arith.constant dense<0.000000e+00> : vector<16x96xf32>
    %146 = tpu.matmul %145, %144, %cst_53 {dimension_numbers = #tpu.dot_dimension_numbers<[1], [0], [0], [1], [0, 0, 1, 1], [], []>} : vector<16x32xbf16>, vector<32x96xbf16>, vector<16x96xf32> -> vector<16x96xf32>
    %c1_54 = arith.constant 1 : index
    %c0_55 = arith.constant 0 : index
    %c0_56 = arith.constant 0 : index
    %147 = vector.load %arg4[%c1_54, %c0_55, %c0_56] : memref<5x1x96xf32, #tpu.memory_space<vmem>>, vector<1x1x96xf32>
    %148 = vector.shape_cast %147 : vector<1x1x96xf32> to vector<1x96xf32>
    %149 = vector.broadcast %148 : vector<1x96xf32> to vector<16x96xf32>
    %150 = arith.addf %146, %149 : vector<16x96xf32>
    %151 = vector.extract_strided_slice %150 {offsets = [0, 0], sizes = [16, 32], strides = [1, 1]} : vector<16x96xf32> to vector<16x32xf32>
    %152 = vector.extract_strided_slice %150 {offsets = [0, 32], sizes = [16, 32], strides = [1, 1]} : vector<16x96xf32> to vector<16x32xf32>
    %153 = vector.extract_strided_slice %150 {offsets = [0, 64], sizes = [16, 32], strides = [1, 1]} : vector<16x96xf32> to vector<16x32xf32>
    %154 = vector.shape_cast %151 : vector<16x32xf32> to vector<2x8x32xf32>
    %155 = vector.shape_cast %152 : vector<16x32xf32> to vector<2x8x32xf32>
    %156 = vector.shape_cast %153 : vector<16x32xf32> to vector<2x8x32xf32>
    %157 = vector.extract_strided_slice %154 {offsets = [0, 0, 0], sizes = [2, 8, 8], strides = [1, 1, 1]} : vector<2x8x32xf32> to vector<2x8x8xf32>
    %158 = vector.extract_strided_slice %155 {offsets = [0, 0, 0], sizes = [2, 8, 8], strides = [1, 1, 1]} : vector<2x8x32xf32> to vector<2x8x8xf32>
    %159 = vector.extract_strided_slice %156 {offsets = [0, 0, 0], sizes = [2, 8, 8], strides = [1, 1, 1]} : vector<2x8x32xf32> to vector<2x8x8xf32>
    "tpu.trace_start"() <{level = 10 : i32, message = "bqd,bkd->bqk"}> : () -> ()
    %cst_57 = arith.constant dense<0.000000e+00> : vector<2x8x8xf32>
    %160 = tpu.matmul %157, %158, %cst_57 {dimension_numbers = #tpu.dot_dimension_numbers<[2], [2], [1], [1], [0, 0, 0, 1, 1, 1], [0], [0]>} : vector<2x8x8xf32>, vector<2x8x8xf32>, vector<2x8x8xf32> -> vector<2x8x8xf32>
    "tpu.trace_stop"() : () -> ()
    %cst_58 = arith.constant dense<0xFF800000> : vector<2x8xf32>
    %161 = vector.multi_reduction <maximumf>, %160, %cst_58 [2] : vector<2x8x8xf32> to vector<2x8xf32>
    %162 = vector.shape_cast %161 : vector<2x8xf32> to vector<2x8x1xf32>
    %163 = vector.broadcast %162 : vector<2x8x1xf32> to vector<2x8x8xf32>
    %164 = arith.subf %160, %163 : vector<2x8x8xf32>
    %165 = math.exp %164 : vector<2x8x8xf32>
    %cst_59 = arith.constant dense<0.000000e+00> : vector<2x8xf32>
    %166 = vector.multi_reduction <add>, %165, %cst_59 [2] : vector<2x8x8xf32> to vector<2x8xf32>
    %167 = vector.shape_cast %166 : vector<2x8xf32> to vector<2x8x1xf32>
    %168 = tpu.reciprocal %167 {approx = true} : vector<2x8x1xf32> -> vector<2x8x1xf32>
    %169 = vector.broadcast %168 : vector<2x8x1xf32> to vector<2x8x8xf32>
    %170 = arith.mulf %165, %169 : vector<2x8x8xf32>
    "tpu.trace_start"() <{level = 10 : i32, message = "bqk,bkd->bqd"}> : () -> ()
    %cst_60 = arith.constant dense<0.000000e+00> : vector<2x8x8xf32>
    %171 = tpu.matmul %170, %159, %cst_60 {dimension_numbers = #tpu.dot_dimension_numbers<[2], [1], [1], [2], [0, 0, 0, 1, 1, 2], [0], [0]>} : vector<2x8x8xf32>, vector<2x8x8xf32>, vector<2x8x8xf32> -> vector<2x8x8xf32>
    "tpu.trace_stop"() : () -> ()
    %172 = vector.extract_strided_slice %154 {offsets = [0, 0, 8], sizes = [2, 8, 8], strides = [1, 1, 1]} : vector<2x8x32xf32> to vector<2x8x8xf32>
    %173 = vector.extract_strided_slice %155 {offsets = [0, 0, 8], sizes = [2, 8, 8], strides = [1, 1, 1]} : vector<2x8x32xf32> to vector<2x8x8xf32>
    %174 = vector.extract_strided_slice %156 {offsets = [0, 0, 8], sizes = [2, 8, 8], strides = [1, 1, 1]} : vector<2x8x32xf32> to vector<2x8x8xf32>
    "tpu.trace_start"() <{level = 10 : i32, message = "bqd,bkd->bqk"}> : () -> ()
    %cst_61 = arith.constant dense<0.000000e+00> : vector<2x8x8xf32>
    %175 = tpu.matmul %172, %173, %cst_61 {dimension_numbers = #tpu.dot_dimension_numbers<[2], [2], [1], [1], [0, 0, 0, 1, 1, 1], [0], [0]>} : vector<2x8x8xf32>, vector<2x8x8xf32>, vector<2x8x8xf32> -> vector<2x8x8xf32>
    "tpu.trace_stop"() : () -> ()
    %cst_62 = arith.constant dense<0xFF800000> : vector<2x8xf32>
    %176 = vector.multi_reduction <maximumf>, %175, %cst_62 [2] : vector<2x8x8xf32> to vector<2x8xf32>
    %177 = vector.shape_cast %176 : vector<2x8xf32> to vector<2x8x1xf32>
    %178 = vector.broadcast %177 : vector<2x8x1xf32> to vector<2x8x8xf32>
    %179 = arith.subf %175, %178 : vector<2x8x8xf32>
    %180 = math.exp %179 : vector<2x8x8xf32>
    %cst_63 = arith.constant dense<0.000000e+00> : vector<2x8xf32>
    %181 = vector.multi_reduction <add>, %180, %cst_63 [2] : vector<2x8x8xf32> to vector<2x8xf32>
    %182 = vector.shape_cast %181 : vector<2x8xf32> to vector<2x8x1xf32>
    %183 = tpu.reciprocal %182 {approx = true} : vector<2x8x1xf32> -> vector<2x8x1xf32>
    %184 = vector.broadcast %183 : vector<2x8x1xf32> to vector<2x8x8xf32>
    %185 = arith.mulf %180, %184 : vector<2x8x8xf32>
    "tpu.trace_start"() <{level = 10 : i32, message = "bqk,bkd->bqd"}> : () -> ()
    %cst_64 = arith.constant dense<0.000000e+00> : vector<2x8x8xf32>
    %186 = tpu.matmul %185, %174, %cst_64 {dimension_numbers = #tpu.dot_dimension_numbers<[2], [1], [1], [2], [0, 0, 0, 1, 1, 2], [0], [0]>} : vector<2x8x8xf32>, vector<2x8x8xf32>, vector<2x8x8xf32> -> vector<2x8x8xf32>
    "tpu.trace_stop"() : () -> ()
    %187 = vector.extract_strided_slice %154 {offsets = [0, 0, 16], sizes = [2, 8, 8], strides = [1, 1, 1]} : vector<2x8x32xf32> to vector<2x8x8xf32>
    %188 = vector.extract_strided_slice %155 {offsets = [0, 0, 16], sizes = [2, 8, 8], strides = [1, 1, 1]} : vector<2x8x32xf32> to vector<2x8x8xf32>
    %189 = vector.extract_strided_slice %156 {offsets = [0, 0, 16], sizes = [2, 8, 8], strides = [1, 1, 1]} : vector<2x8x32xf32> to vector<2x8x8xf32>
    "tpu.trace_start"() <{level = 10 : i32, message = "bqd,bkd->bqk"}> : () -> ()
    %cst_65 = arith.constant dense<0.000000e+00> : vector<2x8x8xf32>
    %190 = tpu.matmul %187, %188, %cst_65 {dimension_numbers = #tpu.dot_dimension_numbers<[2], [2], [1], [1], [0, 0, 0, 1, 1, 1], [0], [0]>} : vector<2x8x8xf32>, vector<2x8x8xf32>, vector<2x8x8xf32> -> vector<2x8x8xf32>
    "tpu.trace_stop"() : () -> ()
    %cst_66 = arith.constant dense<0xFF800000> : vector<2x8xf32>
    %191 = vector.multi_reduction <maximumf>, %190, %cst_66 [2] : vector<2x8x8xf32> to vector<2x8xf32>
    %192 = vector.shape_cast %191 : vector<2x8xf32> to vector<2x8x1xf32>
    %193 = vector.broadcast %192 : vector<2x8x1xf32> to vector<2x8x8xf32>
    %194 = arith.subf %190, %193 : vector<2x8x8xf32>
    %195 = math.exp %194 : vector<2x8x8xf32>
    %cst_67 = arith.constant dense<0.000000e+00> : vector<2x8xf32>
    %196 = vector.multi_reduction <add>, %195, %cst_67 [2] : vector<2x8x8xf32> to vector<2x8xf32>
    %197 = vector.shape_cast %196 : vector<2x8xf32> to vector<2x8x1xf32>
    %198 = tpu.reciprocal %197 {approx = true} : vector<2x8x1xf32> -> vector<2x8x1xf32>
    %199 = vector.broadcast %198 : vector<2x8x1xf32> to vector<2x8x8xf32>
    %200 = arith.mulf %195, %199 : vector<2x8x8xf32>
    "tpu.trace_start"() <{level = 10 : i32, message = "bqk,bkd->bqd"}> : () -> ()
    %cst_68 = arith.constant dense<0.000000e+00> : vector<2x8x8xf32>
    %201 = tpu.matmul %200, %189, %cst_68 {dimension_numbers = #tpu.dot_dimension_numbers<[2], [1], [1], [2], [0, 0, 0, 1, 1, 2], [0], [0]>} : vector<2x8x8xf32>, vector<2x8x8xf32>, vector<2x8x8xf32> -> vector<2x8x8xf32>
    "tpu.trace_stop"() : () -> ()
    %202 = vector.extract_strided_slice %154 {offsets = [0, 0, 24], sizes = [2, 8, 8], strides = [1, 1, 1]} : vector<2x8x32xf32> to vector<2x8x8xf32>
    %203 = vector.extract_strided_slice %155 {offsets = [0, 0, 24], sizes = [2, 8, 8], strides = [1, 1, 1]} : vector<2x8x32xf32> to vector<2x8x8xf32>
    %204 = vector.extract_strided_slice %156 {offsets = [0, 0, 24], sizes = [2, 8, 8], strides = [1, 1, 1]} : vector<2x8x32xf32> to vector<2x8x8xf32>
    "tpu.trace_start"() <{level = 10 : i32, message = "bqd,bkd->bqk"}> : () -> ()
    %cst_69 = arith.constant dense<0.000000e+00> : vector<2x8x8xf32>
    %205 = tpu.matmul %202, %203, %cst_69 {dimension_numbers = #tpu.dot_dimension_numbers<[2], [2], [1], [1], [0, 0, 0, 1, 1, 1], [0], [0]>} : vector<2x8x8xf32>, vector<2x8x8xf32>, vector<2x8x8xf32> -> vector<2x8x8xf32>
    "tpu.trace_stop"() : () -> ()
    %cst_70 = arith.constant dense<0xFF800000> : vector<2x8xf32>
    %206 = vector.multi_reduction <maximumf>, %205, %cst_70 [2] : vector<2x8x8xf32> to vector<2x8xf32>
    %207 = vector.shape_cast %206 : vector<2x8xf32> to vector<2x8x1xf32>
    %208 = vector.broadcast %207 : vector<2x8x1xf32> to vector<2x8x8xf32>
    %209 = arith.subf %205, %208 : vector<2x8x8xf32>
    %210 = math.exp %209 : vector<2x8x8xf32>
    %cst_71 = arith.constant dense<0.000000e+00> : vector<2x8xf32>
    %211 = vector.multi_reduction <add>, %210, %cst_71 [2] : vector<2x8x8xf32> to vector<2x8xf32>
    %212 = vector.shape_cast %211 : vector<2x8xf32> to vector<2x8x1xf32>
    %213 = tpu.reciprocal %212 {approx = true} : vector<2x8x1xf32> -> vector<2x8x1xf32>
    %214 = vector.broadcast %213 : vector<2x8x1xf32> to vector<2x8x8xf32>
    %215 = arith.mulf %210, %214 : vector<2x8x8xf32>
    "tpu.trace_start"() <{level = 10 : i32, message = "bqk,bkd->bqd"}> : () -> ()
    %cst_72 = arith.constant dense<0.000000e+00> : vector<2x8x8xf32>
    %216 = tpu.matmul %215, %204, %cst_72 {dimension_numbers = #tpu.dot_dimension_numbers<[2], [1], [1], [2], [0, 0, 0, 1, 1, 2], [0], [0]>} : vector<2x8x8xf32>, vector<2x8x8xf32>, vector<2x8x8xf32> -> vector<2x8x8xf32>
    "tpu.trace_stop"() : () -> ()
    %217 = tpu.concatenate %171, %186, %201, %216 in 2 : vector<2x8x8xf32>, vector<2x8x8xf32>, vector<2x8x8xf32>, vector<2x8x8xf32> -> vector<2x8x32xf32>
    %218 = vector.shape_cast %217 : vector<2x8x32xf32> to vector<16x32xf32>
    %219 = arith.addf %151, %218 : vector<16x32xf32>
    %c1_73 = arith.constant 1 : index
    %c0_74 = arith.constant 0 : index
    %c0_75 = arith.constant 0 : index
    %220 = vector.load %arg6[%c1_73, %c0_74, %c0_75] : memref<5x8x32xf32, #tpu.memory_space<vmem>>, vector<1x1x32xf32>
    %221 = vector.shape_cast %220 : vector<1x1x32xf32> to vector<1x32xf32>
    %c1_76 = arith.constant 1 : index
    %c1_77 = arith.constant 1 : index
    %c0_78 = arith.constant 0 : index
    %222 = vector.load %arg6[%c1_76, %c1_77, %c0_78] : memref<5x8x32xf32, #tpu.memory_space<vmem>>, vector<1x1x32xf32>
    %223 = vector.shape_cast %222 : vector<1x1x32xf32> to vector<1x32xf32>
    %c1_79 = arith.constant 1 : index
    %c2_80 = arith.constant 2 : index
    %c0_81 = arith.constant 0 : index
    %224 = vector.load %arg6[%c1_79, %c2_80, %c0_81] : memref<5x8x32xf32, #tpu.memory_space<vmem>>, vector<1x1x32xf32>
    %225 = vector.shape_cast %224 : vector<1x1x32xf32> to vector<1x32xf32>
    %c1_82 = arith.constant 1 : index
    %c3_83 = arith.constant 3 : index
    %c0_84 = arith.constant 0 : index
    %226 = vector.load %arg6[%c1_82, %c3_83, %c0_84] : memref<5x8x32xf32, #tpu.memory_space<vmem>>, vector<1x1x32xf32>
    %227 = vector.shape_cast %226 : vector<1x1x32xf32> to vector<1x32xf32>
    %c1_85 = arith.constant 1 : index
    %c4_86 = arith.constant 4 : index
    %c0_87 = arith.constant 0 : index
    %228 = vector.load %arg6[%c1_85, %c4_86, %c0_87] : memref<5x8x32xf32, #tpu.memory_space<vmem>>, vector<1x1x32xf32>
    %229 = vector.shape_cast %228 : vector<1x1x32xf32> to vector<1x32xf32>
    %c1_88 = arith.constant 1 : index
    %c0_89 = arith.constant 0 : index
    %c0_90 = arith.constant 0 : index
    %230 = vector.load %arg5[%c1_88, %c0_89, %c0_90] : memref<5x32x32xbf16, #tpu.memory_space<vmem>>, vector<1x32x32xbf16>
    %231 = vector.shape_cast %230 : vector<1x32x32xbf16> to vector<32x32xbf16>
    %cst_91 = arith.constant dense<0.000000e+00> : vector<16xf32>
    %232 = vector.multi_reduction <add>, %219, %cst_91 [1] : vector<16x32xf32> to vector<16xf32>
    %233 = vector.shape_cast %232 : vector<16xf32> to vector<16x1xf32>
    %cst_92 = arith.constant 3.200000e+01 : f32
    %234 = vector.broadcast %cst_92 : f32 to vector<16x1xf32>
    %235 = arith.divf %233, %234 : vector<16x1xf32>
    %236 = vector.broadcast %235 : vector<16x1xf32> to vector<16x32xf32>
    %237 = arith.subf %219, %236 : vector<16x32xf32>
    %238 = arith.mulf %237, %237 : vector<16x32xf32>
    %cst_93 = arith.constant dense<0.000000e+00> : vector<16xf32>
    %239 = vector.multi_reduction <add>, %238, %cst_93 [1] : vector<16x32xf32> to vector<16xf32>
    %240 = vector.shape_cast %239 : vector<16xf32> to vector<16x1xf32>
    %cst_94 = arith.constant 3.200000e+01 : f32
    %241 = vector.broadcast %cst_94 : f32 to vector<16x1xf32>
    %242 = arith.divf %240, %241 : vector<16x1xf32>
    %243 = vector.broadcast %235 : vector<16x1xf32> to vector<16x32xf32>
    %244 = arith.subf %219, %243 : vector<16x32xf32>
    %cst_95 = arith.constant 9.99999974E-6 : f32
    %245 = vector.broadcast %cst_95 : f32 to vector<16x1xf32>
    %246 = arith.addf %242, %245 : vector<16x1xf32>
    %247 = math.rsqrt %246 : vector<16x1xf32>
    %248 = vector.broadcast %247 : vector<16x1xf32> to vector<16x32xf32>
    %249 = arith.mulf %244, %248 : vector<16x32xf32>
    %250 = vector.broadcast %223 : vector<1x32xf32> to vector<16x32xf32>
    %251 = arith.mulf %249, %250 : vector<16x32xf32>
    %252 = vector.broadcast %225 : vector<1x32xf32> to vector<16x32xf32>
    %253 = arith.addf %251, %252 : vector<16x32xf32>
    %254 = arith.truncf %253 : vector<16x32xf32> to vector<16x32xbf16>
    %cst_96 = arith.constant dense<0.000000e+00> : vector<16x32xf32>
    %255 = tpu.matmul %254, %231, %cst_96 {dimension_numbers = #tpu.dot_dimension_numbers<[1], [0], [0], [1], [0, 0, 1, 1], [], []>} : vector<16x32xbf16>, vector<32x32xbf16>, vector<16x32xf32> -> vector<16x32xf32>
    %256 = vector.broadcast %221 : vector<1x32xf32> to vector<16x32xf32>
    %257 = arith.addf %255, %256 : vector<16x32xf32>
    %cst_97 = arith.constant 0.000000e+00 : f32
    %258 = vector.broadcast %cst_97 : f32 to vector<16x32xf32>
    %259 = arith.maximumf %257, %258 : vector<16x32xf32>
    %260 = arith.addf %253, %259 : vector<16x32xf32>
    %cst_98 = arith.constant dense<0.000000e+00> : vector<16xf32>
    %261 = vector.multi_reduction <add>, %260, %cst_98 [1] : vector<16x32xf32> to vector<16xf32>
    %262 = vector.shape_cast %261 : vector<16xf32> to vector<16x1xf32>
    %cst_99 = arith.constant 3.200000e+01 : f32
    %263 = vector.broadcast %cst_99 : f32 to vector<16x1xf32>
    %264 = arith.divf %262, %263 : vector<16x1xf32>
    %265 = vector.broadcast %264 : vector<16x1xf32> to vector<16x32xf32>
    %266 = arith.subf %260, %265 : vector<16x32xf32>
    %267 = arith.mulf %266, %266 : vector<16x32xf32>
    %cst_100 = arith.constant dense<0.000000e+00> : vector<16xf32>
    %268 = vector.multi_reduction <add>, %267, %cst_100 [1] : vector<16x32xf32> to vector<16xf32>
    %269 = vector.shape_cast %268 : vector<16xf32> to vector<16x1xf32>
    %cst_101 = arith.constant 3.200000e+01 : f32
    %270 = vector.broadcast %cst_101 : f32 to vector<16x1xf32>
    %271 = arith.divf %269, %270 : vector<16x1xf32>
    %272 = vector.broadcast %264 : vector<16x1xf32> to vector<16x32xf32>
    %273 = arith.subf %260, %272 : vector<16x32xf32>
    %cst_102 = arith.constant 9.99999974E-6 : f32
    %274 = vector.broadcast %cst_102 : f32 to vector<16x1xf32>
    %275 = arith.addf %271, %274 : vector<16x1xf32>
    %276 = math.rsqrt %275 : vector<16x1xf32>
    %277 = vector.broadcast %276 : vector<16x1xf32> to vector<16x32xf32>
    %278 = arith.mulf %273, %277 : vector<16x32xf32>
    %279 = vector.broadcast %227 : vector<1x32xf32> to vector<16x32xf32>
    %280 = arith.mulf %278, %279 : vector<16x32xf32>
    %281 = vector.broadcast %229 : vector<1x32xf32> to vector<16x32xf32>
    %282 = arith.addf %280, %281 : vector<16x32xf32>
    %c2_103 = arith.constant 2 : index
    %c0_104 = arith.constant 0 : index
    %c0_105 = arith.constant 0 : index
    %283 = vector.load %arg3[%c2_103, %c0_104, %c0_105] : memref<5x32x96xbf16, #tpu.memory_space<vmem>>, vector<1x32x96xbf16>
    %284 = vector.shape_cast %283 : vector<1x32x96xbf16> to vector<32x96xbf16>
    %285 = arith.truncf %282 : vector<16x32xf32> to vector<16x32xbf16>
    %cst_106 = arith.constant dense<0.000000e+00> : vector<16x96xf32>
    %286 = tpu.matmul %285, %284, %cst_106 {dimension_numbers = #tpu.dot_dimension_numbers<[1], [0], [0], [1], [0, 0, 1, 1], [], []>} : vector<16x32xbf16>, vector<32x96xbf16>, vector<16x96xf32> -> vector<16x96xf32>
    %c2_107 = arith.constant 2 : index
    %c0_108 = arith.constant 0 : index
    %c0_109 = arith.constant 0 : index
    %287 = vector.load %arg4[%c2_107, %c0_108, %c0_109] : memref<5x1x96xf32, #tpu.memory_space<vmem>>, vector<1x1x96xf32>
    %288 = vector.shape_cast %287 : vector<1x1x96xf32> to vector<1x96xf32>
    %289 = vector.broadcast %288 : vector<1x96xf32> to vector<16x96xf32>
    %290 = arith.addf %286, %289 : vector<16x96xf32>
    %291 = vector.extract_strided_slice %290 {offsets = [0, 32], sizes = [16, 32], strides = [1, 1]} : vector<16x96xf32> to vector<16x32xf32>
    %292 = vector.extract_strided_slice %290 {offsets = [0, 64], sizes = [16, 32], strides = [1, 1]} : vector<16x96xf32> to vector<16x32xf32>
    %c0_110 = arith.constant 0 : index
    %c0_111 = arith.constant 0 : index
    %293 = vector.load %arg2[%c0_110, %c0_111] : memref<1x32xf32, #tpu.memory_space<vmem>>, vector<1x32xf32>
    %c2_112 = arith.constant 2 : index
    %c0_113 = arith.constant 0 : index
    %c0_114 = arith.constant 0 : index
    %294 = vector.load %arg3[%c2_112, %c0_113, %c0_114] : memref<5x32x96xbf16, #tpu.memory_space<vmem>>, vector<1x32x96xbf16>
    %295 = vector.shape_cast %294 : vector<1x32x96xbf16> to vector<32x96xbf16>
    %296 = arith.truncf %293 : vector<1x32xf32> to vector<1x32xbf16>
    %cst_115 = arith.constant dense<0.000000e+00> : vector<1x96xf32>
    %297 = tpu.matmul %296, %295, %cst_115 {dimension_numbers = #tpu.dot_dimension_numbers<[1], [0], [0], [1], [0, 0, 1, 1], [], []>} : vector<1x32xbf16>, vector<32x96xbf16>, vector<1x96xf32> -> vector<1x96xf32>
    %c2_116 = arith.constant 2 : index
    %c0_117 = arith.constant 0 : index
    %c0_118 = arith.constant 0 : index
    %298 = vector.load %arg4[%c2_116, %c0_117, %c0_118] : memref<5x1x96xf32, #tpu.memory_space<vmem>>, vector<1x1x96xf32>
    %299 = vector.shape_cast %298 : vector<1x1x96xf32> to vector<1x96xf32>
    %300 = arith.addf %297, %299 : vector<1x96xf32>
    %301 = vector.extract_strided_slice %300 {offsets = [0, 0], sizes = [1, 32], strides = [1, 1]} : vector<1x96xf32> to vector<1x32xf32>
    %302 = vector.shape_cast %301 : vector<1x32xf32> to vector<1x1x32xf32>
    %303 = vector.shape_cast %302 : vector<1x1x32xf32> to vector<1x1x32xf32>
    %304 = vector.broadcast %303 : vector<1x1x32xf32> to vector<2x1x32xf32>
    %305 = vector.shape_cast %291 : vector<16x32xf32> to vector<2x8x32xf32>
    %306 = vector.shape_cast %292 : vector<16x32xf32> to vector<2x8x32xf32>
    %307 = vector.extract_strided_slice %304 {offsets = [0, 0, 0], sizes = [2, 1, 8], strides = [1, 1, 1]} : vector<2x1x32xf32> to vector<2x1x8xf32>
    %308 = vector.extract_strided_slice %305 {offsets = [0, 0, 0], sizes = [2, 8, 8], strides = [1, 1, 1]} : vector<2x8x32xf32> to vector<2x8x8xf32>
    %309 = vector.extract_strided_slice %306 {offsets = [0, 0, 0], sizes = [2, 8, 8], strides = [1, 1, 1]} : vector<2x8x32xf32> to vector<2x8x8xf32>
    "tpu.trace_start"() <{level = 10 : i32, message = "bqd,bkd->bqk"}> : () -> ()
    %cst_119 = arith.constant dense<0.000000e+00> : vector<2x1x8xf32>
    %310 = tpu.matmul %307, %308, %cst_119 {dimension_numbers = #tpu.dot_dimension_numbers<[2], [2], [1], [1], [0, 0, 0, 1, 1, 1], [0], [0]>} : vector<2x1x8xf32>, vector<2x8x8xf32>, vector<2x1x8xf32> -> vector<2x1x8xf32>
    "tpu.trace_stop"() : () -> ()
    %cst_120 = arith.constant dense<0xFF800000> : vector<2x1xf32>
    %311 = vector.multi_reduction <maximumf>, %310, %cst_120 [2] : vector<2x1x8xf32> to vector<2x1xf32>
    %312 = vector.shape_cast %311 : vector<2x1xf32> to vector<2x1x1xf32>
    %313 = vector.broadcast %312 : vector<2x1x1xf32> to vector<2x1x8xf32>
    %314 = arith.subf %310, %313 : vector<2x1x8xf32>
    %315 = math.exp %314 : vector<2x1x8xf32>
    %cst_121 = arith.constant dense<0.000000e+00> : vector<2x1xf32>
    %316 = vector.multi_reduction <add>, %315, %cst_121 [2] : vector<2x1x8xf32> to vector<2x1xf32>
    %317 = vector.shape_cast %316 : vector<2x1xf32> to vector<2x1x1xf32>
    %318 = tpu.reciprocal %317 {approx = true} : vector<2x1x1xf32> -> vector<2x1x1xf32>
    %319 = vector.broadcast %318 : vector<2x1x1xf32> to vector<2x1x8xf32>
    %320 = arith.mulf %315, %319 : vector<2x1x8xf32>
    "tpu.trace_start"() <{level = 10 : i32, message = "bqk,bkd->bqd"}> : () -> ()
    %cst_122 = arith.constant dense<0.000000e+00> : vector<2x1x8xf32>
    %321 = tpu.matmul %320, %309, %cst_122 {dimension_numbers = #tpu.dot_dimension_numbers<[2], [1], [1], [2], [0, 0, 0, 1, 1, 2], [0], [0]>} : vector<2x1x8xf32>, vector<2x8x8xf32>, vector<2x1x8xf32> -> vector<2x1x8xf32>
    "tpu.trace_stop"() : () -> ()
    %322 = vector.extract_strided_slice %304 {offsets = [0, 0, 8], sizes = [2, 1, 8], strides = [1, 1, 1]} : vector<2x1x32xf32> to vector<2x1x8xf32>
    %323 = vector.extract_strided_slice %305 {offsets = [0, 0, 8], sizes = [2, 8, 8], strides = [1, 1, 1]} : vector<2x8x32xf32> to vector<2x8x8xf32>
    %324 = vector.extract_strided_slice %306 {offsets = [0, 0, 8], sizes = [2, 8, 8], strides = [1, 1, 1]} : vector<2x8x32xf32> to vector<2x8x8xf32>
    "tpu.trace_start"() <{level = 10 : i32, message = "bqd,bkd->bqk"}> : () -> ()
    %cst_123 = arith.constant dense<0.000000e+00> : vector<2x1x8xf32>
    %325 = tpu.matmul %322, %323, %cst_123 {dimension_numbers = #tpu.dot_dimension_numbers<[2], [2], [1], [1], [0, 0, 0, 1, 1, 1], [0], [0]>} : vector<2x1x8xf32>, vector<2x8x8xf32>, vector<2x1x8xf32> -> vector<2x1x8xf32>
    "tpu.trace_stop"() : () -> ()
    %cst_124 = arith.constant dense<0xFF800000> : vector<2x1xf32>
    %326 = vector.multi_reduction <maximumf>, %325, %cst_124 [2] : vector<2x1x8xf32> to vector<2x1xf32>
    %327 = vector.shape_cast %326 : vector<2x1xf32> to vector<2x1x1xf32>
    %328 = vector.broadcast %327 : vector<2x1x1xf32> to vector<2x1x8xf32>
    %329 = arith.subf %325, %328 : vector<2x1x8xf32>
    %330 = math.exp %329 : vector<2x1x8xf32>
    %cst_125 = arith.constant dense<0.000000e+00> : vector<2x1xf32>
    %331 = vector.multi_reduction <add>, %330, %cst_125 [2] : vector<2x1x8xf32> to vector<2x1xf32>
    %332 = vector.shape_cast %331 : vector<2x1xf32> to vector<2x1x1xf32>
    %333 = tpu.reciprocal %332 {approx = true} : vector<2x1x1xf32> -> vector<2x1x1xf32>
    %334 = vector.broadcast %333 : vector<2x1x1xf32> to vector<2x1x8xf32>
    %335 = arith.mulf %330, %334 : vector<2x1x8xf32>
    "tpu.trace_start"() <{level = 10 : i32, message = "bqk,bkd->bqd"}> : () -> ()
    %cst_126 = arith.constant dense<0.000000e+00> : vector<2x1x8xf32>
    %336 = tpu.matmul %335, %324, %cst_126 {dimension_numbers = #tpu.dot_dimension_numbers<[2], [1], [1], [2], [0, 0, 0, 1, 1, 2], [0], [0]>} : vector<2x1x8xf32>, vector<2x8x8xf32>, vector<2x1x8xf32> -> vector<2x1x8xf32>
    "tpu.trace_stop"() : () -> ()
    %337 = vector.extract_strided_slice %304 {offsets = [0, 0, 16], sizes = [2, 1, 8], strides = [1, 1, 1]} : vector<2x1x32xf32> to vector<2x1x8xf32>
    %338 = vector.extract_strided_slice %305 {offsets = [0, 0, 16], sizes = [2, 8, 8], strides = [1, 1, 1]} : vector<2x8x32xf32> to vector<2x8x8xf32>
    %339 = vector.extract_strided_slice %306 {offsets = [0, 0, 16], sizes = [2, 8, 8], strides = [1, 1, 1]} : vector<2x8x32xf32> to vector<2x8x8xf32>
    "tpu.trace_start"() <{level = 10 : i32, message = "bqd,bkd->bqk"}> : () -> ()
    %cst_127 = arith.constant dense<0.000000e+00> : vector<2x1x8xf32>
    %340 = tpu.matmul %337, %338, %cst_127 {dimension_numbers = #tpu.dot_dimension_numbers<[2], [2], [1], [1], [0, 0, 0, 1, 1, 1], [0], [0]>} : vector<2x1x8xf32>, vector<2x8x8xf32>, vector<2x1x8xf32> -> vector<2x1x8xf32>
    "tpu.trace_stop"() : () -> ()
    %cst_128 = arith.constant dense<0xFF800000> : vector<2x1xf32>
    %341 = vector.multi_reduction <maximumf>, %340, %cst_128 [2] : vector<2x1x8xf32> to vector<2x1xf32>
    %342 = vector.shape_cast %341 : vector<2x1xf32> to vector<2x1x1xf32>
    %343 = vector.broadcast %342 : vector<2x1x1xf32> to vector<2x1x8xf32>
    %344 = arith.subf %340, %343 : vector<2x1x8xf32>
    %345 = math.exp %344 : vector<2x1x8xf32>
    %cst_129 = arith.constant dense<0.000000e+00> : vector<2x1xf32>
    %346 = vector.multi_reduction <add>, %345, %cst_129 [2] : vector<2x1x8xf32> to vector<2x1xf32>
    %347 = vector.shape_cast %346 : vector<2x1xf32> to vector<2x1x1xf32>
    %348 = tpu.reciprocal %347 {approx = true} : vector<2x1x1xf32> -> vector<2x1x1xf32>
    %349 = vector.broadcast %348 : vector<2x1x1xf32> to vector<2x1x8xf32>
    %350 = arith.mulf %345, %349 : vector<2x1x8xf32>
    "tpu.trace_start"() <{level = 10 : i32, message = "bqk,bkd->bqd"}> : () -> ()
    %cst_130 = arith.constant dense<0.000000e+00> : vector<2x1x8xf32>
    %351 = tpu.matmul %350, %339, %cst_130 {dimension_numbers = #tpu.dot_dimension_numbers<[2], [1], [1], [2], [0, 0, 0, 1, 1, 2], [0], [0]>} : vector<2x1x8xf32>, vector<2x8x8xf32>, vector<2x1x8xf32> -> vector<2x1x8xf32>
    "tpu.trace_stop"() : () -> ()
    %352 = vector.extract_strided_slice %304 {offsets = [0, 0, 24], sizes = [2, 1, 8], strides = [1, 1, 1]} : vector<2x1x32xf32> to vector<2x1x8xf32>
    %353 = vector.extract_strided_slice %305 {offsets = [0, 0, 24], sizes = [2, 8, 8], strides = [1, 1, 1]} : vector<2x8x32xf32> to vector<2x8x8xf32>
    %354 = vector.extract_strided_slice %306 {offsets = [0, 0, 24], sizes = [2, 8, 8], strides = [1, 1, 1]} : vector<2x8x32xf32> to vector<2x8x8xf32>
    "tpu.trace_start"() <{level = 10 : i32, message = "bqd,bkd->bqk"}> : () -> ()
    %cst_131 = arith.constant dense<0.000000e+00> : vector<2x1x8xf32>
    %355 = tpu.matmul %352, %353, %cst_131 {dimension_numbers = #tpu.dot_dimension_numbers<[2], [2], [1], [1], [0, 0, 0, 1, 1, 1], [0], [0]>} : vector<2x1x8xf32>, vector<2x8x8xf32>, vector<2x1x8xf32> -> vector<2x1x8xf32>
    "tpu.trace_stop"() : () -> ()
    %cst_132 = arith.constant dense<0xFF800000> : vector<2x1xf32>
    %356 = vector.multi_reduction <maximumf>, %355, %cst_132 [2] : vector<2x1x8xf32> to vector<2x1xf32>
    %357 = vector.shape_cast %356 : vector<2x1xf32> to vector<2x1x1xf32>
    %358 = vector.broadcast %357 : vector<2x1x1xf32> to vector<2x1x8xf32>
    %359 = arith.subf %355, %358 : vector<2x1x8xf32>
    %360 = math.exp %359 : vector<2x1x8xf32>
    %cst_133 = arith.constant dense<0.000000e+00> : vector<2x1xf32>
    %361 = vector.multi_reduction <add>, %360, %cst_133 [2] : vector<2x1x8xf32> to vector<2x1xf32>
    %362 = vector.shape_cast %361 : vector<2x1xf32> to vector<2x1x1xf32>
    %363 = tpu.reciprocal %362 {approx = true} : vector<2x1x1xf32> -> vector<2x1x1xf32>
    %364 = vector.broadcast %363 : vector<2x1x1xf32> to vector<2x1x8xf32>
    %365 = arith.mulf %360, %364 : vector<2x1x8xf32>
    "tpu.trace_start"() <{level = 10 : i32, message = "bqk,bkd->bqd"}> : () -> ()
    %cst_134 = arith.constant dense<0.000000e+00> : vector<2x1x8xf32>
    %366 = tpu.matmul %365, %354, %cst_134 {dimension_numbers = #tpu.dot_dimension_numbers<[2], [1], [1], [2], [0, 0, 0, 1, 1, 2], [0], [0]>} : vector<2x1x8xf32>, vector<2x8x8xf32>, vector<2x1x8xf32> -> vector<2x1x8xf32>
    "tpu.trace_stop"() : () -> ()
    %367 = tpu.concatenate %321, %336, %351, %366 in 2 : vector<2x1x8xf32>, vector<2x1x8xf32>, vector<2x1x8xf32>, vector<2x1x8xf32> -> vector<2x1x32xf32>
    %368 = arith.addf %304, %367 : vector<2x1x32xf32>
    %369 = vector.shape_cast %368 : vector<2x1x32xf32> to vector<2x32xf32>
    %c2_135 = arith.constant 2 : index
    %c0_136 = arith.constant 0 : index
    %c0_137 = arith.constant 0 : index
    %370 = vector.load %arg6[%c2_135, %c0_136, %c0_137] : memref<5x8x32xf32, #tpu.memory_space<vmem>>, vector<1x1x32xf32>
    %371 = vector.shape_cast %370 : vector<1x1x32xf32> to vector<1x32xf32>
    %c2_138 = arith.constant 2 : index
    %c1_139 = arith.constant 1 : index
    %c0_140 = arith.constant 0 : index
    %372 = vector.load %arg6[%c2_138, %c1_139, %c0_140] : memref<5x8x32xf32, #tpu.memory_space<vmem>>, vector<1x1x32xf32>
    %373 = vector.shape_cast %372 : vector<1x1x32xf32> to vector<1x32xf32>
    %c2_141 = arith.constant 2 : index
    %c2_142 = arith.constant 2 : index
    %c0_143 = arith.constant 0 : index
    %374 = vector.load %arg6[%c2_141, %c2_142, %c0_143] : memref<5x8x32xf32, #tpu.memory_space<vmem>>, vector<1x1x32xf32>
    %375 = vector.shape_cast %374 : vector<1x1x32xf32> to vector<1x32xf32>
    %c2_144 = arith.constant 2 : index
    %c3_145 = arith.constant 3 : index
    %c0_146 = arith.constant 0 : index
    %376 = vector.load %arg6[%c2_144, %c3_145, %c0_146] : memref<5x8x32xf32, #tpu.memory_space<vmem>>, vector<1x1x32xf32>
    %377 = vector.shape_cast %376 : vector<1x1x32xf32> to vector<1x32xf32>
    %c2_147 = arith.constant 2 : index
    %c4_148 = arith.constant 4 : index
    %c0_149 = arith.constant 0 : index
    %378 = vector.load %arg6[%c2_147, %c4_148, %c0_149] : memref<5x8x32xf32, #tpu.memory_space<vmem>>, vector<1x1x32xf32>
    %379 = vector.shape_cast %378 : vector<1x1x32xf32> to vector<1x32xf32>
    %c2_150 = arith.constant 2 : index
    %c0_151 = arith.constant 0 : index
    %c0_152 = arith.constant 0 : index
    %380 = vector.load %arg5[%c2_150, %c0_151, %c0_152] : memref<5x32x32xbf16, #tpu.memory_space<vmem>>, vector<1x32x32xbf16>
    %381 = vector.shape_cast %380 : vector<1x32x32xbf16> to vector<32x32xbf16>
    %cst_153 = arith.constant dense<0.000000e+00> : vector<2xf32>
    %382 = vector.multi_reduction <add>, %369, %cst_153 [1] : vector<2x32xf32> to vector<2xf32>
    %383 = vector.shape_cast %382 : vector<2xf32> to vector<2x1xf32>
    %cst_154 = arith.constant 3.200000e+01 : f32
    %384 = vector.broadcast %cst_154 : f32 to vector<2x1xf32>
    %385 = arith.divf %383, %384 : vector<2x1xf32>
    %386 = vector.broadcast %385 : vector<2x1xf32> to vector<2x32xf32>
    %387 = arith.subf %369, %386 : vector<2x32xf32>
    %388 = arith.mulf %387, %387 : vector<2x32xf32>
    %cst_155 = arith.constant dense<0.000000e+00> : vector<2xf32>
    %389 = vector.multi_reduction <add>, %388, %cst_155 [1] : vector<2x32xf32> to vector<2xf32>
    %390 = vector.shape_cast %389 : vector<2xf32> to vector<2x1xf32>
    %cst_156 = arith.constant 3.200000e+01 : f32
    %391 = vector.broadcast %cst_156 : f32 to vector<2x1xf32>
    %392 = arith.divf %390, %391 : vector<2x1xf32>
    %393 = vector.broadcast %385 : vector<2x1xf32> to vector<2x32xf32>
    %394 = arith.subf %369, %393 : vector<2x32xf32>
    %cst_157 = arith.constant 9.99999974E-6 : f32
    %395 = vector.broadcast %cst_157 : f32 to vector<2x1xf32>
    %396 = arith.addf %392, %395 : vector<2x1xf32>
    %397 = math.rsqrt %396 : vector<2x1xf32>
    %398 = vector.broadcast %397 : vector<2x1xf32> to vector<2x32xf32>
    %399 = arith.mulf %394, %398 : vector<2x32xf32>
    %400 = vector.broadcast %373 : vector<1x32xf32> to vector<2x32xf32>
    %401 = arith.mulf %399, %400 : vector<2x32xf32>
    %402 = vector.broadcast %375 : vector<1x32xf32> to vector<2x32xf32>
    %403 = arith.addf %401, %402 : vector<2x32xf32>
    %404 = arith.truncf %403 : vector<2x32xf32> to vector<2x32xbf16>
    %cst_158 = arith.constant dense<0.000000e+00> : vector<2x32xf32>
    %405 = tpu.matmul %404, %381, %cst_158 {dimension_numbers = #tpu.dot_dimension_numbers<[1], [0], [0], [1], [0, 0, 1, 1], [], []>} : vector<2x32xbf16>, vector<32x32xbf16>, vector<2x32xf32> -> vector<2x32xf32>
    %406 = vector.broadcast %371 : vector<1x32xf32> to vector<2x32xf32>
    %407 = arith.addf %405, %406 : vector<2x32xf32>
    %cst_159 = arith.constant 0.000000e+00 : f32
    %408 = vector.broadcast %cst_159 : f32 to vector<2x32xf32>
    %409 = arith.maximumf %407, %408 : vector<2x32xf32>
    %410 = arith.addf %403, %409 : vector<2x32xf32>
    %cst_160 = arith.constant dense<0.000000e+00> : vector<2xf32>
    %411 = vector.multi_reduction <add>, %410, %cst_160 [1] : vector<2x32xf32> to vector<2xf32>
    %412 = vector.shape_cast %411 : vector<2xf32> to vector<2x1xf32>
    %cst_161 = arith.constant 3.200000e+01 : f32
    %413 = vector.broadcast %cst_161 : f32 to vector<2x1xf32>
    %414 = arith.divf %412, %413 : vector<2x1xf32>
    %415 = vector.broadcast %414 : vector<2x1xf32> to vector<2x32xf32>
    %416 = arith.subf %410, %415 : vector<2x32xf32>
    %417 = arith.mulf %416, %416 : vector<2x32xf32>
    %cst_162 = arith.constant dense<0.000000e+00> : vector<2xf32>
    %418 = vector.multi_reduction <add>, %417, %cst_162 [1] : vector<2x32xf32> to vector<2xf32>
    %419 = vector.shape_cast %418 : vector<2xf32> to vector<2x1xf32>
    %cst_163 = arith.constant 3.200000e+01 : f32
    %420 = vector.broadcast %cst_163 : f32 to vector<2x1xf32>
    %421 = arith.divf %419, %420 : vector<2x1xf32>
    %422 = vector.broadcast %414 : vector<2x1xf32> to vector<2x32xf32>
    %423 = arith.subf %410, %422 : vector<2x32xf32>
    %cst_164 = arith.constant 9.99999974E-6 : f32
    %424 = vector.broadcast %cst_164 : f32 to vector<2x1xf32>
    %425 = arith.addf %421, %424 : vector<2x1xf32>
    %426 = math.rsqrt %425 : vector<2x1xf32>
    %427 = vector.broadcast %426 : vector<2x1xf32> to vector<2x32xf32>
    %428 = arith.mulf %423, %427 : vector<2x32xf32>
    %429 = vector.broadcast %377 : vector<1x32xf32> to vector<2x32xf32>
    %430 = arith.mulf %428, %429 : vector<2x32xf32>
    %431 = vector.broadcast %379 : vector<1x32xf32> to vector<2x32xf32>
    %432 = arith.addf %430, %431 : vector<2x32xf32>
    %c3_165 = arith.constant 3 : index
    %c0_166 = arith.constant 0 : index
    %c0_167 = arith.constant 0 : index
    %433 = vector.load %arg3[%c3_165, %c0_166, %c0_167] : memref<5x32x96xbf16, #tpu.memory_space<vmem>>, vector<1x32x96xbf16>
    %434 = vector.shape_cast %433 : vector<1x32x96xbf16> to vector<32x96xbf16>
    %435 = arith.truncf %432 : vector<2x32xf32> to vector<2x32xbf16>
    %cst_168 = arith.constant dense<0.000000e+00> : vector<2x96xf32>
    %436 = tpu.matmul %435, %434, %cst_168 {dimension_numbers = #tpu.dot_dimension_numbers<[1], [0], [0], [1], [0, 0, 1, 1], [], []>} : vector<2x32xbf16>, vector<32x96xbf16>, vector<2x96xf32> -> vector<2x96xf32>
    %c3_169 = arith.constant 3 : index
    %c0_170 = arith.constant 0 : index
    %c0_171 = arith.constant 0 : index
    %437 = vector.load %arg4[%c3_169, %c0_170, %c0_171] : memref<5x1x96xf32, #tpu.memory_space<vmem>>, vector<1x1x96xf32>
    %438 = vector.shape_cast %437 : vector<1x1x96xf32> to vector<1x96xf32>
    %439 = vector.broadcast %438 : vector<1x96xf32> to vector<2x96xf32>
    %440 = arith.addf %436, %439 : vector<2x96xf32>
    %441 = vector.extract_strided_slice %440 {offsets = [0, 0], sizes = [2, 32], strides = [1, 1]} : vector<2x96xf32> to vector<2x32xf32>
    %442 = vector.extract_strided_slice %440 {offsets = [0, 64], sizes = [2, 32], strides = [1, 1]} : vector<2x96xf32> to vector<2x32xf32>
    %443 = arith.addf %441, %442 : vector<2x32xf32>
    %c3_172 = arith.constant 3 : index
    %c0_173 = arith.constant 0 : index
    %c0_174 = arith.constant 0 : index
    %444 = vector.load %arg6[%c3_172, %c0_173, %c0_174] : memref<5x8x32xf32, #tpu.memory_space<vmem>>, vector<1x1x32xf32>
    %445 = vector.shape_cast %444 : vector<1x1x32xf32> to vector<1x32xf32>
    %c3_175 = arith.constant 3 : index
    %c1_176 = arith.constant 1 : index
    %c0_177 = arith.constant 0 : index
    %446 = vector.load %arg6[%c3_175, %c1_176, %c0_177] : memref<5x8x32xf32, #tpu.memory_space<vmem>>, vector<1x1x32xf32>
    %447 = vector.shape_cast %446 : vector<1x1x32xf32> to vector<1x32xf32>
    %c3_178 = arith.constant 3 : index
    %c2_179 = arith.constant 2 : index
    %c0_180 = arith.constant 0 : index
    %448 = vector.load %arg6[%c3_178, %c2_179, %c0_180] : memref<5x8x32xf32, #tpu.memory_space<vmem>>, vector<1x1x32xf32>
    %449 = vector.shape_cast %448 : vector<1x1x32xf32> to vector<1x32xf32>
    %c3_181 = arith.constant 3 : index
    %c3_182 = arith.constant 3 : index
    %c0_183 = arith.constant 0 : index
    %450 = vector.load %arg6[%c3_181, %c3_182, %c0_183] : memref<5x8x32xf32, #tpu.memory_space<vmem>>, vector<1x1x32xf32>
    %451 = vector.shape_cast %450 : vector<1x1x32xf32> to vector<1x32xf32>
    %c3_184 = arith.constant 3 : index
    %c4_185 = arith.constant 4 : index
    %c0_186 = arith.constant 0 : index
    %452 = vector.load %arg6[%c3_184, %c4_185, %c0_186] : memref<5x8x32xf32, #tpu.memory_space<vmem>>, vector<1x1x32xf32>
    %453 = vector.shape_cast %452 : vector<1x1x32xf32> to vector<1x32xf32>
    %c3_187 = arith.constant 3 : index
    %c0_188 = arith.constant 0 : index
    %c0_189 = arith.constant 0 : index
    %454 = vector.load %arg5[%c3_187, %c0_188, %c0_189] : memref<5x32x32xbf16, #tpu.memory_space<vmem>>, vector<1x32x32xbf16>
    %455 = vector.shape_cast %454 : vector<1x32x32xbf16> to vector<32x32xbf16>
    %cst_190 = arith.constant dense<0.000000e+00> : vector<2xf32>
    %456 = vector.multi_reduction <add>, %443, %cst_190 [1] : vector<2x32xf32> to vector<2xf32>
    %457 = vector.shape_cast %456 : vector<2xf32> to vector<2x1xf32>
    %cst_191 = arith.constant 3.200000e+01 : f32
    %458 = vector.broadcast %cst_191 : f32 to vector<2x1xf32>
    %459 = arith.divf %457, %458 : vector<2x1xf32>
    %460 = vector.broadcast %459 : vector<2x1xf32> to vector<2x32xf32>
    %461 = arith.subf %443, %460 : vector<2x32xf32>
    %462 = arith.mulf %461, %461 : vector<2x32xf32>
    %cst_192 = arith.constant dense<0.000000e+00> : vector<2xf32>
    %463 = vector.multi_reduction <add>, %462, %cst_192 [1] : vector<2x32xf32> to vector<2xf32>
    %464 = vector.shape_cast %463 : vector<2xf32> to vector<2x1xf32>
    %cst_193 = arith.constant 3.200000e+01 : f32
    %465 = vector.broadcast %cst_193 : f32 to vector<2x1xf32>
    %466 = arith.divf %464, %465 : vector<2x1xf32>
    %467 = vector.broadcast %459 : vector<2x1xf32> to vector<2x32xf32>
    %468 = arith.subf %443, %467 : vector<2x32xf32>
    %cst_194 = arith.constant 9.99999974E-6 : f32
    %469 = vector.broadcast %cst_194 : f32 to vector<2x1xf32>
    %470 = arith.addf %466, %469 : vector<2x1xf32>
    %471 = math.rsqrt %470 : vector<2x1xf32>
    %472 = vector.broadcast %471 : vector<2x1xf32> to vector<2x32xf32>
    %473 = arith.mulf %468, %472 : vector<2x32xf32>
    %474 = vector.broadcast %447 : vector<1x32xf32> to vector<2x32xf32>
    %475 = arith.mulf %473, %474 : vector<2x32xf32>
    %476 = vector.broadcast %449 : vector<1x32xf32> to vector<2x32xf32>
    %477 = arith.addf %475, %476 : vector<2x32xf32>
    %478 = arith.truncf %477 : vector<2x32xf32> to vector<2x32xbf16>
    %cst_195 = arith.constant dense<0.000000e+00> : vector<2x32xf32>
    %479 = tpu.matmul %478, %455, %cst_195 {dimension_numbers = #tpu.dot_dimension_numbers<[1], [0], [0], [1], [0, 0, 1, 1], [], []>} : vector<2x32xbf16>, vector<32x32xbf16>, vector<2x32xf32> -> vector<2x32xf32>
    %480 = vector.broadcast %445 : vector<1x32xf32> to vector<2x32xf32>
    %481 = arith.addf %479, %480 : vector<2x32xf32>
    %cst_196 = arith.constant 0.000000e+00 : f32
    %482 = vector.broadcast %cst_196 : f32 to vector<2x32xf32>
    %483 = arith.maximumf %481, %482 : vector<2x32xf32>
    %484 = arith.addf %477, %483 : vector<2x32xf32>
    %cst_197 = arith.constant dense<0.000000e+00> : vector<2xf32>
    %485 = vector.multi_reduction <add>, %484, %cst_197 [1] : vector<2x32xf32> to vector<2xf32>
    %486 = vector.shape_cast %485 : vector<2xf32> to vector<2x1xf32>
    %cst_198 = arith.constant 3.200000e+01 : f32
    %487 = vector.broadcast %cst_198 : f32 to vector<2x1xf32>
    %488 = arith.divf %486, %487 : vector<2x1xf32>
    %489 = vector.broadcast %488 : vector<2x1xf32> to vector<2x32xf32>
    %490 = arith.subf %484, %489 : vector<2x32xf32>
    %491 = arith.mulf %490, %490 : vector<2x32xf32>
    %cst_199 = arith.constant dense<0.000000e+00> : vector<2xf32>
    %492 = vector.multi_reduction <add>, %491, %cst_199 [1] : vector<2x32xf32> to vector<2xf32>
    %493 = vector.shape_cast %492 : vector<2xf32> to vector<2x1xf32>
    %cst_200 = arith.constant 3.200000e+01 : f32
    %494 = vector.broadcast %cst_200 : f32 to vector<2x1xf32>
    %495 = arith.divf %493, %494 : vector<2x1xf32>
    %496 = vector.broadcast %488 : vector<2x1xf32> to vector<2x32xf32>
    %497 = arith.subf %484, %496 : vector<2x32xf32>
    %cst_201 = arith.constant 9.99999974E-6 : f32
    %498 = vector.broadcast %cst_201 : f32 to vector<2x1xf32>
    %499 = arith.addf %495, %498 : vector<2x1xf32>
    %500 = math.rsqrt %499 : vector<2x1xf32>
    %501 = vector.broadcast %500 : vector<2x1xf32> to vector<2x32xf32>
    %502 = arith.mulf %497, %501 : vector<2x32xf32>
    %503 = vector.broadcast %451 : vector<1x32xf32> to vector<2x32xf32>
    %504 = arith.mulf %502, %503 : vector<2x32xf32>
    %505 = vector.broadcast %453 : vector<1x32xf32> to vector<2x32xf32>
    %506 = arith.addf %504, %505 : vector<2x32xf32>
    %c4_202 = arith.constant 4 : index
    %c0_203 = arith.constant 0 : index
    %c0_204 = arith.constant 0 : index
    %507 = vector.load %arg3[%c4_202, %c0_203, %c0_204] : memref<5x32x96xbf16, #tpu.memory_space<vmem>>, vector<1x32x96xbf16>
    %508 = vector.shape_cast %507 : vector<1x32x96xbf16> to vector<32x96xbf16>
    %509 = arith.truncf %506 : vector<2x32xf32> to vector<2x32xbf16>
    %cst_205 = arith.constant dense<0.000000e+00> : vector<2x96xf32>
    %510 = tpu.matmul %509, %508, %cst_205 {dimension_numbers = #tpu.dot_dimension_numbers<[1], [0], [0], [1], [0, 0, 1, 1], [], []>} : vector<2x32xbf16>, vector<32x96xbf16>, vector<2x96xf32> -> vector<2x96xf32>
    %c4_206 = arith.constant 4 : index
    %c0_207 = arith.constant 0 : index
    %c0_208 = arith.constant 0 : index
    %511 = vector.load %arg4[%c4_206, %c0_207, %c0_208] : memref<5x1x96xf32, #tpu.memory_space<vmem>>, vector<1x1x96xf32>
    %512 = vector.shape_cast %511 : vector<1x1x96xf32> to vector<1x96xf32>
    %513 = vector.broadcast %512 : vector<1x96xf32> to vector<2x96xf32>
    %514 = arith.addf %510, %513 : vector<2x96xf32>
    %515 = vector.extract_strided_slice %514 {offsets = [0, 0], sizes = [2, 32], strides = [1, 1]} : vector<2x96xf32> to vector<2x32xf32>
    %516 = vector.extract_strided_slice %514 {offsets = [0, 64], sizes = [2, 32], strides = [1, 1]} : vector<2x96xf32> to vector<2x32xf32>
    %517 = arith.addf %515, %516 : vector<2x32xf32>
    %c4_209 = arith.constant 4 : index
    %c0_210 = arith.constant 0 : index
    %c0_211 = arith.constant 0 : index
    %518 = vector.load %arg6[%c4_209, %c0_210, %c0_211] : memref<5x8x32xf32, #tpu.memory_space<vmem>>, vector<1x1x32xf32>
    %519 = vector.shape_cast %518 : vector<1x1x32xf32> to vector<1x32xf32>
    %c4_212 = arith.constant 4 : index
    %c1_213 = arith.constant 1 : index
    %c0_214 = arith.constant 0 : index
    %520 = vector.load %arg6[%c4_212, %c1_213, %c0_214] : memref<5x8x32xf32, #tpu.memory_space<vmem>>, vector<1x1x32xf32>
    %521 = vector.shape_cast %520 : vector<1x1x32xf32> to vector<1x32xf32>
    %c4_215 = arith.constant 4 : index
    %c2_216 = arith.constant 2 : index
    %c0_217 = arith.constant 0 : index
    %522 = vector.load %arg6[%c4_215, %c2_216, %c0_217] : memref<5x8x32xf32, #tpu.memory_space<vmem>>, vector<1x1x32xf32>
    %523 = vector.shape_cast %522 : vector<1x1x32xf32> to vector<1x32xf32>
    %c4_218 = arith.constant 4 : index
    %c3_219 = arith.constant 3 : index
    %c0_220 = arith.constant 0 : index
    %524 = vector.load %arg6[%c4_218, %c3_219, %c0_220] : memref<5x8x32xf32, #tpu.memory_space<vmem>>, vector<1x1x32xf32>
    %525 = vector.shape_cast %524 : vector<1x1x32xf32> to vector<1x32xf32>
    %c4_221 = arith.constant 4 : index
    %c4_222 = arith.constant 4 : index
    %c0_223 = arith.constant 0 : index
    %526 = vector.load %arg6[%c4_221, %c4_222, %c0_223] : memref<5x8x32xf32, #tpu.memory_space<vmem>>, vector<1x1x32xf32>
    %527 = vector.shape_cast %526 : vector<1x1x32xf32> to vector<1x32xf32>
    %c4_224 = arith.constant 4 : index
    %c0_225 = arith.constant 0 : index
    %c0_226 = arith.constant 0 : index
    %528 = vector.load %arg5[%c4_224, %c0_225, %c0_226] : memref<5x32x32xbf16, #tpu.memory_space<vmem>>, vector<1x32x32xbf16>
    %529 = vector.shape_cast %528 : vector<1x32x32xbf16> to vector<32x32xbf16>
    %cst_227 = arith.constant dense<0.000000e+00> : vector<2xf32>
    %530 = vector.multi_reduction <add>, %517, %cst_227 [1] : vector<2x32xf32> to vector<2xf32>
    %531 = vector.shape_cast %530 : vector<2xf32> to vector<2x1xf32>
    %cst_228 = arith.constant 3.200000e+01 : f32
    %532 = vector.broadcast %cst_228 : f32 to vector<2x1xf32>
    %533 = arith.divf %531, %532 : vector<2x1xf32>
    %534 = vector.broadcast %533 : vector<2x1xf32> to vector<2x32xf32>
    %535 = arith.subf %517, %534 : vector<2x32xf32>
    %536 = arith.mulf %535, %535 : vector<2x32xf32>
    %cst_229 = arith.constant dense<0.000000e+00> : vector<2xf32>
    %537 = vector.multi_reduction <add>, %536, %cst_229 [1] : vector<2x32xf32> to vector<2xf32>
    %538 = vector.shape_cast %537 : vector<2xf32> to vector<2x1xf32>
    %cst_230 = arith.constant 3.200000e+01 : f32
    %539 = vector.broadcast %cst_230 : f32 to vector<2x1xf32>
    %540 = arith.divf %538, %539 : vector<2x1xf32>
    %541 = vector.broadcast %533 : vector<2x1xf32> to vector<2x32xf32>
    %542 = arith.subf %517, %541 : vector<2x32xf32>
    %cst_231 = arith.constant 9.99999974E-6 : f32
    %543 = vector.broadcast %cst_231 : f32 to vector<2x1xf32>
    %544 = arith.addf %540, %543 : vector<2x1xf32>
    %545 = math.rsqrt %544 : vector<2x1xf32>
    %546 = vector.broadcast %545 : vector<2x1xf32> to vector<2x32xf32>
    %547 = arith.mulf %542, %546 : vector<2x32xf32>
    %548 = vector.broadcast %521 : vector<1x32xf32> to vector<2x32xf32>
    %549 = arith.mulf %547, %548 : vector<2x32xf32>
    %550 = vector.broadcast %523 : vector<1x32xf32> to vector<2x32xf32>
    %551 = arith.addf %549, %550 : vector<2x32xf32>
    %552 = arith.truncf %551 : vector<2x32xf32> to vector<2x32xbf16>
    %cst_232 = arith.constant dense<0.000000e+00> : vector<2x32xf32>
    %553 = tpu.matmul %552, %529, %cst_232 {dimension_numbers = #tpu.dot_dimension_numbers<[1], [0], [0], [1], [0, 0, 1, 1], [], []>} : vector<2x32xbf16>, vector<32x32xbf16>, vector<2x32xf32> -> vector<2x32xf32>
    %554 = vector.broadcast %519 : vector<1x32xf32> to vector<2x32xf32>
    %555 = arith.addf %553, %554 : vector<2x32xf32>
    %cst_233 = arith.constant 0.000000e+00 : f32
    %556 = vector.broadcast %cst_233 : f32 to vector<2x32xf32>
    %557 = arith.maximumf %555, %556 : vector<2x32xf32>
    %558 = arith.addf %551, %557 : vector<2x32xf32>
    %cst_234 = arith.constant dense<0.000000e+00> : vector<2xf32>
    %559 = vector.multi_reduction <add>, %558, %cst_234 [1] : vector<2x32xf32> to vector<2xf32>
    %560 = vector.shape_cast %559 : vector<2xf32> to vector<2x1xf32>
    %cst_235 = arith.constant 3.200000e+01 : f32
    %561 = vector.broadcast %cst_235 : f32 to vector<2x1xf32>
    %562 = arith.divf %560, %561 : vector<2x1xf32>
    %563 = vector.broadcast %562 : vector<2x1xf32> to vector<2x32xf32>
    %564 = arith.subf %558, %563 : vector<2x32xf32>
    %565 = arith.mulf %564, %564 : vector<2x32xf32>
    %cst_236 = arith.constant dense<0.000000e+00> : vector<2xf32>
    %566 = vector.multi_reduction <add>, %565, %cst_236 [1] : vector<2x32xf32> to vector<2xf32>
    %567 = vector.shape_cast %566 : vector<2xf32> to vector<2x1xf32>
    %cst_237 = arith.constant 3.200000e+01 : f32
    %568 = vector.broadcast %cst_237 : f32 to vector<2x1xf32>
    %569 = arith.divf %567, %568 : vector<2x1xf32>
    %570 = vector.broadcast %562 : vector<2x1xf32> to vector<2x32xf32>
    %571 = arith.subf %558, %570 : vector<2x32xf32>
    %cst_238 = arith.constant 9.99999974E-6 : f32
    %572 = vector.broadcast %cst_238 : f32 to vector<2x1xf32>
    %573 = arith.addf %569, %572 : vector<2x1xf32>
    %574 = math.rsqrt %573 : vector<2x1xf32>
    %575 = vector.broadcast %574 : vector<2x1xf32> to vector<2x32xf32>
    %576 = arith.mulf %571, %575 : vector<2x32xf32>
    %577 = vector.broadcast %525 : vector<1x32xf32> to vector<2x32xf32>
    %578 = arith.mulf %576, %577 : vector<2x32xf32>
    %579 = vector.broadcast %527 : vector<1x32xf32> to vector<2x32xf32>
    %580 = arith.addf %578, %579 : vector<2x32xf32>
    %c0_239 = arith.constant 0 : index
    %c0_240 = arith.constant 0 : index
    %581 = vector.load %arg7[%c0_239, %c0_240] : memref<33x16xf32, #tpu.memory_space<vmem>>, vector<32x16xf32>
    %cst_241 = arith.constant dense<0.000000e+00> : vector<2x16xf32>
    %582 = tpu.matmul %580, %581, %cst_241 {dimension_numbers = #tpu.dot_dimension_numbers<[1], [0], [0], [1], [0, 0, 1, 1], [], []>} : vector<2x32xf32>, vector<32x16xf32>, vector<2x16xf32> -> vector<2x16xf32>
    %c32 = arith.constant 32 : index
    %c0_242 = arith.constant 0 : index
    %583 = vector.load %arg7[%c32, %c0_242] : memref<33x16xf32, #tpu.memory_space<vmem>>, vector<1x16xf32>
    %584 = vector.broadcast %583 : vector<1x16xf32> to vector<2x16xf32>
    %585 = arith.addf %582, %584 : vector<2x16xf32>
    %586 = vector.extract_strided_slice %585 {offsets = [0, 0], sizes = [1, 16], strides = [1, 1]} : vector<2x16xf32> to vector<1x16xf32>
    %587 = vector.extract_strided_slice %585 {offsets = [1, 0], sizes = [1, 16], strides = [1, 1]} : vector<2x16xf32> to vector<1x16xf32>
    %588 = tpu.concatenate %586, %587 in 1 : vector<1x16xf32>, vector<1x16xf32> -> vector<1x32xf32>
    %c0_243 = arith.constant 0 : index
    %c0_244 = arith.constant 0 : index
    %c0_245 = arith.constant 0 : index
    %589 = vector.load %arg8[%c0_243, %c0_244, %c0_245] : memref<1x1x32xf32, #tpu.memory_space<vmem>>, vector<1x1x32xf32>
    %590 = vector.shape_cast %589 : vector<1x1x32xf32> to vector<1x32xf32>
    %591 = vector.shape_cast %588 : vector<1x32xf32> to vector<1x1x32xf32>
    tpu.vector_store %arg8[%c0_243, %c0_244, %c0_245], %591 {strides = array<i32>} : memref<1x1x32xf32, #tpu.memory_space<vmem>>, vector<1x1x32xf32>,
    return
  }
  func.func @transform_0(%arg0: i32) -> (i32, i32, i32) {
    %c0_i32 = arith.constant 0 : i32
    %c0_i32_0 = arith.constant 0 : i32
    %c0_i32_1 = arith.constant 0 : i32
    return %arg0, %c0_i32, %c0_i32_0 : i32, i32, i32
  }
  func.func @transform_1(%arg0: i32) -> (i32, i32) {
    %c0_i32 = arith.constant 0 : i32
    %c0_i32_0 = arith.constant 0 : i32
    %c0_i32_1 = arith.constant 0 : i32
    return %c0_i32, %c0_i32_0 : i32, i32
  }
  func.func @transform_2(%arg0: i32) -> (i32, i32, i32) {
    %c0_i32 = arith.constant 0 : i32
    %c0_i32_0 = arith.constant 0 : i32
    %c0_i32_1 = arith.constant 0 : i32
    %c0_i32_2 = arith.constant 0 : i32
    return %c0_i32, %c0_i32_0, %c0_i32_1 : i32, i32, i32
  }
  func.func @transform_3(%arg0: i32) -> (i32, i32, i32) {
    %c0_i32 = arith.constant 0 : i32
    %c0_i32_0 = arith.constant 0 : i32
    %c0_i32_1 = arith.constant 0 : i32
    %c0_i32_2 = arith.constant 0 : i32
    return %c0_i32, %c0_i32_0, %c0_i32_1 : i32, i32, i32
  }
  func.func @transform_4(%arg0: i32) -> (i32, i32, i32) {
    %c0_i32 = arith.constant 0 : i32
    %c0_i32_0 = arith.constant 0 : i32
    %c0_i32_1 = arith.constant 0 : i32
    %c0_i32_2 = arith.constant 0 : i32
    return %c0_i32, %c0_i32_0, %c0_i32_1 : i32, i32, i32
  }
  func.func @transform_5(%arg0: i32) -> (i32, i32, i32) {
    %c0_i32 = arith.constant 0 : i32
    %c0_i32_0 = arith.constant 0 : i32
    %c0_i32_1 = arith.constant 0 : i32
    %c0_i32_2 = arith.constant 0 : i32
    return %c0_i32, %c0_i32_0, %c0_i32_1 : i32, i32, i32
  }
  func.func @transform_6(%arg0: i32) -> (i32, i32) {
    %c0_i32 = arith.constant 0 : i32
    %c0_i32_0 = arith.constant 0 : i32
    %c0_i32_1 = arith.constant 0 : i32
    return %c0_i32, %c0_i32_0 : i32, i32
  }
  func.func @transform_7(%arg0: i32) -> (i32, i32, i32) {
    %c0_i32 = arith.constant 0 : i32
    %c0_i32_0 = arith.constant 0 : i32
    %c0_i32_1 = arith.constant 0 : i32
    return %arg0, %c0_i32, %c0_i32_0 : i32, i32, i32
  }
}

</mosaic_0001>

<llo_original>
// kernel: _lambda_.1
$region0: #{_lambda_.1}
  #allocation0 [shape = 'u32[]', space=smem, size = 0x4, offset = 0x4, fixed_abs, tag = 'smem constant byte address 0x4 - core index']
  #allocation1 [shape = 'u32[72,128]{1,0:T(1,128)}', space=vmem, size = 0x9000, scoped, tag = 'internal scratch']
  %s0 = inlined_call_operand.vmem [shape: bf16[1,16,16], index: 0, kind: input, shape index: {}]
  %s1 = inlined_call_operand.vmem [shape: f32[1,32], index: 1, kind: input, shape index: {}]
  %s2 = inlined_call_operand.hbm [shape: bf16[5,32,96], index: 2, kind: input, shape index: {}]
  %s3 = inlined_call_operand.vmem [shape: f32[5,1,96], index: 3, kind: input, shape index: {}]
  %s4 = inlined_call_operand.hbm [shape: bf16[5,32,32], index: 4, kind: input, shape index: {}]
  %s5 = inlined_call_operand.vmem [shape: f32[5,8,32], index: 5, kind: input, shape index: {}]
  %s6 = inlined_call_operand.vmem [shape: f32[33,16], index: 6, kind: input, shape index: {}]
  %s7 = inlined_call_operand.vmem [shape: f32[1,1,32], index: 7, kind: output, shape index: {}]
  %s8 = sld [smem:[#allocation0]]
  $region46: #{_lambda_.1} parent=0
    _
  %s10 = ssub.s32 1, %s8
  %s11 = scalar_select 0, %s10, %s8
  $region1: #{_lambda_.1} parent=0
    #allocation2 [shape = 'u8[40960]{0}', space=vmem, size = 0xa000, scoped, tag = 'input window, operand 2, single buffered']
    #allocation3 [shape = 's32[1]{0}', space=sflag, size = 0x4, scoped, tag = 'scoped memory for _lambda_.1']
    #allocation4 [shape = 'u8[40960]{0}', space=vmem, size = 0xa000, scoped, tag = 'input window, operand 4, single buffered']
    #allocation5 [shape = 's32[1]{0}', space=sflag, size = 0x4, scoped, tag = 'scoped memory for _lambda_.1']
    %12 = vsyncpa [#allocation3], 0
    %13 = vsyncpa [#allocation5], 0
    // Predicated region
    $region2: #{_lambda_.1} parent=1 // pred_check
      _
    $region3: #{_lambda_.1} parent=1 // pred_check_branch
      %15 = sbr.rel (0) target = $region5
    $region4: #{_lambda_.1} parent=1 // pred_region
      _
    $region5: #{_lambda_.1} parent=1 // pred_fallthru
      _
    // Predicated region
    $region6: #{_lambda_.1} parent=1 // pred_check
      _
    $region7: #{_lambda_.1} parent=1 // pred_check_branch
      %17 = sbr.rel (0) target = $region9
    $region8: #{_lambda_.1} parent=1 // pred_region
      _
    $region9: #{_lambda_.1} parent=1 // pred_fallthru
      _
    // Predicated region
    $region10: #{_lambda_.1} parent=1 // pred_check
      _
    $region11: #{_lambda_.1} parent=1 // pred_check_branch
      %19 = sbr.rel (0) target = $region13
    $region12: #{_lambda_.1} parent=1 // pred_region
      %21 = vsyncadd [#allocation3], 0
      %s22 = sshll.u32 %s2, 4
      %s23 = int_to_ptr.hbm [resolvable:$true] %s22
      %s24 = sshll.u32 [#allocation2], 4
      %s25 = int_to_ptr.vmem [resolvable:$true] %s24
      %30 = dma.hbm_to_vmem [thread:$0]  %s23, 1280, %s25, [#allocation3], 64, 64, 4
    $region13: #{_lambda_.1} parent=1 // pred_fallthru
      _
    // Predicated region
    $region14: #{_lambda_.1} parent=1 // pred_check
      _
    $region15: #{_lambda_.1} parent=1 // pred_check_branch
      %32 = sbr.rel (0) target = $region17
    $region16: #{_lambda_.1} parent=1 // pred_region
      _
    $region17: #{_lambda_.1} parent=1 // pred_fallthru
      _
    // Predicated region
    $region18: #{_lambda_.1} parent=1 // pred_check
      _
    $region19: #{_lambda_.1} parent=1 // pred_check_branch
      %34 = sbr.rel (0) target = $region21
    $region20: #{_lambda_.1} parent=1 // pred_region
      %36 = vsyncadd [#allocation5], 0
      %s37 = sshll.u32 %s4, 4
      %s38 = int_to_ptr.hbm [resolvable:$true] %s37
      %s39 = sshll.u32 [#allocation4], 4
      %s40 = int_to_ptr.vmem [resolvable:$true] %s39
      %45 = dma.hbm_to_vmem [thread:$0]  %s38, 1280, %s40, [#allocation5], 64, 64, 4
    $region21: #{_lambda_.1} parent=1 // pred_fallthru
      _
    // Predicated region
    $region22: #{_lambda_.1} parent=1 // pred_check
      _
    $region23: #{_lambda_.1} parent=1 // pred_check_branch
      %47 = sbr.rel (0) target = $region25
    $region24: #{_lambda_.1} parent=1 // pred_region
      _
    $region25: #{_lambda_.1} parent=1 // pred_fallthru
      _
    // Predicated region
    $region26: #{_lambda_.1} parent=1 // pred_check
      _
    $region27: #{_lambda_.1} parent=1 // pred_check_branch
      %49 = sbr.rel (0) target = $region29
    $region28: #{_lambda_.1} parent=1 // pred_region
      _
    $region29: #{_lambda_.1} parent=1 // pred_fallthru
      _
    // Predicated region
    $region30: #{_lambda_.1} parent=1 // pred_check
      _
    $region31: #{_lambda_.1} parent=1 // pred_check_branch
      %51 = sbr.rel (0) target = $region33
    $region32: #{_lambda_.1} parent=1 // pred_region
      %53 = dma.done [#allocation3], 1280
    $region33: #{_lambda_.1} parent=1 // pred_fallthru
      _
    // Predicated region
    $region34: #{_lambda_.1} parent=1 // pred_check
      _
    $region35: #{_lambda_.1} parent=1 // pred_check_branch
      %55 = sbr.rel (0) target = $region37
    $region36: #{_lambda_.1} parent=1 // pred_region
      %57 = dma.done [#allocation5], 1280
    $region37: #{_lambda_.1} parent=1 // pred_fallthru
      _
    %v59 = vld [vmem:[%s0] sm:$0xf]
    %v60 = vld [vmem:[%s0 + $0x4] sm:$0xf]
    %v61 = vld [vmem:[#allocation2] sm:$0xf]
    %v62 = vld [vmem:[#allocation2 + $0x4] sm:$0xf]
    %v63 = vld [vmem:[%s3] sm:$0x1]
    %v65 = vperm.slane %v63, 0
    %v69 = vunpack.c.l.b16 %v59
    %v70 = vunpack.c.l.b16 %v60
    %v71 = vpack.c.b16 %v70, %v69
    %v74 = vunpack.c.l.b16 %v61
    %v75 = vunpack.c.l.b16 %v62
    %v76 = vpack.c.b16 %v75, %v74
    %vm78 = vcmask 130048
    %v80 = vsel %vm78, %v71, 0
    %82 = vmatpush.bf16.msra.mxu0 0
    %83 = vmatpush.bf16.msra.mxu0 0
    %84 = vmatpush.bf16.msra.mxu0 0
    %85 = vmatpush.bf16.msra.mxu0 0
    %86 = vmatpush.bf16.msra.mxu0 0
    %87 = vmatpush.bf16.msra.mxu0 0
    %88 = vmatpush.bf16.msra.mxu0 0
    %89 = vmatpush.bf16.msra.mxu0 %v76
    %90 = vmatmul.bf16.gmra.mxu0 %v80
    %v91 = vpop.f32.mrf.mxu0
    %v92 = vadd.f32 %v65, %v91
    %v93 = vpop.f32.mrf.mxu0
    %v94 = vadd.f32 %v65, %v93
    %95 = vdwg.mxu0
    %97 = vrot.lane.b32.xlu0 %v92, 96
    %v98 = vpop.permute.xlu0 %97
    %vm99 = vcmask 64512
    %v100 = vsel %vm99, %v92, 0
    %v102 = vsel %vm99, %v98, 0
    %104 = vmatpush.xpose.msra.mxu0 0.0
    %105 = vmatpush.xpose.msra.mxu0 0.0
    %106 = vmatpush.xpose.msra.mxu0 0.0
    %107 = vmatpush.xpose.msra.mxu0 0.0
    %108 = vmatpush.xpose.msra.mxu0 0.0
    %109 = vmatpush.xpose.msra.mxu0 0.0
    %110 = vmatpush.xpose.msra.mxu0 0.0
    %111 = vmatpush.xpose.msra.mxu0 0.0
    %112 = vmatpush.xpose.msra.mxu0 0.0
    %113 = vmatpush.xpose.msra.mxu0 0.0
    %114 = vmatpush.xpose.msra.mxu0 0.0
    %115 = vmatpush.xpose.msra.mxu0 0.0
    %116 = vmatpush.xpose.msra.mxu0 0.0
    %117 = vmatpush.xpose.msra.mxu0 0.0
    %118 = vmatpush.xpose.msra.mxu0 0.0
    %119 = vmatpush.xpose.msra.mxu0 %v102
    %120 = vmatmul.f32.gmra.mxu0 %v100
    %v121 = vpop.f32.mrf.mxu0
    %v122 = vadd.f32 0.0, %v121
    %123 = vdwg.mxu0
    %125 = vrot.lane.b32.xlu0 %v94, 96
    %v126 = vpop.permute.xlu0 %125
    %v127 = vsel %vm99, %v94, 0
    %v129 = vsel %vm99, %v126, 0
    %131 = vmatpush.xpose.msra.mxu0 0.0
    %132 = vmatpush.xpose.msra.mxu0 0.0
    %133 = vmatpush.xpose.msra.mxu0 0.0
    %134 = vmatpush.xpose.msra.mxu0 0.0
    %135 = vmatpush.xpose.msra.mxu0 0.0
    %136 = vmatpush.xpose.msra.mxu0 0.0
    %137 = vmatpush.xpose.msra.mxu0 0.0
    %138 = vmatpush.xpose.msra.mxu0 0.0
    %139 = vmatpush.xpose.msra.mxu0 0.0
    %140 = vmatpush.xpose.msra.mxu0 0.0
    %141 = vmatpush.xpose.msra.mxu0 0.0
    %142 = vmatpush.xpose.msra.mxu0 0.0
    %143 = vmatpush.xpose.msra.mxu0 0.0
    %144 = vmatpush.xpose.msra.mxu0 0.0
    %145 = vmatpush.xpose.msra.mxu0 0.0
    %146 = vmatpush.xpose.msra.mxu0 %v129
    %147 = vmatmul.f32.gmra.mxu0 %v127
    %v148 = vpop.f32.mrf.mxu0
    %v149 = vadd.f32 0.0, %v148
    %150 = vdwg.mxu0
    %v151 = vsel %vm99, %v122, -inf
    %152 = vmax.xlane.f32.xlu0 %v151
    %v153 = vpop.xlane.xlu0 %152
    %v154 = vsel %vm99, %v149, -inf
    %155 = vmax.xlane.f32.xlu0 %v154
    %v156 = vpop.xlane.xlu0 %155
    %v157 = vsub.f32 %v122, %v153
    %v158 = vsub.f32 %v149, %v156
    %v159 = vmul.f32 %v157, 1.442695
    %v160 = vpow.pop %v159
    %v161 = vmul.f32 %v158, 1.442695
    %v162 = vpow.pop %v161
    %v163 = vsel %vm99, %v160, 0.0
    %164 = vadd.xlane.f32.xlu0 %v163
    %v165 = vpop.xlane.xlu0 %164
    %v166 = vsel %vm99, %v162, 0.0
    %167 = vadd.xlane.f32.xlu0 %v166
    %v168 = vpop.xlane.xlu0 %167
    %v169 = vrcp.pop %v165
    %v170 = vrcp.pop %v168
    %v171 = vmul.f32 %v160, %v169
    %v172 = vmul.f32 %v162, %v170
    %173 = vrot.lane.b32.xlu0 %v92, 64
    %v174 = vpop.permute.xlu0 %173
    %v177 = vsel %vm99, %v171, 0
    %179 = vmatpush.msra.mxu0 0.0
    %180 = vmatpush.msra.mxu0 0.0
    %181 = vmatpush.msra.mxu0 0.0
    %182 = vmatpush.msra.mxu0 0.0
    %183 = vmatpush.msra.mxu0 0.0
    %184 = vmatpush.msra.mxu0 0.0
    %185 = vmatpush.msra.mxu0 0.0
    %186 = vmatpush.msra.mxu0 0.0
    %187 = vmatpush.msra.mxu0 0.0
    %188 = vmatpush.msra.mxu0 0.0
    %189 = vmatpush.msra.mxu0 0.0
    %190 = vmatpush.msra.mxu0 0.0
    %191 = vmatpush.msra.mxu0 0.0
    %192 = vmatpush.msra.mxu0 0.0
    %193 = vmatpush.msra.mxu0 0.0
    %194 = vmatpush.msra.mxu0 %v174
    %195 = vmatmul.f32.gmra.mxu0 %v177
    %v196 = vpop.f32.mrf.mxu0
    %v197 = vadd.f32 0.0, %v196
    %198 = vdwg.mxu0
    %199 = vrot.lane.b32.xlu0 %v94, 64
    %v200 = vpop.permute.xlu0 %199
    %v203 = vsel %vm99, %v172, 0
    %205 = vmatpush.msra.mxu0 0.0
    %206 = vmatpush.msra.mxu0 0.0
    %207 = vmatpush.msra.mxu0 0.0
    %208 = vmatpush.msra.mxu0 0.0
    %209 = vmatpush.msra.mxu0 0.0
    %210 = vmatpush.msra.mxu0 0.0
    %211 = vmatpush.msra.mxu0 0.0
    %212 = vmatpush.msra.mxu0 0.0
    %213 = vmatpush.msra.mxu0 0.0
    %214 = vmatpush.msra.mxu0 0.0
    %215 = vmatpush.msra.mxu0 0.0
    %216 = vmatpush.msra.mxu0 0.0
    %217 = vmatpush.msra.mxu0 0.0
    %218 = vmatpush.msra.mxu0 0.0
    %219 = vmatpush.msra.mxu0 0.0
    %220 = vmatpush.msra.mxu0 %v200
    %221 = vmatmul.f32.gmra.mxu0 %v203
    %v222 = vpop.f32.mrf.mxu0
    %v223 = vadd.f32 0.0, %v222
    %224 = vdwg.mxu0
    %225 = vrot.lane.b32.xlu0 %v92, 120
    %v226 = vpop.permute.xlu0 %225
    %227 = vrot.lane.b32.xlu0 %v92, 88
    %v228 = vpop.permute.xlu0 %227
    %v229 = vsel %vm99, %v226, 0
    %v231 = vsel %vm99, %v228, 0
    %233 = vmatpush.xpose.msra.mxu0 0.0
    %234 = vmatpush.xpose.msra.mxu0 0.0
    %235 = vmatpush.xpose.msra.mxu0 0.0
    %236 = vmatpush.xpose.msra.mxu0 0.0
    %237 = vmatpush.xpose.msra.mxu0 0.0
    %238 = vmatpush.xpose.msra.mxu0 0.0
    %239 = vmatpush.xpose.msra.mxu0 0.0
    %240 = vmatpush.xpose.msra.mxu0 0.0
    %241 = vmatpush.xpose.msra.mxu0 0.0
    %242 = vmatpush.xpose.msra.mxu0 0.0
    %243 = vmatpush.xpose.msra.mxu0 0.0
    %244 = vmatpush.xpose.msra.mxu0 0.0
    %245 = vmatpush.xpose.msra.mxu0 0.0
    %246 = vmatpush.xpose.msra.mxu0 0.0
    %247 = vmatpush.xpose.msra.mxu0 0.0
    %248 = vmatpush.xpose.msra.mxu0 %v231
    %249 = vmatmul.f32.gmra.mxu0 %v229
    %v250 = vpop.f32.mrf.mxu0
    %v251 = vadd.f32 0.0, %v250
    %252 = vdwg.mxu0
    %253 = vrot.lane.b32.xlu0 %v94, 120
    %v254 = vpop.permute.xlu0 %253
    %255 = vrot.lane.b32.xlu0 %v94, 88
    %v256 = vpop.permute.xlu0 %255
    %v257 = vsel %vm99, %v254, 0
    %v259 = vsel %vm99, %v256, 0
    %261 = vmatpush.xpose.msra.mxu0 0.0
    %262 = vmatpush.xpose.msra.mxu0 0.0
    %263 = vmatpush.xpose.msra.mxu0 0.0
    %264 = vmatpush.xpose.msra.mxu0 0.0
    %265 = vmatpush.xpose.msra.mxu0 0.0
    %266 = vmatpush.xpose.msra.mxu0 0.0
    %267 = vmatpush.xpose.msra.mxu0 0.0
    %268 = vmatpush.xpose.msra.mxu0 0.0
    %269 = vmatpush.xpose.msra.mxu0 0.0
    %270 = vmatpush.xpose.msra.mxu0 0.0
    %271 = vmatpush.xpose.msra.mxu0 0.0
    %272 = vmatpush.xpose.msra.mxu0 0.0
    %273 = vmatpush.xpose.msra.mxu0 0.0
    %274 = vmatpush.xpose.msra.mxu0 0.0
    %275 = vmatpush.xpose.msra.mxu0 0.0
    %276 = vmatpush.xpose.msra.mxu0 %v259
    %277 = vmatmul.f32.gmra.mxu0 %v257
    %v278 = vpop.f32.mrf.mxu0
    %v279 = vadd.f32 0.0, %v278
    %280 = vdwg.mxu0
    %v281 = vsel %vm99, %v251, -inf
    %282 = vmax.xlane.f32.xlu0 %v281
    %v283 = vpop.xlane.xlu0 %282
    %v284 = vsel %vm99, %v279, -inf
    %285 = vmax.xlane.f32.xlu0 %v284
    %v286 = vpop.xlane.xlu0 %285
    %v287 = vsub.f32 %v251, %v283
    %v288 = vsub.f32 %v279, %v286
    %v289 = vmul.f32 %v287, 1.442695
    %v290 = vpow.pop %v289
    %v291 = vmul.f32 %v288, 1.442695
    %v292 = vpow.pop %v291
    %v293 = vsel %vm99, %v290, 0.0
    %294 = vadd.xlane.f32.xlu0 %v293
    %v295 = vpop.xlane.xlu0 %294
    %v296 = vsel %vm99, %v292, 0.0
    %297 = vadd.xlane.f32.xlu0 %v296
    %v298 = vpop.xlane.xlu0 %297
    %v299 = vrcp.pop %v295
    %v300 = vrcp.pop %v298
    %v301 = vmul.f32 %v290, %v299
    %v302 = vmul.f32 %v292, %v300
    %303 = vrot.lane.b32.xlu0 %v92, 56
    %v304 = vpop.permute.xlu0 %303
    %v307 = vsel %vm99, %v301, 0
    %309 = vmatpush.msra.mxu0 0.0
    %310 = vmatpush.msra.mxu0 0.0
    %311 = vmatpush.msra.mxu0 0.0
    %312 = vmatpush.msra.mxu0 0.0
    %313 = vmatpush.msra.mxu0 0.0
    %314 = vmatpush.msra.mxu0 0.0
    %315 = vmatpush.msra.mxu0 0.0
    %316 = vmatpush.msra.mxu0 0.0
    %317 = vmatpush.msra.mxu0 0.0
    %318 = vmatpush.msra.mxu0 0.0
    %319 = vmatpush.msra.mxu0 0.0
    %320 = vmatpush.msra.mxu0 0.0
    %321 = vmatpush.msra.mxu0 0.0
    %322 = vmatpush.msra.mxu0 0.0
    %323 = vmatpush.msra.mxu0 0.0
    %324 = vmatpush.msra.mxu0 %v304
    %325 = vmatmul.f32.gmra.mxu0 %v307
    %v326 = vpop.f32.mrf.mxu0
    %v327 = vadd.f32 0.0, %v326
    %328 = vdwg.mxu0
    %329 = vrot.lane.b32.xlu0 %v94, 56
    %v330 = vpop.permute.xlu0 %329
    %v333 = vsel %vm99, %v302, 0
    %335 = vmatpush.msra.mxu0 0.0
    %336 = vmatpush.msra.mxu0 0.0
    %337 = vmatpush.msra.mxu0 0.0
    %338 = vmatpush.msra.mxu0 0.0
    %339 = vmatpush.msra.mxu0 0.0
    %340 = vmatpush.msra.mxu0 0.0
    %341 = vmatpush.msra.mxu0 0.0
    %342 = vmatpush.msra.mxu0 0.0
    %343 = vmatpush.msra.mxu0 0.0
    %344 = vmatpush.msra.mxu0 0.0
    %345 = vmatpush.msra.mxu0 0.0
    %346 = vmatpush.msra.mxu0 0.0
    %347 = vmatpush.msra.mxu0 0.0
    %348 = vmatpush.msra.mxu0 0.0
    %349 = vmatpush.msra.mxu0 0.0
    %350 = vmatpush.msra.mxu0 %v330
    %351 = vmatmul.f32.gmra.mxu0 %v333
    %v352 = vpop.f32.mrf.mxu0
    %v353 = vadd.f32 0.0, %v352
    %354 = vdwg.mxu0
    %355 = vrot.lane.b32.xlu0 %v92, 112
    %v356 = vpop.permute.xlu0 %355
    %357 = vrot.lane.b32.xlu0 %v92, 80
    %v358 = vpop.permute.xlu0 %357
    %v359 = vsel %vm99, %v356, 0
    %v361 = vsel %vm99, %v358, 0
    %363 = vmatpush.xpose.msra.mxu0 0.0
    %364 = vmatpush.xpose.msra.mxu0 0.0
    %365 = vmatpush.xpose.msra.mxu0 0.0
    %366 = vmatpush.xpose.msra.mxu0 0.0
    %367 = vmatpush.xpose.msra.mxu0 0.0
    %368 = vmatpush.xpose.msra.mxu0 0.0
    %369 = vmatpush.xpose.msra.mxu0 0.0
    %370 = vmatpush.xpose.msra.mxu0 0.0
    %371 = vmatpush.xpose.msra.mxu0 0.0
    %372 = vmatpush.xpose.msra.mxu0 0.0
    %373 = vmatpush.xpose.msra.mxu0 0.0
    %374 = vmatpush.xpose.msra.mxu0 0.0
    %375 = vmatpush.xpose.msra.mxu0 0.0
    %376 = vmatpush.xpose.msra.mxu0 0.0
    %377 = vmatpush.xpose.msra.mxu0 0.0
    %378 = vmatpush.xpose.msra.mxu0 %v361
    %379 = vmatmul.f32.gmra.mxu0 %v359
    %v380 = vpop.f32.mrf.mxu0
    %v381 = vadd.f32 0.0, %v380
    %382 = vdwg.mxu0
    %383 = vrot.lane.b32.xlu0 %v94, 112
    %v384 = vpop.permute.xlu0 %383
    %385 = vrot.lane.b32.xlu0 %v94, 80
    %v386 = vpop.permute.xlu0 %385
    %v387 = vsel %vm99, %v384, 0
    %v389 = vsel %vm99, %v386, 0
    %391 = vmatpush.xpose.msra.mxu0 0.0
    %392 = vmatpush.xpose.msra.mxu0 0.0
    %393 = vmatpush.xpose.msra.mxu0 0.0
    %394 = vmatpush.xpose.msra.mxu0 0.0
    %395 = vmatpush.xpose.msra.mxu0 0.0
    %396 = vmatpush.xpose.msra.mxu0 0.0
    %397 = vmatpush.xpose.msra.mxu0 0.0
    %398 = vmatpush.xpose.msra.mxu0 0.0
    %399 = vmatpush.xpose.msra.mxu0 0.0
    %400 = vmatpush.xpose.msra.mxu0 0.0
    %401 = vmatpush.xpose.msra.mxu0 0.0
    %402 = vmatpush.xpose.msra.mxu0 0.0
    %403 = vmatpush.xpose.msra.mxu0 0.0
    %404 = vmatpush.xpose.msra.mxu0 0.0
    %405 = vmatpush.xpose.msra.mxu0 0.0
    %406 = vmatpush.xpose.msra.mxu0 %v389
    %407 = vmatmul.f32.gmra.mxu0 %v387
    %v408 = vpop.f32.mrf.mxu0
    %v409 = vadd.f32 0.0, %v408
    %410 = vdwg.mxu0
    %v411 = vsel %vm99, %v381, -inf
    %412 = vmax.xlane.f32.xlu0 %v411
    %v413 = vpop.xlane.xlu0 %412
    %v414 = vsel %vm99, %v409, -inf
    %415 = vmax.xlane.f32.xlu0 %v414
    %v416 = vpop.xlane.xlu0 %415
    %v417 = vsub.f32 %v381, %v413
    %v418 = vsub.f32 %v409, %v416
    %v419 = vmul.f32 %v417, 1.442695
    %v420 = vpow.pop %v419
    %v421 = vmul.f32 %v418, 1.442695
    %v422 = vpow.pop %v421
    %v423 = vsel %vm99, %v420, 0.0
    %424 = vadd.xlane.f32.xlu0 %v423
    %v425 = vpop.xlane.xlu0 %424
    %v426 = vsel %vm99, %v422, 0.0
    %427 = vadd.xlane.f32.xlu0 %v426
    %v428 = vpop.xlane.xlu0 %427
    %v429 = vrcp.pop %v425
    %v430 = vrcp.pop %v428
    %v431 = vmul.f32 %v420, %v429
    %v432 = vmul.f32 %v422, %v430
    %433 = vrot.lane.b32.xlu0 %v92, 48
    %v434 = vpop.permute.xlu0 %433
    %v437 = vsel %vm99, %v431, 0
    %439 = vmatpush.msra.mxu0 0.0
    %440 = vmatpush.msra.mxu0 0.0
    %441 = vmatpush.msra.mxu0 0.0
    %442 = vmatpush.msra.mxu0 0.0
    %443 = vmatpush.msra.mxu0 0.0
    %444 = vmatpush.msra.mxu0 0.0
    %445 = vmatpush.msra.mxu0 0.0
    %446 = vmatpush.msra.mxu0 0.0
    %447 = vmatpush.msra.mxu0 0.0
    %448 = vmatpush.msra.mxu0 0.0
    %449 = vmatpush.msra.mxu0 0.0
    %450 = vmatpush.msra.mxu0 0.0
    %451 = vmatpush.msra.mxu0 0.0
    %452 = vmatpush.msra.mxu0 0.0
    %453 = vmatpush.msra.mxu0 0.0
    %454 = vmatpush.msra.mxu0 %v434
    %455 = vmatmul.f32.gmra.mxu0 %v437
    %v456 = vpop.f32.mrf.mxu0
    %v457 = vadd.f32 0.0, %v456
    %458 = vdwg.mxu0
    %459 = vrot.lane.b32.xlu0 %v94, 48
    %v460 = vpop.permute.xlu0 %459
    %v463 = vsel %vm99, %v432, 0
    %465 = vmatpush.msra.mxu0 0.0
    %466 = vmatpush.msra.mxu0 0.0
    %467 = vmatpush.msra.mxu0 0.0
    %468 = vmatpush.msra.mxu0 0.0
    %469 = vmatpush.msra.mxu0 0.0
    %470 = vmatpush.msra.mxu0 0.0
    %471 = vmatpush.msra.mxu0 0.0
    %472 = vmatpush.msra.mxu0 0.0
    %473 = vmatpush.msra.mxu0 0.0
    %474 = vmatpush.msra.mxu0 0.0
    %475 = vmatpush.msra.mxu0 0.0
    %476 = vmatpush.msra.mxu0 0.0
    %477 = vmatpush.msra.mxu0 0.0
    %478 = vmatpush.msra.mxu0 0.0
    %479 = vmatpush.msra.mxu0 0.0
    %480 = vmatpush.msra.mxu0 %v460
    %481 = vmatmul.f32.gmra.mxu0 %v463
    %v482 = vpop.f32.mrf.mxu0
    %v483 = vadd.f32 0.0, %v482
    %484 = vdwg.mxu0
    %485 = vrot.lane.b32.xlu0 %v92, 104
    %v486 = vpop.permute.xlu0 %485
    %487 = vrot.lane.b32.xlu0 %v92, 72
    %v488 = vpop.permute.xlu0 %487
    %v489 = vsel %vm99, %v486, 0
    %v491 = vsel %vm99, %v488, 0
    %493 = vmatpush.xpose.msra.mxu0 0.0
    %494 = vmatpush.xpose.msra.mxu0 0.0
    %495 = vmatpush.xpose.msra.mxu0 0.0
    %496 = vmatpush.xpose.msra.mxu0 0.0
    %497 = vmatpush.xpose.msra.mxu0 0.0
    %498 = vmatpush.xpose.msra.mxu0 0.0
    %499 = vmatpush.xpose.msra.mxu0 0.0
    %500 = vmatpush.xpose.msra.mxu0 0.0
    %501 = vmatpush.xpose.msra.mxu0 0.0
    %502 = vmatpush.xpose.msra.mxu0 0.0
    %503 = vmatpush.xpose.msra.mxu0 0.0
    %504 = vmatpush.xpose.msra.mxu0 0.0
    %505 = vmatpush.xpose.msra.mxu0 0.0
    %506 = vmatpush.xpose.msra.mxu0 0.0
    %507 = vmatpush.xpose.msra.mxu0 0.0
    %508 = vmatpush.xpose.msra.mxu0 %v491
    %509 = vmatmul.f32.gmra.mxu0 %v489
    %v510 = vpop.f32.mrf.mxu0
    %v511 = vadd.f32 0.0, %v510
    %512 = vdwg.mxu0
    %513 = vrot.lane.b32.xlu0 %v94, 104
    %v514 = vpop.permute.xlu0 %513
    %515 = vrot.lane.b32.xlu0 %v94, 72
    %v516 = vpop.permute.xlu0 %515
    %v517 = vsel %vm99, %v514, 0
    %v519 = vsel %vm99, %v516, 0
    %521 = vmatpush.xpose.msra.mxu0 0.0
    %522 = vmatpush.xpose.msra.mxu0 0.0
    %523 = vmatpush.xpose.msra.mxu0 0.0
    %524 = vmatpush.xpose.msra.mxu0 0.0
    %525 = vmatpush.xpose.msra.mxu0 0.0
    %526 = vmatpush.xpose.msra.mxu0 0.0
    %527 = vmatpush.xpose.msra.mxu0 0.0
    %528 = vmatpush.xpose.msra.mxu0 0.0
    %529 = vmatpush.xpose.msra.mxu0 0.0
    %530 = vmatpush.xpose.msra.mxu0 0.0
    %531 = vmatpush.xpose.msra.mxu0 0.0
    %532 = vmatpush.xpose.msra.mxu0 0.0
    %533 = vmatpush.xpose.msra.mxu0 0.0
    %534 = vmatpush.xpose.msra.mxu0 0.0
    %535 = vmatpush.xpose.msra.mxu0 0.0
    %536 = vmatpush.xpose.msra.mxu0 %v519
    %537 = vmatmul.f32.gmra.mxu0 %v517
    %v538 = vpop.f32.mrf.mxu0
    %v539 = vadd.f32 0.0, %v538
    %540 = vdwg.mxu0
    %v541 = vsel %vm99, %v511, -inf
    %542 = vmax.xlane.f32.xlu0 %v541
    %v543 = vpop.xlane.xlu0 %542
    %v544 = vsel %vm99, %v539, -inf
    %545 = vmax.xlane.f32.xlu0 %v544
    %v546 = vpop.xlane.xlu0 %545
    %v547 = vsub.f32 %v511, %v543
    %v548 = vsub.f32 %v539, %v546
    %v549 = vmul.f32 %v547, 1.442695
    %v550 = vpow.pop %v549
    %v551 = vmul.f32 %v548, 1.442695
    %v552 = vpow.pop %v551
    %v553 = vsel %vm99, %v550, 0.0
    %554 = vadd.xlane.f32.xlu0 %v553
    %v555 = vpop.xlane.xlu0 %554
    %v556 = vsel %vm99, %v552, 0.0
    %557 = vadd.xlane.f32.xlu0 %v556
    %v558 = vpop.xlane.xlu0 %557
    %v559 = vrcp.pop %v555
    %v560 = vrcp.pop %v558
    %v561 = vmul.f32 %v550, %v559
    %v562 = vmul.f32 %v552, %v560
    %563 = vrot.lane.b32.xlu0 %v92, 40
    %v564 = vpop.permute.xlu0 %563
    %v567 = vsel %vm99, %v561, 0
    %569 = vmatpush.msra.mxu0 0.0
    %570 = vmatpush.msra.mxu0 0.0
    %571 = vmatpush.msra.mxu0 0.0
    %572 = vmatpush.msra.mxu0 0.0
    %573 = vmatpush.msra.mxu0 0.0
    %574 = vmatpush.msra.mxu0 0.0
    %575 = vmatpush.msra.mxu0 0.0
    %576 = vmatpush.msra.mxu0 0.0
    %577 = vmatpush.msra.mxu0 0.0
    %578 = vmatpush.msra.mxu0 0.0
    %579 = vmatpush.msra.mxu0 0.0
    %580 = vmatpush.msra.mxu0 0.0
    %581 = vmatpush.msra.mxu0 0.0
    %582 = vmatpush.msra.mxu0 0.0
    %583 = vmatpush.msra.mxu0 0.0
    %584 = vmatpush.msra.mxu0 %v564
    %585 = vmatmul.f32.gmra.mxu0 %v567
    %v586 = vpop.f32.mrf.mxu0
    %v587 = vadd.f32 0.0, %v586
    %588 = vdwg.mxu0
    %589 = vrot.lane.b32.xlu0 %v94, 40
    %v590 = vpop.permute.xlu0 %589
    %v593 = vsel %vm99, %v562, 0
    %595 = vmatpush.msra.mxu0 0.0
    %596 = vmatpush.msra.mxu0 0.0
    %597 = vmatpush.msra.mxu0 0.0
    %598 = vmatpush.msra.mxu0 0.0
    %599 = vmatpush.msra.mxu0 0.0
    %600 = vmatpush.msra.mxu0 0.0
    %601 = vmatpush.msra.mxu0 0.0
    %602 = vmatpush.msra.mxu0 0.0
    %603 = vmatpush.msra.mxu0 0.0
    %604 = vmatpush.msra.mxu0 0.0
    %605 = vmatpush.msra.mxu0 0.0
    %606 = vmatpush.msra.mxu0 0.0
    %607 = vmatpush.msra.mxu0 0.0
    %608 = vmatpush.msra.mxu0 0.0
    %609 = vmatpush.msra.mxu0 0.0
    %610 = vmatpush.msra.mxu0 %v590
    %611 = vmatmul.f32.gmra.mxu0 %v593
    %v612 = vpop.f32.mrf.mxu0
    %v613 = vadd.f32 0.0, %v612
    %614 = vdwg.mxu0
    %617 = vrot.lane.b32.xlu0 %v327, 8
    %v618 = vpop.permute.xlu0 %617
    %619 = vrot.lane.b32.xlu0 %v353, 8
    %v620 = vpop.permute.xlu0 %619
    %625 = vrot.lane.b32.xlu0 %v457, 16
    %v626 = vpop.permute.xlu0 %625
    %627 = vrot.lane.b32.xlu0 %v483, 16
    %v628 = vpop.permute.xlu0 %627
    %633 = vrot.lane.b32.xlu0 %v587, 24
    %v634 = vpop.permute.xlu0 %633
    %635 = vrot.lane.b32.xlu0 %v613, 24
    %v636 = vpop.permute.xlu0 %635
    %v639 = vsel %vm99, %v197, %v618
    %v640 = vsel %vm99, %v223, %v620
    %v641 = vsel %vm78, %v639, %v626
    %v642 = vsel %vm78, %v640, %v628
    %vm643 = vcmask 195584
    %v644 = vsel %vm643, %v641, %v634
    %v645 = vsel %vm643, %v642, %v636
    %v646 = vadd.f32 %v92, %v644
    %v647 = vadd.f32 %v94, %v645
    %v648 = vld [vmem:[%s5] sm:$0x1]
    %v649 = vld [vmem:[%s5 + $0x1] sm:$0x1]
    %v650 = vld [vmem:[%s5 + $0x2] sm:$0x1]
    %v651 = vld [vmem:[%s5 + $0x3] sm:$0x1]
    %v652 = vld [vmem:[%s5 + $0x4] sm:$0x1]
    %v653 = vld [vmem:[#allocation4] sm:$0xf]
    %v654 = vld [vmem:[#allocation4 + $0x4] sm:$0xf]
    %v655 = vld [vmem:[#allocation4 + $0x8] sm:$0xf]
    %v656 = vld [vmem:[#allocation4 + $0xc] sm:$0xf]
    %vm657 = vcmask 261120
    %v658 = vsel %vm657, %v646, 0.0
    %659 = vadd.xlane.f32.xlu0 %v658
    %v660 = vpop.xlane.xlu0 %659
    %v661 = vsel %vm657, %v647, 0.0
    %662 = vadd.xlane.f32.xlu0 %v661
    %v663 = vpop.xlane.xlu0 %662
    %v664 = vrcp.pop 32.0
    %v665 = vmul.f32 32.0, %v664
    %v666 = vsub.f32 1.0, %v665
    %v667 = vmul.f32 %v664, %v666
    %v668 = vadd.f32 %v664, %v667
    %vm669 = vweird.f32 %v664
    %v670 = vsel %vm669, %v664, %v668
    %v671 = vmul.f32 %v660, %v670
    %v672 = vmul.f32 %v663, %v670
    %v673 = vsub.f32 %v646, %v671
    %v674 = vsub.f32 %v647, %v672
    %v675 = vmul.f32 %v673, %v673
    %v676 = vmul.f32 %v674, %v674
    %v677 = vsel %vm657, %v675, 0.0
    %678 = vadd.xlane.f32.xlu0 %v677
    %v679 = vpop.xlane.xlu0 %678
    %v680 = vsel %vm657, %v676, 0.0
    %681 = vadd.xlane.f32.xlu0 %v680
    %v682 = vpop.xlane.xlu0 %681
    %v683 = vmul.f32 %v679, %v670
    %v684 = vmul.f32 %v682, %v670
    %v685 = vadd.f32 %v683, 1e-05
    %v686 = vadd.f32 %v684, 1e-05
    %v687 = vrsqrt.pop %v685
    %v688 = vmul.f32 %v687, %v685
    %v689 = vmul.f32 %v688, %v687
    %v690 = vmul.f32 0.5, %v689
    %v691 = vsub.f32 1.5, %v690
    %v692 = vmul.f32 %v687, %v691
    %vm693 = vweird.f32 %v685
    %vm694 = vweird.f32 %v687
    %vm695 = vmor %vm693, %vm694
    %v696 = vsel %vm695, %v687, %v692
    %v697 = vrsqrt.pop %v686
    %v698 = vmul.f32 %v697, %v686
    %v699 = vmul.f32 %v698, %v697
    %v700 = vmul.f32 0.5, %v699
    %v701 = vsub.f32 1.5, %v700
    %v702 = vmul.f32 %v697, %v701
    %vm703 = vweird.f32 %v686
    %vm704 = vweird.f32 %v697
    %vm705 = vmor %vm703, %vm704
    %v706 = vsel %vm705, %v697, %v702
    %v707 = vmul.f32 %v673, %v696
    %v708 = vmul.f32 %v674, %v706
    %v709 = vperm.slane %v649, 0
    %v710 = vmul.f32 %v707, %v709
    %v711 = vmul.f32 %v708, %v709
    %v712 = vperm.slane %v650, 0
    %v713 = vadd.f32 %v710, %v712
    %v714 = vadd.f32 %v711, %v712
    %v715 = vpack.c.bf16 %v714, %v713
    %v716 = vperm.slane %v648, 0
    %v721 = vunpack.c.l.b16 %v653
    %v722 = vunpack.c.l.b16 %v654
    %v723 = vunpack.c.l.b16 %v655
    %v724 = vunpack.c.l.b16 %v656
    %v725 = vpack.c.b16 %v722, %v721
    %v726 = vpack.c.b16 %v724, %v723
    %v730 = vsel %vm657, %v715, 0
    %732 = vmatpush.bf16.msra.mxu0 0
    %733 = vmatpush.bf16.msra.mxu0 0
    %734 = vmatpush.bf16.msra.mxu0 0
    %735 = vmatpush.bf16.msra.mxu0 0
    %736 = vmatpush.bf16.msra.mxu0 0
    %737 = vmatpush.bf16.msra.mxu0 0
    %738 = vmatpush.bf16.msra.mxu0 %v726
    %739 = vmatpush.bf16.msra.mxu0 %v725
    %740 = vmatmul.bf16.gmra.mxu0 %v730
    %v741 = vpop.f32.mrf.mxu0
    %v742 = vadd.f32 %v716, %v741
    %v743 = vpop.f32.mrf.mxu0
    %v744 = vadd.f32 %v716, %v743
    %745 = vdwg.mxu0
    %v746 = vmax.f32 %v742, 0.0
    %v747 = vmax.f32 %v744, 0.0
    %v748 = vadd.f32 %v713, %v746
    %v749 = vadd.f32 %v714, %v747
    %v750 = vsel %vm657, %v748, 0.0
    %751 = vadd.xlane.f32.xlu0 %v750
    %v752 = vpop.xlane.xlu0 %751
    %v753 = vsel %vm657, %v749, 0.0
    %754 = vadd.xlane.f32.xlu0 %v753
    %v755 = vpop.xlane.xlu0 %754
    %v756 = vmul.f32 %v752, %v670
    %v757 = vmul.f32 %v755, %v670
    %v758 = vsub.f32 %v748, %v756
    %v759 = vsub.f32 %v749, %v757
    %v760 = vmul.f32 %v758, %v758
    %v761 = vmul.f32 %v759, %v759
    %v762 = vsel %vm657, %v760, 0.0
    %763 = vadd.xlane.f32.xlu0 %v762
    %v764 = vpop.xlane.xlu0 %763
    %v765 = vsel %vm657, %v761, 0.0
    %766 = vadd.xlane.f32.xlu0 %v765
    %v767 = vpop.xlane.xlu0 %766
    %v768 = vmul.f32 %v764, %v670
    %v769 = vmul.f32 %v767, %v670
    %v770 = vadd.f32 %v768, 1e-05
    %v771 = vadd.f32 %v769, 1e-05
    %v772 = vrsqrt.pop %v770
    %v773 = vmul.f32 %v772, %v770
    %v774 = vmul.f32 %v773, %v772
    %v775 = vmul.f32 0.5, %v774
    %v776 = vsub.f32 1.5, %v775
    %v777 = vmul.f32 %v772, %v776
    %vm778 = vweird.f32 %v770
    %vm779 = vweird.f32 %v772
    %vm780 = vmor %vm778, %vm779
    %v781 = vsel %vm780, %v772, %v777
    %v782 = vrsqrt.pop %v771
    %v783 = vmul.f32 %v782, %v771
    %v784 = vmul.f32 %v783, %v782
    %v785 = vmul.f32 0.5, %v784
    %v786 = vsub.f32 1.5, %v785
    %v787 = vmul.f32 %v782, %v786
    %vm788 = vweird.f32 %v771
    %vm789 = vweird.f32 %v782
    %vm790 = vmor %vm788, %vm789
    %v791 = vsel %vm790, %v782, %v787
    %v792 = vmul.f32 %v758, %v781
    %v793 = vmul.f32 %v759, %v791
    %v794 = vperm.slane %v651, 0
    %v795 = vmul.f32 %v792, %v794
    %v796 = vmul.f32 %v793, %v794
    %v797 = vperm.slane %v652, 0
    %v798 = vadd.f32 %v795, %v797
    %v799 = vadd.f32 %v796, %v797
    %s800 = scalar_lea.vmem [#allocation2], 16
    %v801 = vld [vmem:[%s800] sm:$0xf]
    %v802 = vld [vmem:[%s800 + $0x4] sm:$0xf]
    %v803 = vld [vmem:[%s800 + $0x8] sm:$0xf]
    %v804 = vld [vmem:[%s800 + $0xc] sm:$0xf]
    %v805 = vpack.c.bf16 %v799, %v798
    %s806 = scalar_lea.vmem %s3, 1
    %v807 = vld [vmem:[%s806] sm:$0x1]
    %v809 = vperm.slane %v807, 0
    %v815 = vunpack.c.l.b16 %v801
    %v816 = vunpack.c.l.b16 %v802
    %v817 = vunpack.c.l.b16 %v803
    %v818 = vunpack.c.l.b16 %v804
    %v819 = vpack.c.b16 %v816, %v815
    %v820 = vpack.c.b16 %v818, %v817
    %v824 = vsel %vm657, %v805, 0
    %826 = vmatpush.bf16.msra.mxu0 0
    %827 = vmatpush.bf16.msra.mxu0 0
    %828 = vmatpush.bf16.msra.mxu0 0
    %829 = vmatpush.bf16.msra.mxu0 0
    %830 = vmatpush.bf16.msra.mxu0 0
    %831 = vmatpush.bf16.msra.mxu0 0
    %832 = vmatpush.bf16.msra.mxu0 %v820
    %833 = vmatpush.bf16.msra.mxu0 %v819
    %834 = vmatmul.bf16.gmra.mxu0 %v824
    %v835 = vpop.f32.mrf.mxu0
    %v836 = vadd.f32 %v809, %v835
    %v837 = vpop.f32.mrf.mxu0
    %v838 = vadd.f32 %v809, %v837
    %839 = vdwg.mxu0
    %841 = vrot.lane.b32.xlu0 %v836, 96
    %v842 = vpop.permute.xlu0 %841
    %v843 = vsel %vm99, %v836, 0
    %v845 = vsel %vm99, %v842, 0
    %847 = vmatpush.xpose.msra.mxu0 0.0
    %848 = vmatpush.xpose.msra.mxu0 0.0
    %849 = vmatpush.xpose.msra.mxu0 0.0
    %850 = vmatpush.xpose.msra.mxu0 0.0
    %851 = vmatpush.xpose.msra.mxu0 0.0
    %852 = vmatpush.xpose.msra.mxu0 0.0
    %853 = vmatpush.xpose.msra.mxu0 0.0
    %854 = vmatpush.xpose.msra.mxu0 0.0
    %855 = vmatpush.xpose.msra.mxu0 0.0
    %856 = vmatpush.xpose.msra.mxu0 0.0
    %857 = vmatpush.xpose.msra.mxu0 0.0
    %858 = vmatpush.xpose.msra.mxu0 0.0
    %859 = vmatpush.xpose.msra.mxu0 0.0
    %860 = vmatpush.xpose.msra.mxu0 0.0
    %861 = vmatpush.xpose.msra.mxu0 0.0
    %862 = vmatpush.xpose.msra.mxu0 %v845
    %863 = vmatmul.f32.gmra.mxu0 %v843
    %v864 = vpop.f32.mrf.mxu0
    %v865 = vadd.f32 0.0, %v864
    %866 = vdwg.mxu0
    %868 = vrot.lane.b32.xlu0 %v838, 96
    %v869 = vpop.permute.xlu0 %868
    %v870 = vsel %vm99, %v838, 0
    %v872 = vsel %vm99, %v869, 0
    %874 = vmatpush.xpose.msra.mxu0 0.0
    %875 = vmatpush.xpose.msra.mxu0 0.0
    %876 = vmatpush.xpose.msra.mxu0 0.0
    %877 = vmatpush.xpose.msra.mxu0 0.0
    %878 = vmatpush.xpose.msra.mxu0 0.0
    %879 = vmatpush.xpose.msra.mxu0 0.0
    %880 = vmatpush.xpose.msra.mxu0 0.0
    %881 = vmatpush.xpose.msra.mxu0 0.0
    %882 = vmatpush.xpose.msra.mxu0 0.0
    %883 = vmatpush.xpose.msra.mxu0 0.0
    %884 = vmatpush.xpose.msra.mxu0 0.0
    %885 = vmatpush.xpose.msra.mxu0 0.0
    %886 = vmatpush.xpose.msra.mxu0 0.0
    %887 = vmatpush.xpose.msra.mxu0 0.0
    %888 = vmatpush.xpose.msra.mxu0 0.0
    %889 = vmatpush.xpose.msra.mxu0 %v872
    %890 = vmatmul.f32.gmra.mxu0 %v870
    %v891 = vpop.f32.mrf.mxu0
    %v892 = vadd.f32 0.0, %v891
    %893 = vdwg.mxu0
    %v894 = vsel %vm99, %v865, -inf
    %895 = vmax.xlane.f32.xlu0 %v894
    %v896 = vpop.xlane.xlu0 %895
    %v897 = vsel %vm99, %v892, -inf
    %898 = vmax.xlane.f32.xlu0 %v897
    %v899 = vpop.xlane.xlu0 %898
    %v900 = vsub.f32 %v865, %v896
    %v901 = vsub.f32 %v892, %v899
    %v902 = vmul.f32 %v900, 1.442695
    %v903 = vpow.pop %v902
    %v904 = vmul.f32 %v901, 1.442695
    %v905 = vpow.pop %v904
    %v906 = vsel %vm99, %v903, 0.0
    %907 = vadd.xlane.f32.xlu0 %v906
    %v908 = vpop.xlane.xlu0 %907
    %v909 = vsel %vm99, %v905, 0.0
    %910 = vadd.xlane.f32.xlu0 %v909
    %v911 = vpop.xlane.xlu0 %910
    %v912 = vrcp.pop %v908
    %v913 = vrcp.pop %v911
    %v914 = vmul.f32 %v903, %v912
    %v915 = vmul.f32 %v905, %v913
    %916 = vrot.lane.b32.xlu0 %v836, 64
    %v917 = vpop.permute.xlu0 %916
    %v920 = vsel %vm99, %v914, 0
    %922 = vmatpush.msra.mxu0 0.0
    %923 = vmatpush.msra.mxu0 0.0
    %924 = vmatpush.msra.mxu0 0.0
    %925 = vmatpush.msra.mxu0 0.0
    %926 = vmatpush.msra.mxu0 0.0
    %927 = vmatpush.msra.mxu0 0.0
    %928 = vmatpush.msra.mxu0 0.0
    %929 = vmatpush.msra.mxu0 0.0
    %930 = vmatpush.msra.mxu0 0.0
    %931 = vmatpush.msra.mxu0 0.0
    %932 = vmatpush.msra.mxu0 0.0
    %933 = vmatpush.msra.mxu0 0.0
    %934 = vmatpush.msra.mxu0 0.0
    %935 = vmatpush.msra.mxu0 0.0
    %936 = vmatpush.msra.mxu0 0.0
    %937 = vmatpush.msra.mxu0 %v917
    %938 = vmatmul.f32.gmra.mxu0 %v920
    %v939 = vpop.f32.mrf.mxu0
    %v940 = vadd.f32 0.0, %v939
    %941 = vdwg.mxu0
    %942 = vrot.lane.b32.xlu0 %v838, 64
    %v943 = vpop.permute.xlu0 %942
    %v946 = vsel %vm99, %v915, 0
    %948 = vmatpush.msra.mxu0 0.0
    %949 = vmatpush.msra.mxu0 0.0
    %950 = vmatpush.msra.mxu0 0.0
    %951 = vmatpush.msra.mxu0 0.0
    %952 = vmatpush.msra.mxu0 0.0
    %953 = vmatpush.msra.mxu0 0.0
    %954 = vmatpush.msra.mxu0 0.0
    %955 = vmatpush.msra.mxu0 0.0
    %956 = vmatpush.msra.mxu0 0.0
    %957 = vmatpush.msra.mxu0 0.0
    %958 = vmatpush.msra.mxu0 0.0
    %959 = vmatpush.msra.mxu0 0.0
    %960 = vmatpush.msra.mxu0 0.0
    %961 = vmatpush.msra.mxu0 0.0
    %962 = vmatpush.msra.mxu0 0.0
    %963 = vmatpush.msra.mxu0 %v943
    %964 = vmatmul.f32.gmra.mxu0 %v946
    %v965 = vpop.f32.mrf.mxu0
    %v966 = vadd.f32 0.0, %v965
    %967 = vdwg.mxu0
    %968 = vrot.lane.b32.xlu0 %v836, 120
    %v969 = vpop.permute.xlu0 %968
    %970 = vrot.lane.b32.xlu0 %v836, 88
    %v971 = vpop.permute.xlu0 %970
    %v972 = vsel %vm99, %v969, 0
    %v974 = vsel %vm99, %v971, 0
    %976 = vmatpush.xpose.msra.mxu0 0.0
    %977 = vmatpush.xpose.msra.mxu0 0.0
    %978 = vmatpush.xpose.msra.mxu0 0.0
    %979 = vmatpush.xpose.msra.mxu0 0.0
    %980 = vmatpush.xpose.msra.mxu0 0.0
    %981 = vmatpush.xpose.msra.mxu0 0.0
    %982 = vmatpush.xpose.msra.mxu0 0.0
    %983 = vmatpush.xpose.msra.mxu0 0.0
    %984 = vmatpush.xpose.msra.mxu0 0.0
    %985 = vmatpush.xpose.msra.mxu0 0.0
    %986 = vmatpush.xpose.msra.mxu0 0.0
    %987 = vmatpush.xpose.msra.mxu0 0.0
    %988 = vmatpush.xpose.msra.mxu0 0.0
    %989 = vmatpush.xpose.msra.mxu0 0.0
    %990 = vmatpush.xpose.msra.mxu0 0.0
    %991 = vmatpush.xpose.msra.mxu0 %v974
    %992 = vmatmul.f32.gmra.mxu0 %v972
    %v993 = vpop.f32.mrf.mxu0
    %v994 = vadd.f32 0.0, %v993
    %995 = vdwg.mxu0
    %996 = vrot.lane.b32.xlu0 %v838, 120
    %v997 = vpop.permute.xlu0 %996
    %998 = vrot.lane.b32.xlu0 %v838, 88
    %v999 = vpop.permute.xlu0 %998
    %v1000 = vsel %vm99, %v997, 0
    %v1002 = vsel %vm99, %v999, 0
    %1004 = vmatpush.xpose.msra.mxu0 0.0
    %1005 = vmatpush.xpose.msra.mxu0 0.0
    %1006 = vmatpush.xpose.msra.mxu0 0.0
    %1007 = vmatpush.xpose.msra.mxu0 0.0
    %1008 = vmatpush.xpose.msra.mxu0 0.0
    %1009 = vmatpush.xpose.msra.mxu0 0.0
    %1010 = vmatpush.xpose.msra.mxu0 0.0
    %1011 = vmatpush.xpose.msra.mxu0 0.0
    %1012 = vmatpush.xpose.msra.mxu0 0.0
    %1013 = vmatpush.xpose.msra.mxu0 0.0
    %1014 = vmatpush.xpose.msra.mxu0 0.0
    %1015 = vmatpush.xpose.msra.mxu0 0.0
    %1016 = vmatpush.xpose.msra.mxu0 0.0
    %1017 = vmatpush.xpose.msra.mxu0 0.0
    %1018 = vmatpush.xpose.msra.mxu0 0.0
    %1019 = vmatpush.xpose.msra.mxu0 %v1002
    %1020 = vmatmul.f32.gmra.mxu0 %v1000
    %v1021 = vpop.f32.mrf.mxu0
    %v1022 = vadd.f32 0.0, %v1021
    %1023 = vdwg.mxu0
    %v1024 = vsel %vm99, %v994, -inf
    %1025 = vmax.xlane.f32.xlu0 %v1024
    %v1026 = vpop.xlane.xlu0 %1025
    %v1027 = vsel %vm99, %v1022, -inf
    %1028 = vmax.xlane.f32.xlu0 %v1027
    %v1029 = vpop.xlane.xlu0 %1028
    %v1030 = vsub.f32 %v994, %v1026
    %v1031 = vsub.f32 %v1022, %v1029
    %v1032 = vmul.f32 %v1030, 1.442695
    %v1033 = vpow.pop %v1032
    %v1034 = vmul.f32 %v1031, 1.442695
    %v1035 = vpow.pop %v1034
    %v1036 = vsel %vm99, %v1033, 0.0
    %1037 = vadd.xlane.f32.xlu0 %v1036
    %v1038 = vpop.xlane.xlu0 %1037
    %v1039 = vsel %vm99, %v1035, 0.0
    %1040 = vadd.xlane.f32.xlu0 %v1039
    %v1041 = vpop.xlane.xlu0 %1040
    %v1042 = vrcp.pop %v1038
    %v1043 = vrcp.pop %v1041
    %v1044 = vmul.f32 %v1033, %v1042
    %v1045 = vmul.f32 %v1035, %v1043
    %1046 = vrot.lane.b32.xlu0 %v836, 56
    %v1047 = vpop.permute.xlu0 %1046
    %v1050 = vsel %vm99, %v1044, 0
    %1052 = vmatpush.msra.mxu0 0.0
    %1053 = vmatpush.msra.mxu0 0.0
    %1054 = vmatpush.msra.mxu0 0.0
    %1055 = vmatpush.msra.mxu0 0.0
    %1056 = vmatpush.msra.mxu0 0.0
    %1057 = vmatpush.msra.mxu0 0.0
    %1058 = vmatpush.msra.mxu0 0.0
    %1059 = vmatpush.msra.mxu0 0.0
    %1060 = vmatpush.msra.mxu0 0.0
    %1061 = vmatpush.msra.mxu0 0.0
    %1062 = vmatpush.msra.mxu0 0.0
    %1063 = vmatpush.msra.mxu0 0.0
    %1064 = vmatpush.msra.mxu0 0.0
    %1065 = vmatpush.msra.mxu0 0.0
    %1066 = vmatpush.msra.mxu0 0.0
    %1067 = vmatpush.msra.mxu0 %v1047
    %1068 = vmatmul.f32.gmra.mxu0 %v1050
    %v1069 = vpop.f32.mrf.mxu0
    %v1070 = vadd.f32 0.0, %v1069
    %1071 = vdwg.mxu0
    %1072 = vrot.lane.b32.xlu0 %v838, 56
    %v1073 = vpop.permute.xlu0 %1072
    %v1076 = vsel %vm99, %v1045, 0
    %1078 = vmatpush.msra.mxu0 0.0
    %1079 = vmatpush.msra.mxu0 0.0
    %1080 = vmatpush.msra.mxu0 0.0
    %1081 = vmatpush.msra.mxu0 0.0
    %1082 = vmatpush.msra.mxu0 0.0
    %1083 = vmatpush.msra.mxu0 0.0
    %1084 = vmatpush.msra.mxu0 0.0
    %1085 = vmatpush.msra.mxu0 0.0
    %1086 = vmatpush.msra.mxu0 0.0
    %1087 = vmatpush.msra.mxu0 0.0
    %1088 = vmatpush.msra.mxu0 0.0
    %1089 = vmatpush.msra.mxu0 0.0
    %1090 = vmatpush.msra.mxu0 0.0
    %1091 = vmatpush.msra.mxu0 0.0
    %1092 = vmatpush.msra.mxu0 0.0
    %1093 = vmatpush.msra.mxu0 %v1073
    %1094 = vmatmul.f32.gmra.mxu0 %v1076
    %v1095 = vpop.f32.mrf.mxu0
    %v1096 = vadd.f32 0.0, %v1095
    %1097 = vdwg.mxu0
    %1098 = vrot.lane.b32.xlu0 %v836, 112
    %v1099 = vpop.permute.xlu0 %1098
    %1100 = vrot.lane.b32.xlu0 %v836, 80
    %v1101 = vpop.permute.xlu0 %1100
    %v1102 = vsel %vm99, %v1099, 0
    %v1104 = vsel %vm99, %v1101, 0
    %1106 = vmatpush.xpose.msra.mxu0 0.0
    %1107 = vmatpush.xpose.msra.mxu0 0.0
    %1108 = vmatpush.xpose.msra.mxu0 0.0
    %1109 = vmatpush.xpose.msra.mxu0 0.0
    %1110 = vmatpush.xpose.msra.mxu0 0.0
    %1111 = vmatpush.xpose.msra.mxu0 0.0
    %1112 = vmatpush.xpose.msra.mxu0 0.0
    %1113 = vmatpush.xpose.msra.mxu0 0.0
    %1114 = vmatpush.xpose.msra.mxu0 0.0
    %1115 = vmatpush.xpose.msra.mxu0 0.0
    %1116 = vmatpush.xpose.msra.mxu0 0.0
    %1117 = vmatpush.xpose.msra.mxu0 0.0
    %1118 = vmatpush.xpose.msra.mxu0 0.0
    %1119 = vmatpush.xpose.msra.mxu0 0.0
    %1120 = vmatpush.xpose.msra.mxu0 0.0
    %1121 = vmatpush.xpose.msra.mxu0 %v1104
    %1122 = vmatmul.f32.gmra.mxu0 %v1102
    %v1123 = vpop.f32.mrf.mxu0
    %v1124 = vadd.f32 0.0, %v1123
    %1125 = vdwg.mxu0
    %1126 = vrot.lane.b32.xlu0 %v838, 112
    %v1127 = vpop.permute.xlu0 %1126
    %1128 = vrot.lane.b32.xlu0 %v838, 80
    %v1129 = vpop.permute.xlu0 %1128
    %v1130 = vsel %vm99, %v1127, 0
    %v1132 = vsel %vm99, %v1129, 0
    %1134 = vmatpush.xpose.msra.mxu0 0.0
    %1135 = vmatpush.xpose.msra.mxu0 0.0
    %1136 = vmatpush.xpose.msra.mxu0 0.0
    %1137 = vmatpush.xpose.msra.mxu0 0.0
    %1138 = vmatpush.xpose.msra.mxu0 0.0
    %1139 = vmatpush.xpose.msra.mxu0 0.0
    %1140 = vmatpush.xpose.msra.mxu0 0.0
    %1141 = vmatpush.xpose.msra.mxu0 0.0
    %1142 = vmatpush.xpose.msra.mxu0 0.0
    %1143 = vmatpush.xpose.msra.mxu0 0.0
    %1144 = vmatpush.xpose.msra.mxu0 0.0
    %1145 = vmatpush.xpose.msra.mxu0 0.0
    %1146 = vmatpush.xpose.msra.mxu0 0.0
    %1147 = vmatpush.xpose.msra.mxu0 0.0
    %1148 = vmatpush.xpose.msra.mxu0 0.0
    %1149 = vmatpush.xpose.msra.mxu0 %v1132
    %1150 = vmatmul.f32.gmra.mxu0 %v1130
    %v1151 = vpop.f32.mrf.mxu0
    %v1152 = vadd.f32 0.0, %v1151
    %1153 = vdwg.mxu0
    %v1154 = vsel %vm99, %v1124, -inf
    %1155 = vmax.xlane.f32.xlu0 %v1154
    %v1156 = vpop.xlane.xlu0 %1155
    %v1157 = vsel %vm99, %v1152, -inf
    %1158 = vmax.xlane.f32.xlu0 %v1157
    %v1159 = vpop.xlane.xlu0 %1158
    %v1160 = vsub.f32 %v1124, %v1156
    %v1161 = vsub.f32 %v1152, %v1159
    %v1162 = vmul.f32 %v1160, 1.442695
    %v1163 = vpow.pop %v1162
    %v1164 = vmul.f32 %v1161, 1.442695
    %v1165 = vpow.pop %v1164
    %v1166 = vsel %vm99, %v1163, 0.0
    %1167 = vadd.xlane.f32.xlu0 %v1166
    %v1168 = vpop.xlane.xlu0 %1167
    %v1169 = vsel %vm99, %v1165, 0.0
    %1170 = vadd.xlane.f32.xlu0 %v1169
    %v1171 = vpop.xlane.xlu0 %1170
    %v1172 = vrcp.pop %v1168
    %v1173 = vrcp.pop %v1171
    %v1174 = vmul.f32 %v1163, %v1172
    %v1175 = vmul.f32 %v1165, %v1173
    %1176 = vrot.lane.b32.xlu0 %v836, 48
    %v1177 = vpop.permute.xlu0 %1176
    %v1180 = vsel %vm99, %v1174, 0
    %1182 = vmatpush.msra.mxu0 0.0
    %1183 = vmatpush.msra.mxu0 0.0
    %1184 = vmatpush.msra.mxu0 0.0
    %1185 = vmatpush.msra.mxu0 0.0
    %1186 = vmatpush.msra.mxu0 0.0
    %1187 = vmatpush.msra.mxu0 0.0
    %1188 = vmatpush.msra.mxu0 0.0
    %1189 = vmatpush.msra.mxu0 0.0
    %1190 = vmatpush.msra.mxu0 0.0
    %1191 = vmatpush.msra.mxu0 0.0
    %1192 = vmatpush.msra.mxu0 0.0
    %1193 = vmatpush.msra.mxu0 0.0
    %1194 = vmatpush.msra.mxu0 0.0
    %1195 = vmatpush.msra.mxu0 0.0
    %1196 = vmatpush.msra.mxu0 0.0
    %1197 = vmatpush.msra.mxu0 %v1177
    %1198 = vmatmul.f32.gmra.mxu0 %v1180
    %v1199 = vpop.f32.mrf.mxu0
    %v1200 = vadd.f32 0.0, %v1199
    %1201 = vdwg.mxu0
    %1202 = vrot.lane.b32.xlu0 %v838, 48
    %v1203 = vpop.permute.xlu0 %1202
    %v1206 = vsel %vm99, %v1175, 0
    %1208 = vmatpush.msra.mxu0 0.0
    %1209 = vmatpush.msra.mxu0 0.0
    %1210 = vmatpush.msra.mxu0 0.0
    %1211 = vmatpush.msra.mxu0 0.0
    %1212 = vmatpush.msra.mxu0 0.0
    %1213 = vmatpush.msra.mxu0 0.0
    %1214 = vmatpush.msra.mxu0 0.0
    %1215 = vmatpush.msra.mxu0 0.0
    %1216 = vmatpush.msra.mxu0 0.0
    %1217 = vmatpush.msra.mxu0 0.0
    %1218 = vmatpush.msra.mxu0 0.0
    %1219 = vmatpush.msra.mxu0 0.0
    %1220 = vmatpush.msra.mxu0 0.0
    %1221 = vmatpush.msra.mxu0 0.0
    %1222 = vmatpush.msra.mxu0 0.0
    %1223 = vmatpush.msra.mxu0 %v1203
    %1224 = vmatmul.f32.gmra.mxu0 %v1206
    %v1225 = vpop.f32.mrf.mxu0
    %v1226 = vadd.f32 0.0, %v1225
    %1227 = vdwg.mxu0
    %1228 = vrot.lane.b32.xlu0 %v836, 104
    %v1229 = vpop.permute.xlu0 %1228
    %1230 = vrot.lane.b32.xlu0 %v836, 72
    %v1231 = vpop.permute.xlu0 %1230
    %v1232 = vsel %vm99, %v1229, 0
    %v1234 = vsel %vm99, %v1231, 0
    %1236 = vmatpush.xpose.msra.mxu0 0.0
    %1237 = vmatpush.xpose.msra.mxu0 0.0
    %1238 = vmatpush.xpose.msra.mxu0 0.0
    %1239 = vmatpush.xpose.msra.mxu0 0.0
    %1240 = vmatpush.xpose.msra.mxu0 0.0
    %1241 = vmatpush.xpose.msra.mxu0 0.0
    %1242 = vmatpush.xpose.msra.mxu0 0.0
    %1243 = vmatpush.xpose.msra.mxu0 0.0
    %1244 = vmatpush.xpose.msra.mxu0 0.0
    %1245 = vmatpush.xpose.msra.mxu0 0.0
    %1246 = vmatpush.xpose.msra.mxu0 0.0
    %1247 = vmatpush.xpose.msra.mxu0 0.0
    %1248 = vmatpush.xpose.msra.mxu0 0.0
    %1249 = vmatpush.xpose.msra.mxu0 0.0
    %1250 = vmatpush.xpose.msra.mxu0 0.0
    %1251 = vmatpush.xpose.msra.mxu0 %v1234
    %1252 = vmatmul.f32.gmra.mxu0 %v1232
    %v1253 = vpop.f32.mrf.mxu0
    %v1254 = vadd.f32 0.0, %v1253
    %1255 = vdwg.mxu0
    %1256 = vrot.lane.b32.xlu0 %v838, 104
    %v1257 = vpop.permute.xlu0 %1256
    %1258 = vrot.lane.b32.xlu0 %v838, 72
    %v1259 = vpop.permute.xlu0 %1258
    %v1260 = vsel %vm99, %v1257, 0
    %v1262 = vsel %vm99, %v1259, 0
    %1264 = vmatpush.xpose.msra.mxu0 0.0
    %1265 = vmatpush.xpose.msra.mxu0 0.0
    %1266 = vmatpush.xpose.msra.mxu0 0.0
    %1267 = vmatpush.xpose.msra.mxu0 0.0
    %1268 = vmatpush.xpose.msra.mxu0 0.0
    %1269 = vmatpush.xpose.msra.mxu0 0.0
    %1270 = vmatpush.xpose.msra.mxu0 0.0
    %1271 = vmatpush.xpose.msra.mxu0 0.0
    %1272 = vmatpush.xpose.msra.mxu0 0.0
    %1273 = vmatpush.xpose.msra.mxu0 0.0
    %1274 = vmatpush.xpose.msra.mxu0 0.0
    %1275 = vmatpush.xpose.msra.mxu0 0.0
    %1276 = vmatpush.xpose.msra.mxu0 0.0
    %1277 = vmatpush.xpose.msra.mxu0 0.0
    %1278 = vmatpush.xpose.msra.mxu0 0.0
    %1279 = vmatpush.xpose.msra.mxu0 %v1262
    %1280 = vmatmul.f32.gmra.mxu0 %v1260
    %v1281 = vpop.f32.mrf.mxu0
    %v1282 = vadd.f32 0.0, %v1281
    %1283 = vdwg.mxu0
    %v1284 = vsel %vm99, %v1254, -inf
    %1285 = vmax.xlane.f32.xlu0 %v1284
    %v1286 = vpop.xlane.xlu0 %1285
    %v1287 = vsel %vm99, %v1282, -inf
    %1288 = vmax.xlane.f32.xlu0 %v1287
    %v1289 = vpop.xlane.xlu0 %1288
    %v1290 = vsub.f32 %v1254, %v1286
    %v1291 = vsub.f32 %v1282, %v1289
    %v1292 = vmul.f32 %v1290, 1.442695
    %v1293 = vpow.pop %v1292
    %v1294 = vmul.f32 %v1291, 1.442695
    %v1295 = vpow.pop %v1294
    %v1296 = vsel %vm99, %v1293, 0.0
    %1297 = vadd.xlane.f32.xlu0 %v1296
    %v1298 = vpop.xlane.xlu0 %1297
    %v1299 = vsel %vm99, %v1295, 0.0
    %1300 = vadd.xlane.f32.xlu0 %v1299
    %v1301 = vpop.xlane.xlu0 %1300
    %v1302 = vrcp.pop %v1298
    %v1303 = vrcp.pop %v1301
    %v1304 = vmul.f32 %v1293, %v1302
    %v1305 = vmul.f32 %v1295, %v1303
    %1306 = vrot.lane.b32.xlu0 %v836, 40
    %v1307 = vpop.permute.xlu0 %1306
    %v1310 = vsel %vm99, %v1304, 0
    %1312 = vmatpush.msra.mxu0 0.0
    %1313 = vmatpush.msra.mxu0 0.0
    %1314 = vmatpush.msra.mxu0 0.0
    %1315 = vmatpush.msra.mxu0 0.0
    %1316 = vmatpush.msra.mxu0 0.0
    %1317 = vmatpush.msra.mxu0 0.0
    %1318 = vmatpush.msra.mxu0 0.0
    %1319 = vmatpush.msra.mxu0 0.0
    %1320 = vmatpush.msra.mxu0 0.0
    %1321 = vmatpush.msra.mxu0 0.0
    %1322 = vmatpush.msra.mxu0 0.0
    %1323 = vmatpush.msra.mxu0 0.0
    %1324 = vmatpush.msra.mxu0 0.0
    %1325 = vmatpush.msra.mxu0 0.0
    %1326 = vmatpush.msra.mxu0 0.0
    %1327 = vmatpush.msra.mxu0 %v1307
    %1328 = vmatmul.f32.gmra.mxu0 %v1310
    %v1329 = vpop.f32.mrf.mxu0
    %v1330 = vadd.f32 0.0, %v1329
    %1331 = vdwg.mxu0
    %1332 = vrot.lane.b32.xlu0 %v838, 40
    %v1333 = vpop.permute.xlu0 %1332
    %v1336 = vsel %vm99, %v1305, 0
    %1338 = vmatpush.msra.mxu0 0.0
    %1339 = vmatpush.msra.mxu0 0.0
    %1340 = vmatpush.msra.mxu0 0.0
    %1341 = vmatpush.msra.mxu0 0.0
    %1342 = vmatpush.msra.mxu0 0.0
    %1343 = vmatpush.msra.mxu0 0.0
    %1344 = vmatpush.msra.mxu0 0.0
    %1345 = vmatpush.msra.mxu0 0.0
    %1346 = vmatpush.msra.mxu0 0.0
    %1347 = vmatpush.msra.mxu0 0.0
    %1348 = vmatpush.msra.mxu0 0.0
    %1349 = vmatpush.msra.mxu0 0.0
    %1350 = vmatpush.msra.mxu0 0.0
    %1351 = vmatpush.msra.mxu0 0.0
    %1352 = vmatpush.msra.mxu0 0.0
    %1353 = vmatpush.msra.mxu0 %v1333
    %1354 = vmatmul.f32.gmra.mxu0 %v1336
    %v1355 = vpop.f32.mrf.mxu0
    %v1356 = vadd.f32 0.0, %v1355
    %1357 = vdwg.mxu0
    %1360 = vrot.lane.b32.xlu0 %v1070, 8
    %v1361 = vpop.permute.xlu0 %1360
    %1362 = vrot.lane.b32.xlu0 %v1096, 8
    %v1363 = vpop.permute.xlu0 %1362
    %1368 = vrot.lane.b32.xlu0 %v1200, 16
    %v1369 = vpop.permute.xlu0 %1368
    %1370 = vrot.lane.b32.xlu0 %v1226, 16
    %v1371 = vpop.permute.xlu0 %1370
    %1376 = vrot.lane.b32.xlu0 %v1330, 24
    %v1377 = vpop.permute.xlu0 %1376
    %1378 = vrot.lane.b32.xlu0 %v1356, 24
    %v1379 = vpop.permute.xlu0 %1378
    %v1382 = vsel %vm99, %v940, %v1361
    %v1383 = vsel %vm99, %v966, %v1363
    %v1384 = vsel %vm78, %v1382, %v1369
    %v1385 = vsel %vm78, %v1383, %v1371
    %v1386 = vsel %vm643, %v1384, %v1377
    %v1387 = vsel %vm643, %v1385, %v1379
    %v1388 = vadd.f32 %v836, %v1386
    %v1389 = vadd.f32 %v838, %v1387
    %s1390 = scalar_lea.vmem %s5, 8
    %v1391 = vld [vmem:[%s1390] sm:$0x1]
    %v1392 = vld [vmem:[%s1390 + $0x1] sm:$0x1]
    %v1393 = vld [vmem:[%s1390 + $0x2] sm:$0x1]
    %v1394 = vld [vmem:[%s1390 + $0x3] sm:$0x1]
    %v1395 = vld [vmem:[%s1390 + $0x4] sm:$0x1]
    %s1396 = scalar_lea.vmem [#allocation4], 16
    %v1397 = vld [vmem:[%s1396] sm:$0xf]
    %v1398 = vld [vmem:[%s1396 + $0x4] sm:$0xf]
    %v1399 = vld [vmem:[%s1396 + $0x8] sm:$0xf]
    %v1400 = vld [vmem:[%s1396 + $0xc] sm:$0xf]
    %v1401 = vsel %vm657, %v1388, 0.0
    %1402 = vadd.xlane.f32.xlu0 %v1401
    %v1403 = vpop.xlane.xlu0 %1402
    %v1404 = vsel %vm657, %v1389, 0.0
    %1405 = vadd.xlane.f32.xlu0 %v1404
    %v1406 = vpop.xlane.xlu0 %1405
    %v1407 = vmul.f32 %v1403, %v670
    %v1408 = vmul.f32 %v1406, %v670
    %v1409 = vsub.f32 %v1388, %v1407
    %v1410 = vsub.f32 %v1389, %v1408
    %v1411 = vmul.f32 %v1409, %v1409
    %v1412 = vmul.f32 %v1410, %v1410
    %v1413 = vsel %vm657, %v1411, 0.0
    %1414 = vadd.xlane.f32.xlu0 %v1413
    %v1415 = vpop.xlane.xlu0 %1414
    %v1416 = vsel %vm657, %v1412, 0.0
    %1417 = vadd.xlane.f32.xlu0 %v1416
    %v1418 = vpop.xlane.xlu0 %1417
    %v1419 = vmul.f32 %v1415, %v670
    %v1420 = vmul.f32 %v1418, %v670
    %v1421 = vadd.f32 %v1419, 1e-05
    %v1422 = vadd.f32 %v1420, 1e-05
    %v1423 = vrsqrt.pop %v1421
    %v1424 = vmul.f32 %v1423, %v1421
    %v1425 = vmul.f32 %v1424, %v1423
    %v1426 = vmul.f32 0.5, %v1425
    %v1427 = vsub.f32 1.5, %v1426
    %v1428 = vmul.f32 %v1423, %v1427
    %vm1429 = vweird.f32 %v1421
    %vm1430 = vweird.f32 %v1423
    %vm1431 = vmor %vm1429, %vm1430
    %v1432 = vsel %vm1431, %v1423, %v1428
    %v1433 = vrsqrt.pop %v1422
    %v1434 = vmul.f32 %v1433, %v1422
    %v1435 = vmul.f32 %v1434, %v1433
    %v1436 = vmul.f32 0.5, %v1435
    %v1437 = vsub.f32 1.5, %v1436
    %v1438 = vmul.f32 %v1433, %v1437
    %vm1439 = vweird.f32 %v1422
    %vm1440 = vweird.f32 %v1433
    %vm1441 = vmor %vm1439, %vm1440
    %v1442 = vsel %vm1441, %v1433, %v1438
    %v1443 = vmul.f32 %v1409, %v1432
    %v1444 = vmul.f32 %v1410, %v1442
    %v1445 = vperm.slane %v1392, 0
    %v1446 = vmul.f32 %v1443, %v1445
    %v1447 = vmul.f32 %v1444, %v1445
    %v1448 = vperm.slane %v1393, 0
    %v1449 = vadd.f32 %v1446, %v1448
    %v1450 = vadd.f32 %v1447, %v1448
    %v1451 = vpack.c.bf16 %v1450, %v1449
    %v1452 = vperm.slane %v1391, 0
    %v1457 = vunpack.c.l.b16 %v1397
    %v1458 = vunpack.c.l.b16 %v1398
    %v1459 = vunpack.c.l.b16 %v1399
    %v1460 = vunpack.c.l.b16 %v1400
    %v1461 = vpack.c.b16 %v1458, %v1457
    %v1462 = vpack.c.b16 %v1460, %v1459
    %v1466 = vsel %vm657, %v1451, 0
    %1468 = vmatpush.bf16.msra.mxu0 0
    %1469 = vmatpush.bf16.msra.mxu0 0
    %1470 = vmatpush.bf16.msra.mxu0 0
    %1471 = vmatpush.bf16.msra.mxu0 0
    %1472 = vmatpush.bf16.msra.mxu0 0
    %1473 = vmatpush.bf16.msra.mxu0 0
    %1474 = vmatpush.bf16.msra.mxu0 %v1462
    %1475 = vmatpush.bf16.msra.mxu0 %v1461
    %1476 = vmatmul.bf16.gmra.mxu0 %v1466
    %v1477 = vpop.f32.mrf.mxu0
    %v1478 = vadd.f32 %v1452, %v1477
    %v1479 = vpop.f32.mrf.mxu0
    %v1480 = vadd.f32 %v1452, %v1479
    %1481 = vdwg.mxu0
    %v1482 = vmax.f32 %v1478, 0.0
    %v1483 = vmax.f32 %v1480, 0.0
    %v1484 = vadd.f32 %v1449, %v1482
    %v1485 = vadd.f32 %v1450, %v1483
    %v1486 = vsel %vm657, %v1484, 0.0
    %1487 = vadd.xlane.f32.xlu0 %v1486
    %v1488 = vpop.xlane.xlu0 %1487
    %v1489 = vsel %vm657, %v1485, 0.0
    %1490 = vadd.xlane.f32.xlu0 %v1489
    %v1491 = vpop.xlane.xlu0 %1490
    %v1492 = vmul.f32 %v1488, %v670
    %v1493 = vmul.f32 %v1491, %v670
    %v1494 = vsub.f32 %v1484, %v1492
    %v1495 = vsub.f32 %v1485, %v1493
    %v1496 = vmul.f32 %v1494, %v1494
    %v1497 = vmul.f32 %v1495, %v1495
    %v1498 = vsel %vm657, %v1496, 0.0
    %1499 = vadd.xlane.f32.xlu0 %v1498
    %v1500 = vpop.xlane.xlu0 %1499
    %v1501 = vsel %vm657, %v1497, 0.0
    %1502 = vadd.xlane.f32.xlu0 %v1501
    %v1503 = vpop.xlane.xlu0 %1502
    %v1504 = vmul.f32 %v1500, %v670
    %v1505 = vmul.f32 %v1503, %v670
    %v1506 = vadd.f32 %v1504, 1e-05
    %v1507 = vadd.f32 %v1505, 1e-05
    %v1508 = vrsqrt.pop %v1506
    %v1509 = vmul.f32 %v1508, %v1506
    %v1510 = vmul.f32 %v1509, %v1508
    %v1511 = vmul.f32 0.5, %v1510
    %v1512 = vsub.f32 1.5, %v1511
    %v1513 = vmul.f32 %v1508, %v1512
    %vm1514 = vweird.f32 %v1506
    %vm1515 = vweird.f32 %v1508
    %vm1516 = vmor %vm1514, %vm1515
    %v1517 = vsel %vm1516, %v1508, %v1513
    %v1518 = vrsqrt.pop %v1507
    %v1519 = vmul.f32 %v1518, %v1507
    %v1520 = vmul.f32 %v1519, %v1518
    %v1521 = vmul.f32 0.5, %v1520
    %v1522 = vsub.f32 1.5, %v1521
    %v1523 = vmul.f32 %v1518, %v1522
    %vm1524 = vweird.f32 %v1507
    %vm1525 = vweird.f32 %v1518
    %vm1526 = vmor %vm1524, %vm1525
    %v1527 = vsel %vm1526, %v1518, %v1523
    %v1528 = vmul.f32 %v1494, %v1517
    %v1529 = vmul.f32 %v1495, %v1527
    %v1530 = vperm.slane %v1394, 0
    %v1531 = vmul.f32 %v1528, %v1530
    %v1532 = vmul.f32 %v1529, %v1530
    %v1533 = vperm.slane %v1395, 0
    %v1534 = vadd.f32 %v1531, %v1533
    %v1535 = vadd.f32 %v1532, %v1533
    %s1536 = scalar_lea.vmem [#allocation2], 32
    %v1537 = vld [vmem:[%s1536] sm:$0xf]
    %v1538 = vld [vmem:[%s1536 + $0x4] sm:$0xf]
    %v1539 = vld [vmem:[%s1536 + $0x8] sm:$0xf]
    %v1540 = vld [vmem:[%s1536 + $0xc] sm:$0xf]
    %v1541 = vpack.c.bf16 %v1535, %v1534
    %s1542 = scalar_lea.vmem %s3, 2
    %v1543 = vld [vmem:[%s1542] sm:$0x1]
    %v1545 = vperm.slane %v1543, 0
    %v1551 = vunpack.c.l.b16 %v1537
    %v1552 = vunpack.c.l.b16 %v1538
    %v1553 = vunpack.c.l.b16 %v1539
    %v1554 = vunpack.c.l.b16 %v1540
    %v1555 = vpack.c.b16 %v1552, %v1551
    %v1556 = vpack.c.b16 %v1554, %v1553
    %v1560 = vsel %vm657, %v1541, 0
    %1562 = vmatpush.bf16.msra.mxu0 0
    %1563 = vmatpush.bf16.msra.mxu0 0
    %1564 = vmatpush.bf16.msra.mxu0 0
    %1565 = vmatpush.bf16.msra.mxu0 0
    %1566 = vmatpush.bf16.msra.mxu0 0
    %1567 = vmatpush.bf16.msra.mxu0 0
    %1568 = vmatpush.bf16.msra.mxu0 %v1556
    %1569 = vmatpush.bf16.msra.mxu0 %v1555
    %1570 = vmatmul.bf16.gmra.mxu0 %v1560
    %v1571 = vpop.f32.mrf.mxu0
    %v1572 = vadd.f32 %v1545, %v1571
    %v1573 = vpop.f32.mrf.mxu0
    %v1574 = vadd.f32 %v1545, %v1573
    %1575 = vdwg.mxu0
    %v1576 = vld [vmem:[%s1] sm:$0x1]
    %v1577 = vpack.c.bf16 %v1576, %v1576
    %v1579 = vsel %vm657, %v1577, 0
    %1581 = vmatpush.bf16.msra.mxu0 0
    %1582 = vmatpush.bf16.msra.mxu0 0
    %1583 = vmatpush.bf16.msra.mxu0 0
    %1584 = vmatpush.bf16.msra.mxu0 0
    %1585 = vmatpush.bf16.msra.mxu0 0
    %1586 = vmatpush.bf16.msra.mxu0 0
    %1587 = vmatpush.bf16.msra.mxu0 %v1556
    %1588 = vmatpush.bf16.msra.mxu0 %v1555
    %1589 = vmatmul.bf16.gmra.mxu0 %v1579
    %v1590 = vpop.f32.mrf.mxu0
    %v1591 = vadd.f32 %v1543, %v1590
    %v1592 = vpop.f32.mrf.mxu0
    %1593 = vdwg.mxu0
    %1595 = vrot.lane.b32.xlu0 %v1572, 96
    %v1596 = vpop.permute.xlu0 %1595
    %v1598 = vsel %vm99, %v1591, 0
    %v1600 = vsel %vm99, %v1596, 0
    %1602 = vmatpush.xpose.msra.mxu0 0.0
    %1603 = vmatpush.xpose.msra.mxu0 0.0
    %1604 = vmatpush.xpose.msra.mxu0 0.0
    %1605 = vmatpush.xpose.msra.mxu0 0.0
    %1606 = vmatpush.xpose.msra.mxu0 0.0
    %1607 = vmatpush.xpose.msra.mxu0 0.0
    %1608 = vmatpush.xpose.msra.mxu0 0.0
    %1609 = vmatpush.xpose.msra.mxu0 0.0
    %1610 = vmatpush.xpose.msra.mxu0 0.0
    %1611 = vmatpush.xpose.msra.mxu0 0.0
    %1612 = vmatpush.xpose.msra.mxu0 0.0
    %1613 = vmatpush.xpose.msra.mxu0 0.0
    %1614 = vmatpush.xpose.msra.mxu0 0.0
    %1615 = vmatpush.xpose.msra.mxu0 0.0
    %1616 = vmatpush.xpose.msra.mxu0 0.0
    %1617 = vmatpush.xpose.msra.mxu0 %v1600
    %1618 = vmatmul.f32.gmra.mxu0 %v1598
    %v1619 = vpop.f32.mrf.mxu0
    %v1620 = vadd.f32 0.0, %v1619
    %1621 = vdwg.mxu0
    %1623 = vrot.lane.b32.xlu0 %v1574, 96
    %v1624 = vpop.permute.xlu0 %1623
    %v1625 = vsel %vm99, %v1624, 0
    %1627 = vmatpush.xpose.msra.mxu0 0.0
    %1628 = vmatpush.xpose.msra.mxu0 0.0
    %1629 = vmatpush.xpose.msra.mxu0 0.0
    %1630 = vmatpush.xpose.msra.mxu0 0.0
    %1631 = vmatpush.xpose.msra.mxu0 0.0
    %1632 = vmatpush.xpose.msra.mxu0 0.0
    %1633 = vmatpush.xpose.msra.mxu0 0.0
    %1634 = vmatpush.xpose.msra.mxu0 0.0
    %1635 = vmatpush.xpose.msra.mxu0 0.0
    %1636 = vmatpush.xpose.msra.mxu0 0.0
    %1637 = vmatpush.xpose.msra.mxu0 0.0
    %1638 = vmatpush.xpose.msra.mxu0 0.0
    %1639 = vmatpush.xpose.msra.mxu0 0.0
    %1640 = vmatpush.xpose.msra.mxu0 0.0
    %1641 = vmatpush.xpose.msra.mxu0 0.0
    %1642 = vmatpush.xpose.msra.mxu0 %v1625
    %1643 = vmatmul.f32.gmra.mxu0 %v1598
    %v1644 = vpop.f32.mrf.mxu0
    %v1645 = vadd.f32 0.0, %v1644
    %1646 = vdwg.mxu0
    %vm1647 = vcmask 57344
    %v1648 = vsel %vm1647, %v1620, -inf
    %1649 = vmax.xlane.f32.xlu0 %v1648
    %v1650 = vpop.xlane.xlu0 %1649
    %v1651 = vsel %vm1647, %v1645, -inf
    %1652 = vmax.xlane.f32.xlu0 %v1651
    %v1653 = vpop.xlane.xlu0 %1652
    %v1654 = vsub.f32 %v1620, %v1650
    %v1655 = vsub.f32 %v1645, %v1653
    %v1656 = vmul.f32 %v1654, 1.442695
    %v1657 = vpow.pop %v1656
    %v1658 = vmul.f32 %v1655, 1.442695
    %v1659 = vpow.pop %v1658
    %v1660 = vsel %vm1647, %v1657, 0.0
    %1661 = vadd.xlane.f32.xlu0 %v1660
    %v1662 = vpop.xlane.xlu0 %1661
    %v1663 = vsel %vm1647, %v1659, 0.0
    %1664 = vadd.xlane.f32.xlu0 %v1663
    %v1665 = vpop.xlane.xlu0 %1664
    %v1666 = vrcp.pop %v1662
    %v1667 = vrcp.pop %v1665
    %v1668 = vmul.f32 %v1657, %v1666
    %v1669 = vmul.f32 %v1659, %v1667
    %1670 = vrot.lane.b32.xlu0 %v1572, 64
    %v1671 = vpop.permute.xlu0 %1670
    %v1674 = vsel %vm99, %v1668, 0
    %1676 = vmatpush.msra.mxu0 0.0
    %1677 = vmatpush.msra.mxu0 0.0
    %1678 = vmatpush.msra.mxu0 0.0
    %1679 = vmatpush.msra.mxu0 0.0
    %1680 = vmatpush.msra.mxu0 0.0
    %1681 = vmatpush.msra.mxu0 0.0
    %1682 = vmatpush.msra.mxu0 0.0
    %1683 = vmatpush.msra.mxu0 0.0
    %1684 = vmatpush.msra.mxu0 0.0
    %1685 = vmatpush.msra.mxu0 0.0
    %1686 = vmatpush.msra.mxu0 0.0
    %1687 = vmatpush.msra.mxu0 0.0
    %1688 = vmatpush.msra.mxu0 0.0
    %1689 = vmatpush.msra.mxu0 0.0
    %1690 = vmatpush.msra.mxu0 0.0
    %1691 = vmatpush.msra.mxu0 %v1671
    %1692 = vmatmul.f32.gmra.mxu0 %v1674
    %v1693 = vpop.f32.mrf.mxu0
    %v1694 = vadd.f32 0.0, %v1693
    %1695 = vdwg.mxu0
    %1696 = vrot.lane.b32.xlu0 %v1574, 64
    %v1697 = vpop.permute.xlu0 %1696
    %v1700 = vsel %vm99, %v1669, 0
    %1702 = vmatpush.msra.mxu0 0.0
    %1703 = vmatpush.msra.mxu0 0.0
    %1704 = vmatpush.msra.mxu0 0.0
    %1705 = vmatpush.msra.mxu0 0.0
    %1706 = vmatpush.msra.mxu0 0.0
    %1707 = vmatpush.msra.mxu0 0.0
    %1708 = vmatpush.msra.mxu0 0.0
    %1709 = vmatpush.msra.mxu0 0.0
    %1710 = vmatpush.msra.mxu0 0.0
    %1711 = vmatpush.msra.mxu0 0.0
    %1712 = vmatpush.msra.mxu0 0.0
    %1713 = vmatpush.msra.mxu0 0.0
    %1714 = vmatpush.msra.mxu0 0.0
    %1715 = vmatpush.msra.mxu0 0.0
    %1716 = vmatpush.msra.mxu0 0.0
    %1717 = vmatpush.msra.mxu0 %v1697
    %1718 = vmatmul.f32.gmra.mxu0 %v1700
    %v1719 = vpop.f32.mrf.mxu0
    %v1720 = vadd.f32 0.0, %v1719
    %1721 = vdwg.mxu0
    %1722 = vrot.lane.b32.xlu0 %v1591, 120
    %v1723 = vpop.permute.xlu0 %1722
    %1724 = vrot.lane.b32.xlu0 %v1572, 88
    %v1725 = vpop.permute.xlu0 %1724
    %v1726 = vsel %vm99, %v1723, 0
    %v1728 = vsel %vm99, %v1725, 0
    %1730 = vmatpush.xpose.msra.mxu0 0.0
    %1731 = vmatpush.xpose.msra.mxu0 0.0
    %1732 = vmatpush.xpose.msra.mxu0 0.0
    %1733 = vmatpush.xpose.msra.mxu0 0.0
    %1734 = vmatpush.xpose.msra.mxu0 0.0
    %1735 = vmatpush.xpose.msra.mxu0 0.0
    %1736 = vmatpush.xpose.msra.mxu0 0.0
    %1737 = vmatpush.xpose.msra.mxu0 0.0
    %1738 = vmatpush.xpose.msra.mxu0 0.0
    %1739 = vmatpush.xpose.msra.mxu0 0.0
    %1740 = vmatpush.xpose.msra.mxu0 0.0
    %1741 = vmatpush.xpose.msra.mxu0 0.0
    %1742 = vmatpush.xpose.msra.mxu0 0.0
    %1743 = vmatpush.xpose.msra.mxu0 0.0
    %1744 = vmatpush.xpose.msra.mxu0 0.0
    %1745 = vmatpush.xpose.msra.mxu0 %v1728
    %1746 = vmatmul.f32.gmra.mxu0 %v1726
    %v1747 = vpop.f32.mrf.mxu0
    %v1748 = vadd.f32 0.0, %v1747
    %1749 = vdwg.mxu0
    %1750 = vrot.lane.b32.xlu0 %v1574, 88
    %v1751 = vpop.permute.xlu0 %1750
    %v1752 = vsel %vm99, %v1751, 0
    %1754 = vmatpush.xpose.msra.mxu0 0.0
    %1755 = vmatpush.xpose.msra.mxu0 0.0
    %1756 = vmatpush.xpose.msra.mxu0 0.0
    %1757 = vmatpush.xpose.msra.mxu0 0.0
    %1758 = vmatpush.xpose.msra.mxu0 0.0
    %1759 = vmatpush.xpose.msra.mxu0 0.0
    %1760 = vmatpush.xpose.msra.mxu0 0.0
    %1761 = vmatpush.xpose.msra.mxu0 0.0
    %1762 = vmatpush.xpose.msra.mxu0 0.0
    %1763 = vmatpush.xpose.msra.mxu0 0.0
    %1764 = vmatpush.xpose.msra.mxu0 0.0
    %1765 = vmatpush.xpose.msra.mxu0 0.0
    %1766 = vmatpush.xpose.msra.mxu0 0.0
    %1767 = vmatpush.xpose.msra.mxu0 0.0
    %1768 = vmatpush.xpose.msra.mxu0 0.0
    %1769 = vmatpush.xpose.msra.mxu0 %v1752
    %1770 = vmatmul.f32.gmra.mxu0 %v1726
    %v1771 = vpop.f32.mrf.mxu0
    %v1772 = vadd.f32 0.0, %v1771
    %1773 = vdwg.mxu0
    %v1774 = vsel %vm1647, %v1748, -inf
    %1775 = vmax.xlane.f32.xlu0 %v1774
    %v1776 = vpop.xlane.xlu0 %1775
    %v1777 = vsel %vm1647, %v1772, -inf
    %1778 = vmax.xlane.f32.xlu0 %v1777
    %v1779 = vpop.xlane.xlu0 %1778
    %v1780 = vsub.f32 %v1748, %v1776
    %v1781 = vsub.f32 %v1772, %v1779
    %v1782 = vmul.f32 %v1780, 1.442695
    %v1783 = vpow.pop %v1782
    %v1784 = vmul.f32 %v1781, 1.442695
    %v1785 = vpow.pop %v1784
    %v1786 = vsel %vm1647, %v1783, 0.0
    %1787 = vadd.xlane.f32.xlu0 %v1786
    %v1788 = vpop.xlane.xlu0 %1787
    %v1789 = vsel %vm1647, %v1785, 0.0
    %1790 = vadd.xlane.f32.xlu0 %v1789
    %v1791 = vpop.xlane.xlu0 %1790
    %v1792 = vrcp.pop %v1788
    %v1793 = vrcp.pop %v1791
    %v1794 = vmul.f32 %v1783, %v1792
    %v1795 = vmul.f32 %v1785, %v1793
    %1796 = vrot.lane.b32.xlu0 %v1572, 56
    %v1797 = vpop.permute.xlu0 %1796
    %v1800 = vsel %vm99, %v1794, 0
    %1802 = vmatpush.msra.mxu0 0.0
    %1803 = vmatpush.msra.mxu0 0.0
    %1804 = vmatpush.msra.mxu0 0.0
    %1805 = vmatpush.msra.mxu0 0.0
    %1806 = vmatpush.msra.mxu0 0.0
    %1807 = vmatpush.msra.mxu0 0.0
    %1808 = vmatpush.msra.mxu0 0.0
    %1809 = vmatpush.msra.mxu0 0.0
    %1810 = vmatpush.msra.mxu0 0.0
    %1811 = vmatpush.msra.mxu0 0.0
    %1812 = vmatpush.msra.mxu0 0.0
    %1813 = vmatpush.msra.mxu0 0.0
    %1814 = vmatpush.msra.mxu0 0.0
    %1815 = vmatpush.msra.mxu0 0.0
    %1816 = vmatpush.msra.mxu0 0.0
    %1817 = vmatpush.msra.mxu0 %v1797
    %1818 = vmatmul.f32.gmra.mxu0 %v1800
    %v1819 = vpop.f32.mrf.mxu0
    %v1820 = vadd.f32 0.0, %v1819
    %1821 = vdwg.mxu0
    %1822 = vrot.lane.b32.xlu0 %v1574, 56
    %v1823 = vpop.permute.xlu0 %1822
    %v1826 = vsel %vm99, %v1795, 0
    %1828 = vmatpush.msra.mxu0 0.0
    %1829 = vmatpush.msra.mxu0 0.0
    %1830 = vmatpush.msra.mxu0 0.0
    %1831 = vmatpush.msra.mxu0 0.0
    %1832 = vmatpush.msra.mxu0 0.0
    %1833 = vmatpush.msra.mxu0 0.0
    %1834 = vmatpush.msra.mxu0 0.0
    %1835 = vmatpush.msra.mxu0 0.0
    %1836 = vmatpush.msra.mxu0 0.0
    %1837 = vmatpush.msra.mxu0 0.0
    %1838 = vmatpush.msra.mxu0 0.0
    %1839 = vmatpush.msra.mxu0 0.0
    %1840 = vmatpush.msra.mxu0 0.0
    %1841 = vmatpush.msra.mxu0 0.0
    %1842 = vmatpush.msra.mxu0 0.0
    %1843 = vmatpush.msra.mxu0 %v1823
    %1844 = vmatmul.f32.gmra.mxu0 %v1826
    %v1845 = vpop.f32.mrf.mxu0
    %v1846 = vadd.f32 0.0, %v1845
    %1847 = vdwg.mxu0
    %1848 = vrot.lane.b32.xlu0 %v1591, 112
    %v1849 = vpop.permute.xlu0 %1848
    %1850 = vrot.lane.b32.xlu0 %v1572, 80
    %v1851 = vpop.permute.xlu0 %1850
    %v1852 = vsel %vm99, %v1849, 0
    %v1854 = vsel %vm99, %v1851, 0
    %1856 = vmatpush.xpose.msra.mxu0 0.0
    %1857 = vmatpush.xpose.msra.mxu0 0.0
    %1858 = vmatpush.xpose.msra.mxu0 0.0
    %1859 = vmatpush.xpose.msra.mxu0 0.0
    %1860 = vmatpush.xpose.msra.mxu0 0.0
    %1861 = vmatpush.xpose.msra.mxu0 0.0
    %1862 = vmatpush.xpose.msra.mxu0 0.0
    %1863 = vmatpush.xpose.msra.mxu0 0.0
    %1864 = vmatpush.xpose.msra.mxu0 0.0
    %1865 = vmatpush.xpose.msra.mxu0 0.0
    %1866 = vmatpush.xpose.msra.mxu0 0.0
    %1867 = vmatpush.xpose.msra.mxu0 0.0
    %1868 = vmatpush.xpose.msra.mxu0 0.0
    %1869 = vmatpush.xpose.msra.mxu0 0.0
    %1870 = vmatpush.xpose.msra.mxu0 0.0
    %1871 = vmatpush.xpose.msra.mxu0 %v1854
    %1872 = vmatmul.f32.gmra.mxu0 %v1852
    %v1873 = vpop.f32.mrf.mxu0
    %v1874 = vadd.f32 0.0, %v1873
    %1875 = vdwg.mxu0
    %1876 = vrot.lane.b32.xlu0 %v1574, 80
    %v1877 = vpop.permute.xlu0 %1876
    %v1878 = vsel %vm99, %v1877, 0
    %1880 = vmatpush.xpose.msra.mxu0 0.0
    %1881 = vmatpush.xpose.msra.mxu0 0.0
    %1882 = vmatpush.xpose.msra.mxu0 0.0
    %1883 = vmatpush.xpose.msra.mxu0 0.0
    %1884 = vmatpush.xpose.msra.mxu0 0.0
    %1885 = vmatpush.xpose.msra.mxu0 0.0
    %1886 = vmatpush.xpose.msra.mxu0 0.0
    %1887 = vmatpush.xpose.msra.mxu0 0.0
    %1888 = vmatpush.xpose.msra.mxu0 0.0
    %1889 = vmatpush.xpose.msra.mxu0 0.0
    %1890 = vmatpush.xpose.msra.mxu0 0.0
    %1891 = vmatpush.xpose.msra.mxu0 0.0
    %1892 = vmatpush.xpose.msra.mxu0 0.0
    %1893 = vmatpush.xpose.msra.mxu0 0.0
    %1894 = vmatpush.xpose.msra.mxu0 0.0
    %1895 = vmatpush.xpose.msra.mxu0 %v1878
    %1896 = vmatmul.f32.gmra.mxu0 %v1852
    %v1897 = vpop.f32.mrf.mxu0
    %v1898 = vadd.f32 0.0, %v1897
    %1899 = vdwg.mxu0
    %v1900 = vsel %vm1647, %v1874, -inf
    %1901 = vmax.xlane.f32.xlu0 %v1900
    %v1902 = vpop.xlane.xlu0 %1901
    %v1903 = vsel %vm1647, %v1898, -inf
    %1904 = vmax.xlane.f32.xlu0 %v1903
    %v1905 = vpop.xlane.xlu0 %1904
    %v1906 = vsub.f32 %v1874, %v1902
    %v1907 = vsub.f32 %v1898, %v1905
    %v1908 = vmul.f32 %v1906, 1.442695
    %v1909 = vpow.pop %v1908
    %v1910 = vmul.f32 %v1907, 1.442695
    %v1911 = vpow.pop %v1910
    %v1912 = vsel %vm1647, %v1909, 0.0
    %1913 = vadd.xlane.f32.xlu0 %v1912
    %v1914 = vpop.xlane.xlu0 %1913
    %v1915 = vsel %vm1647, %v1911, 0.0
    %1916 = vadd.xlane.f32.xlu0 %v1915
    %v1917 = vpop.xlane.xlu0 %1916
    %v1918 = vrcp.pop %v1914
    %v1919 = vrcp.pop %v1917
    %v1920 = vmul.f32 %v1909, %v1918
    %v1921 = vmul.f32 %v1911, %v1919
    %1922 = vrot.lane.b32.xlu0 %v1572, 48
    %v1923 = vpop.permute.xlu0 %1922
    %v1926 = vsel %vm99, %v1920, 0
    %1928 = vmatpush.msra.mxu0 0.0
    %1929 = vmatpush.msra.mxu0 0.0
    %1930 = vmatpush.msra.mxu0 0.0
    %1931 = vmatpush.msra.mxu0 0.0
    %1932 = vmatpush.msra.mxu0 0.0
    %1933 = vmatpush.msra.mxu0 0.0
    %1934 = vmatpush.msra.mxu0 0.0
    %1935 = vmatpush.msra.mxu0 0.0
    %1936 = vmatpush.msra.mxu0 0.0
    %1937 = vmatpush.msra.mxu0 0.0
    %1938 = vmatpush.msra.mxu0 0.0
    %1939 = vmatpush.msra.mxu0 0.0
    %1940 = vmatpush.msra.mxu0 0.0
    %1941 = vmatpush.msra.mxu0 0.0
    %1942 = vmatpush.msra.mxu0 0.0
    %1943 = vmatpush.msra.mxu0 %v1923
    %1944 = vmatmul.f32.gmra.mxu0 %v1926
    %v1945 = vpop.f32.mrf.mxu0
    %v1946 = vadd.f32 0.0, %v1945
    %1947 = vdwg.mxu0
    %1948 = vrot.lane.b32.xlu0 %v1574, 48
    %v1949 = vpop.permute.xlu0 %1948
    %v1952 = vsel %vm99, %v1921, 0
    %1954 = vmatpush.msra.mxu0 0.0
    %1955 = vmatpush.msra.mxu0 0.0
    %1956 = vmatpush.msra.mxu0 0.0
    %1957 = vmatpush.msra.mxu0 0.0
    %1958 = vmatpush.msra.mxu0 0.0
    %1959 = vmatpush.msra.mxu0 0.0
    %1960 = vmatpush.msra.mxu0 0.0
    %1961 = vmatpush.msra.mxu0 0.0
    %1962 = vmatpush.msra.mxu0 0.0
    %1963 = vmatpush.msra.mxu0 0.0
    %1964 = vmatpush.msra.mxu0 0.0
    %1965 = vmatpush.msra.mxu0 0.0
    %1966 = vmatpush.msra.mxu0 0.0
    %1967 = vmatpush.msra.mxu0 0.0
    %1968 = vmatpush.msra.mxu0 0.0
    %1969 = vmatpush.msra.mxu0 %v1949
    %1970 = vmatmul.f32.gmra.mxu0 %v1952
    %v1971 = vpop.f32.mrf.mxu0
    %v1972 = vadd.f32 0.0, %v1971
    %1973 = vdwg.mxu0
    %1974 = vrot.lane.b32.xlu0 %v1591, 104
    %v1975 = vpop.permute.xlu0 %1974
    %1976 = vrot.lane.b32.xlu0 %v1572, 72
    %v1977 = vpop.permute.xlu0 %1976
    %v1978 = vsel %vm99, %v1975, 0
    %v1980 = vsel %vm99, %v1977, 0
    %1982 = vmatpush.xpose.msra.mxu0 0.0
    %1983 = vmatpush.xpose.msra.mxu0 0.0
    %1984 = vmatpush.xpose.msra.mxu0 0.0
    %1985 = vmatpush.xpose.msra.mxu0 0.0
    %1986 = vmatpush.xpose.msra.mxu0 0.0
    %1987 = vmatpush.xpose.msra.mxu0 0.0
    %1988 = vmatpush.xpose.msra.mxu0 0.0
    %1989 = vmatpush.xpose.msra.mxu0 0.0
    %1990 = vmatpush.xpose.msra.mxu0 0.0
    %1991 = vmatpush.xpose.msra.mxu0 0.0
    %1992 = vmatpush.xpose.msra.mxu0 0.0
    %1993 = vmatpush.xpose.msra.mxu0 0.0
    %1994 = vmatpush.xpose.msra.mxu0 0.0
    %1995 = vmatpush.xpose.msra.mxu0 0.0
    %1996 = vmatpush.xpose.msra.mxu0 0.0
    %1997 = vmatpush.xpose.msra.mxu0 %v1980
    %1998 = vmatmul.f32.gmra.mxu0 %v1978
    %v1999 = vpop.f32.mrf.mxu0
    %v2000 = vadd.f32 0.0, %v1999
    %2001 = vdwg.mxu0
    %2002 = vrot.lane.b32.xlu0 %v1574, 72
    %v2003 = vpop.permute.xlu0 %2002
    %v2004 = vsel %vm99, %v2003, 0
    %2006 = vmatpush.xpose.msra.mxu0 0.0
    %2007 = vmatpush.xpose.msra.mxu0 0.0
    %2008 = vmatpush.xpose.msra.mxu0 0.0
    %2009 = vmatpush.xpose.msra.mxu0 0.0
    %2010 = vmatpush.xpose.msra.mxu0 0.0
    %2011 = vmatpush.xpose.msra.mxu0 0.0
    %2012 = vmatpush.xpose.msra.mxu0 0.0
    %2013 = vmatpush.xpose.msra.mxu0 0.0
    %2014 = vmatpush.xpose.msra.mxu0 0.0
    %2015 = vmatpush.xpose.msra.mxu0 0.0
    %2016 = vmatpush.xpose.msra.mxu0 0.0
    %2017 = vmatpush.xpose.msra.mxu0 0.0
    %2018 = vmatpush.xpose.msra.mxu0 0.0
    %2019 = vmatpush.xpose.msra.mxu0 0.0
    %2020 = vmatpush.xpose.msra.mxu0 0.0
    %2021 = vmatpush.xpose.msra.mxu0 %v2004
    %2022 = vmatmul.f32.gmra.mxu0 %v1978
    %v2023 = vpop.f32.mrf.mxu0
    %v2024 = vadd.f32 0.0, %v2023
    %2025 = vdwg.mxu0
    %v2026 = vsel %vm1647, %v2000, -inf
    %2027 = vmax.xlane.f32.xlu0 %v2026
    %v2028 = vpop.xlane.xlu0 %2027
    %v2029 = vsel %vm1647, %v2024, -inf
    %2030 = vmax.xlane.f32.xlu0 %v2029
    %v2031 = vpop.xlane.xlu0 %2030
    %v2032 = vsub.f32 %v2000, %v2028
    %v2033 = vsub.f32 %v2024, %v2031
    %v2034 = vmul.f32 %v2032, 1.442695
    %v2035 = vpow.pop %v2034
    %v2036 = vmul.f32 %v2033, 1.442695
    %v2037 = vpow.pop %v2036
    %v2038 = vsel %vm1647, %v2035, 0.0
    %2039 = vadd.xlane.f32.xlu0 %v2038
    %v2040 = vpop.xlane.xlu0 %2039
    %v2041 = vsel %vm1647, %v2037, 0.0
    %2042 = vadd.xlane.f32.xlu0 %v2041
    %v2043 = vpop.xlane.xlu0 %2042
    %v2044 = vrcp.pop %v2040
    %v2045 = vrcp.pop %v2043
    %v2046 = vmul.f32 %v2035, %v2044
    %v2047 = vmul.f32 %v2037, %v2045
    %2048 = vrot.lane.b32.xlu0 %v1572, 40
    %v2049 = vpop.permute.xlu0 %2048
    %v2052 = vsel %vm99, %v2046, 0
    %2054 = vmatpush.msra.mxu0 0.0
    %2055 = vmatpush.msra.mxu0 0.0
    %2056 = vmatpush.msra.mxu0 0.0
    %2057 = vmatpush.msra.mxu0 0.0
    %2058 = vmatpush.msra.mxu0 0.0
    %2059 = vmatpush.msra.mxu0 0.0
    %2060 = vmatpush.msra.mxu0 0.0
    %2061 = vmatpush.msra.mxu0 0.0
    %2062 = vmatpush.msra.mxu0 0.0
    %2063 = vmatpush.msra.mxu0 0.0
    %2064 = vmatpush.msra.mxu0 0.0
    %2065 = vmatpush.msra.mxu0 0.0
    %2066 = vmatpush.msra.mxu0 0.0
    %2067 = vmatpush.msra.mxu0 0.0
    %2068 = vmatpush.msra.mxu0 0.0
    %2069 = vmatpush.msra.mxu0 %v2049
    %2070 = vmatmul.f32.gmra.mxu0 %v2052
    %v2071 = vpop.f32.mrf.mxu0
    %v2072 = vadd.f32 0.0, %v2071
    %2073 = vdwg.mxu0
    %2074 = vrot.lane.b32.xlu0 %v1574, 40
    %v2075 = vpop.permute.xlu0 %2074
    %v2078 = vsel %vm99, %v2047, 0
    %2080 = vmatpush.msra.mxu0 0.0
    %2081 = vmatpush.msra.mxu0 0.0
    %2082 = vmatpush.msra.mxu0 0.0
    %2083 = vmatpush.msra.mxu0 0.0
    %2084 = vmatpush.msra.mxu0 0.0
    %2085 = vmatpush.msra.mxu0 0.0
    %2086 = vmatpush.msra.mxu0 0.0
    %2087 = vmatpush.msra.mxu0 0.0
    %2088 = vmatpush.msra.mxu0 0.0
    %2089 = vmatpush.msra.mxu0 0.0
    %2090 = vmatpush.msra.mxu0 0.0
    %2091 = vmatpush.msra.mxu0 0.0
    %2092 = vmatpush.msra.mxu0 0.0
    %2093 = vmatpush.msra.mxu0 0.0
    %2094 = vmatpush.msra.mxu0 0.0
    %2095 = vmatpush.msra.mxu0 %v2075
    %2096 = vmatmul.f32.gmra.mxu0 %v2078
    %v2097 = vpop.f32.mrf.mxu0
    %v2098 = vadd.f32 0.0, %v2097
    %2099 = vdwg.mxu0
    %2102 = vrot.lane.b32.xlu0 %v1820, 8
    %v2103 = vpop.permute.xlu0 %2102
    %2104 = vrot.lane.b32.xlu0 %v1846, 8
    %v2105 = vpop.permute.xlu0 %2104
    %2110 = vrot.lane.b32.xlu0 %v1946, 16
    %v2111 = vpop.permute.xlu0 %2110
    %2112 = vrot.lane.b32.xlu0 %v1972, 16
    %v2113 = vpop.permute.xlu0 %2112
    %2118 = vrot.lane.b32.xlu0 %v2072, 24
    %v2119 = vpop.permute.xlu0 %2118
    %2120 = vrot.lane.b32.xlu0 %v2098, 24
    %v2121 = vpop.permute.xlu0 %2120
    %v2124 = vsel %vm99, %v1694, %v2103
    %v2125 = vsel %vm99, %v1720, %v2105
    %v2126 = vsel %vm78, %v2124, %v2111
    %v2127 = vsel %vm78, %v2125, %v2113
    %v2128 = vsel %vm643, %v2126, %v2119
    %v2129 = vsel %vm643, %v2127, %v2121
    %v2130 = vadd.f32 %v1591, %v2128
    %v2131 = vadd.f32 %v1591, %v2129
    %s2132 = scalar_lea.vmem %s5, 16
    %v2133 = vld [vmem:[%s2132] sm:$0x1]
    %v2134 = vld [vmem:[%s2132 + $0x1] sm:$0x1]
    %v2135 = vld [vmem:[%s2132 + $0x2] sm:$0x1]
    %v2136 = vld [vmem:[%s2132 + $0x3] sm:$0x1]
    %v2137 = vld [vmem:[%s2132 + $0x4] sm:$0x1]
    %s2138 = scalar_lea.vmem [#allocation4], 32
    %v2139 = vld [vmem:[%s2138] sm:$0xf]
    %v2140 = vld [vmem:[%s2138 + $0x4] sm:$0xf]
    %v2141 = vld [vmem:[%s2138 + $0x8] sm:$0xf]
    %v2142 = vld [vmem:[%s2138 + $0xc] sm:$0xf]
    %v2145 = vrot.slane %v2131, 7
    %vm2146 = vcmask 1041409
    %v2147 = vsel %vm2146, %v2145, %v2130
    %vm2149 = vcmask 254976
    %v2150 = vsel %vm2149, %v2147, 0.0
    %2151 = vadd.xlane.f32.xlu0 %v2150
    %v2152 = vpop.xlane.xlu0 %2151
    %v2153 = vmul.f32 %v2152, %v670
    %v2155 = vrot.slane %v2153, 1
    %v2158 = vsub.f32 %v2130, %v2153
    %v2159 = vsub.f32 %v2131, %v2155
    %v2160 = vmul.f32 %v2158, %v2158
    %v2161 = vmul.f32 %v2159, %v2159
    %v2164 = vrot.slane %v2161, 7
    %v2165 = vsel %vm2146, %v2164, %v2160
    %v2167 = vsel %vm2149, %v2165, 0.0
    %2168 = vadd.xlane.f32.xlu0 %v2167
    %v2169 = vpop.xlane.xlu0 %2168
    %v2170 = vmul.f32 %v2169, %v670
    %v2171 = vadd.f32 %v2170, 1e-05
    %v2172 = vrsqrt.pop %v2171
    %v2173 = vmul.f32 %v2172, %v2171
    %v2174 = vmul.f32 %v2173, %v2172
    %v2175 = vmul.f32 0.5, %v2174
    %v2176 = vsub.f32 1.5, %v2175
    %v2177 = vmul.f32 %v2172, %v2176
    %vm2178 = vweird.f32 %v2171
    %vm2179 = vweird.f32 %v2172
    %vm2180 = vmor %vm2178, %vm2179
    %v2181 = vsel %vm2180, %v2172, %v2177
    %v2183 = vrot.slane %v2181, 1
    %v2186 = vmul.f32 %v2158, %v2181
    %v2187 = vmul.f32 %v2159, %v2183
    %v2188 = vperm.slane %v2134, 0
    %v2189 = vmul.f32 %v2186, %v2188
    %v2190 = vmul.f32 %v2187, %v2188
    %v2191 = vperm.slane %v2135, 0
    %v2192 = vadd.f32 %v2189, %v2191
    %v2193 = vadd.f32 %v2190, %v2191
    %v2194 = vpack.c.bf16 %v2192, %v2192
    %v2195 = vpack.c.bf16 %v2193, %v2193
    %v2196 = vperm.slane %v2133, 0
    %v2199 = vunpack.c.l.b16 %v2194
    %v2200 = vunpack.c.l.b16 %v2195
    %v2201 = vrot.slane %v2200, 7
    %v2202 = vsel %vm2146, %v2201, %v2199
    %v2203 = vpack.c.b16 %v2202, %v2202
    %v2208 = vunpack.c.l.b16 %v2139
    %v2209 = vunpack.c.l.b16 %v2140
    %v2210 = vunpack.c.l.b16 %v2141
    %v2211 = vunpack.c.l.b16 %v2142
    %v2212 = vpack.c.b16 %v2209, %v2208
    %v2213 = vpack.c.b16 %v2211, %v2210
    %v2217 = vsel %vm657, %v2203, 0
    %2219 = vmatpush.bf16.msra.mxu0 0
    %2220 = vmatpush.bf16.msra.mxu0 0
    %2221 = vmatpush.bf16.msra.mxu0 0
    %2222 = vmatpush.bf16.msra.mxu0 0
    %2223 = vmatpush.bf16.msra.mxu0 0
    %2224 = vmatpush.bf16.msra.mxu0 0
    %2225 = vmatpush.bf16.msra.mxu0 %v2213
    %2226 = vmatpush.bf16.msra.mxu0 %v2212
    %2227 = vmatmul.bf16.gmra.mxu0 %v2217
    %v2228 = vpop.f32.mrf.mxu0
    %v2229 = vadd.f32 %v2196, %v2228
    %v2230 = vpop.f32.mrf.mxu0
    %2231 = vdwg.mxu0
    %v2232 = vmax.f32 %v2229, 0.0
    %v2234 = vrot.slane %v2232, 1
    %v2237 = vadd.f32 %v2192, %v2232
    %v2238 = vadd.f32 %v2193, %v2234
    %v2241 = vrot.slane %v2238, 7
    %v2242 = vsel %vm2146, %v2241, %v2237
    %v2244 = vsel %vm2149, %v2242, 0.0
    %2245 = vadd.xlane.f32.xlu0 %v2244
    %v2246 = vpop.xlane.xlu0 %2245
    %v2247 = vmul.f32 %v2246, %v670
    %v2249 = vrot.slane %v2247, 1
    %v2252 = vsub.f32 %v2237, %v2247
    %v2253 = vsub.f32 %v2238, %v2249
    %v2254 = vmul.f32 %v2252, %v2252
    %v2255 = vmul.f32 %v2253, %v2253
    %v2258 = vrot.slane %v2255, 7
    %v2259 = vsel %vm2146, %v2258, %v2254
    %v2261 = vsel %vm2149, %v2259, 0.0
    %2262 = vadd.xlane.f32.xlu0 %v2261
    %v2263 = vpop.xlane.xlu0 %2262
    %v2264 = vmul.f32 %v2263, %v670
    %v2265 = vadd.f32 %v2264, 1e-05
    %v2266 = vrsqrt.pop %v2265
    %v2267 = vmul.f32 %v2266, %v2265
    %v2268 = vmul.f32 %v2267, %v2266
    %v2269 = vmul.f32 0.5, %v2268
    %v2270 = vsub.f32 1.5, %v2269
    %v2271 = vmul.f32 %v2266, %v2270
    %vm2272 = vweird.f32 %v2265
    %vm2273 = vweird.f32 %v2266
    %vm2274 = vmor %vm2272, %vm2273
    %v2275 = vsel %vm2274, %v2266, %v2271
    %v2277 = vrot.slane %v2275, 1
    %v2280 = vmul.f32 %v2252, %v2275
    %v2281 = vmul.f32 %v2253, %v2277
    %v2282 = vperm.slane %v2136, 0
    %v2283 = vmul.f32 %v2280, %v2282
    %v2284 = vmul.f32 %v2281, %v2282
    %v2285 = vperm.slane %v2137, 0
    %v2286 = vadd.f32 %v2283, %v2285
    %v2287 = vadd.f32 %v2284, %v2285
    %s2288 = scalar_lea.vmem [#allocation2], 48
    %v2289 = vld [vmem:[%s2288] sm:$0xf]
    %v2290 = vld [vmem:[%s2288 + $0x4] sm:$0xf]
    %v2291 = vld [vmem:[%s2288 + $0x8] sm:$0xf]
    %v2292 = vld [vmem:[%s2288 + $0xc] sm:$0xf]
    %v2293 = vpack.c.bf16 %v2286, %v2286
    %v2294 = vpack.c.bf16 %v2287, %v2287
    %s2295 = scalar_lea.vmem %s3, 3
    %v2296 = vld [vmem:[%s2295] sm:$0x1]
    %v2298 = vperm.slane %v2296, 0
    %v2302 = vunpack.c.l.b16 %v2293
    %v2303 = vunpack.c.l.b16 %v2294
    %v2304 = vrot.slane %v2303, 7
    %v2305 = vsel %vm2146, %v2304, %v2302
    %v2306 = vpack.c.b16 %v2305, %v2305
    %v2311 = vunpack.c.l.b16 %v2289
    %v2312 = vunpack.c.l.b16 %v2290
    %v2313 = vunpack.c.l.b16 %v2291
    %v2314 = vunpack.c.l.b16 %v2292
    %v2315 = vpack.c.b16 %v2312, %v2311
    %v2316 = vpack.c.b16 %v2314, %v2313
    %v2320 = vsel %vm657, %v2306, 0
    %2322 = vmatpush.bf16.msra.mxu0 0
    %2323 = vmatpush.bf16.msra.mxu0 0
    %2324 = vmatpush.bf16.msra.mxu0 0
    %2325 = vmatpush.bf16.msra.mxu0 0
    %2326 = vmatpush.bf16.msra.mxu0 0
    %2327 = vmatpush.bf16.msra.mxu0 0
    %2328 = vmatpush.bf16.msra.mxu0 %v2316
    %2329 = vmatpush.bf16.msra.mxu0 %v2315
    %2330 = vmatmul.bf16.gmra.mxu0 %v2320
    %v2331 = vpop.f32.mrf.mxu0
    %v2332 = vadd.f32 %v2298, %v2331
    %v2333 = vpop.f32.mrf.mxu0
    %2334 = vdwg.mxu0
    %2336 = vrot.lane.b32.xlu0 %v2332, 64
    %v2337 = vpop.permute.xlu0 %2336
    %v2339 = vadd.f32 %v2332, %v2337
    %s2340 = scalar_lea.vmem %s5, 24
    %v2341 = vld [vmem:[%s2340] sm:$0x1]
    %v2342 = vld [vmem:[%s2340 + $0x1] sm:$0x1]
    %v2343 = vld [vmem:[%s2340 + $0x2] sm:$0x1]
    %v2344 = vld [vmem:[%s2340 + $0x3] sm:$0x1]
    %v2345 = vld [vmem:[%s2340 + $0x4] sm:$0x1]
    %s2346 = scalar_lea.vmem [#allocation4], 48
    %v2347 = vld [vmem:[%s2346] sm:$0xf]
    %v2348 = vld [vmem:[%s2346 + $0x4] sm:$0xf]
    %v2349 = vld [vmem:[%s2346 + $0x8] sm:$0xf]
    %v2350 = vld [vmem:[%s2346 + $0xc] sm:$0xf]
    %v2351 = vsel %vm2149, %v2339, 0.0
    %2352 = vadd.xlane.f32.xlu0 %v2351
    %v2353 = vpop.xlane.xlu0 %2352
    %v2354 = vmul.f32 %v2353, %v670
    %v2355 = vsub.f32 %v2339, %v2354
    %v2356 = vmul.f32 %v2355, %v2355
    %v2357 = vsel %vm2149, %v2356, 0.0
    %2358 = vadd.xlane.f32.xlu0 %v2357
    %v2359 = vpop.xlane.xlu0 %2358
    %v2360 = vmul.f32 %v2359, %v670
    %v2361 = vadd.f32 %v2360, 1e-05
    %v2362 = vrsqrt.pop %v2361
    %v2363 = vmul.f32 %v2362, %v2361
    %v2364 = vmul.f32 %v2363, %v2362
    %v2365 = vmul.f32 0.5, %v2364
    %v2366 = vsub.f32 1.5, %v2365
    %v2367 = vmul.f32 %v2362, %v2366
    %vm2368 = vweird.f32 %v2361
    %vm2369 = vweird.f32 %v2362
    %vm2370 = vmor %vm2368, %vm2369
    %v2371 = vsel %vm2370, %v2362, %v2367
    %v2372 = vmul.f32 %v2355, %v2371
    %v2373 = vperm.slane %v2342, 0
    %v2374 = vmul.f32 %v2372, %v2373
    %v2375 = vperm.slane %v2343, 0
    %v2376 = vadd.f32 %v2374, %v2375
    %v2377 = vpack.c.bf16 %v2376, %v2376
    %v2378 = vperm.slane %v2341, 0
    %v2383 = vunpack.c.l.b16 %v2347
    %v2384 = vunpack.c.l.b16 %v2348
    %v2385 = vunpack.c.l.b16 %v2349
    %v2386 = vunpack.c.l.b16 %v2350
    %v2387 = vpack.c.b16 %v2384, %v2383
    %v2388 = vpack.c.b16 %v2386, %v2385
    %v2392 = vsel %vm657, %v2377, 0
    %2394 = vmatpush.bf16.msra.mxu0 0
    %2395 = vmatpush.bf16.msra.mxu0 0
    %2396 = vmatpush.bf16.msra.mxu0 0
    %2397 = vmatpush.bf16.msra.mxu0 0
    %2398 = vmatpush.bf16.msra.mxu0 0
    %2399 = vmatpush.bf16.msra.mxu0 0
    %2400 = vmatpush.bf16.msra.mxu0 %v2388
    %2401 = vmatpush.bf16.msra.mxu0 %v2387
    %2402 = vmatmul.bf16.gmra.mxu0 %v2392
    %v2403 = vpop.f32.mrf.mxu0
    %v2404 = vadd.f32 %v2378, %v2403
    %v2405 = vpop.f32.mrf.mxu0
    %2406 = vdwg.mxu0
    %v2407 = vmax.f32 %v2404, 0.0
    %v2408 = vadd.f32 %v2376, %v2407
    %v2409 = vsel %vm2149, %v2408, 0.0
    %2410 = vadd.xlane.f32.xlu0 %v2409
    %v2411 = vpop.xlane.xlu0 %2410
    %v2412 = vmul.f32 %v2411, %v670
    %v2413 = vsub.f32 %v2408, %v2412
    %v2414 = vmul.f32 %v2413, %v2413
    %v2415 = vsel %vm2149, %v2414, 0.0
    %2416 = vadd.xlane.f32.xlu0 %v2415
    %v2417 = vpop.xlane.xlu0 %2416
    %v2418 = vmul.f32 %v2417, %v670
    %v2419 = vadd.f32 %v2418, 1e-05
    %v2420 = vrsqrt.pop %v2419
    %v2421 = vmul.f32 %v2420, %v2419
    %v2422 = vmul.f32 %v2421, %v2420
    %v2423 = vmul.f32 0.5, %v2422
    %v2424 = vsub.f32 1.5, %v2423
    %v2425 = vmul.f32 %v2420, %v2424
    %vm2426 = vweird.f32 %v2419
    %vm2427 = vweird.f32 %v2420
    %vm2428 = vmor %vm2426, %vm2427
    %v2429 = vsel %vm2428, %v2420, %v2425
    %v2430 = vmul.f32 %v2413, %v2429
    %v2431 = vperm.slane %v2344, 0
    %v2432 = vmul.f32 %v2430, %v2431
    %v2433 = vperm.slane %v2345, 0
    %v2434 = vadd.f32 %v2432, %v2433
    %s2435 = scalar_lea.vmem [#allocation2], 64
    %v2436 = vld [vmem:[%s2435] sm:$0xf]
    %v2437 = vld [vmem:[%s2435 + $0x4] sm:$0xf]
    %v2438 = vld [vmem:[%s2435 + $0x8] sm:$0xf]
    %v2439 = vld [vmem:[%s2435 + $0xc] sm:$0xf]
    %v2440 = vpack.c.bf16 %v2434, %v2434
    %s2441 = scalar_lea.vmem %s3, 4
    %v2442 = vld [vmem:[%s2441] sm:$0x1]
    %v2444 = vperm.slane %v2442, 0
    %v2450 = vunpack.c.l.b16 %v2436
    %v2451 = vunpack.c.l.b16 %v2437
    %v2452 = vunpack.c.l.b16 %v2438
    %v2453 = vunpack.c.l.b16 %v2439
    %v2454 = vpack.c.b16 %v2451, %v2450
    %v2455 = vpack.c.b16 %v2453, %v2452
    %v2459 = vsel %vm657, %v2440, 0
    %2461 = vmatpush.bf16.msra.mxu0 0
    %2462 = vmatpush.bf16.msra.mxu0 0
    %2463 = vmatpush.bf16.msra.mxu0 0
    %2464 = vmatpush.bf16.msra.mxu0 0
    %2465 = vmatpush.bf16.msra.mxu0 0
    %2466 = vmatpush.bf16.msra.mxu0 0
    %2467 = vmatpush.bf16.msra.mxu0 %v2455
    %2468 = vmatpush.bf16.msra.mxu0 %v2454
    %2469 = vmatmul.bf16.gmra.mxu0 %v2459
    %v2470 = vpop.f32.mrf.mxu0
    %v2471 = vadd.f32 %v2444, %v2470
    %v2472 = vpop.f32.mrf.mxu0
    %2473 = vdwg.mxu0
    %2475 = vrot.lane.b32.xlu0 %v2471, 64
    %v2476 = vpop.permute.xlu0 %2475
    %v2478 = vadd.f32 %v2471, %v2476
    %s2479 = scalar_lea.vmem %s5, 32
    %v2480 = vld [vmem:[%s2479] sm:$0x1]
    %v2481 = vld [vmem:[%s2479 + $0x1] sm:$0x1]
    %v2482 = vld [vmem:[%s2479 + $0x2] sm:$0x1]
    %v2483 = vld [vmem:[%s2479 + $0x3] sm:$0x1]
    %v2484 = vld [vmem:[%s2479 + $0x4] sm:$0x1]
    %s2485 = scalar_lea.vmem [#allocation4], 64
    %v2486 = vld [vmem:[%s2485] sm:$0xf]
    %v2487 = vld [vmem:[%s2485 + $0x4] sm:$0xf]
    %v2488 = vld [vmem:[%s2485 + $0x8] sm:$0xf]
    %v2489 = vld [vmem:[%s2485 + $0xc] sm:$0xf]
    %v2490 = vsel %vm2149, %v2478, 0.0
    %2491 = vadd.xlane.f32.xlu0 %v2490
    %v2492 = vpop.xlane.xlu0 %2491
    %v2493 = vmul.f32 %v2492, %v670
    %v2494 = vsub.f32 %v2478, %v2493
    %v2495 = vmul.f32 %v2494, %v2494
    %v2496 = vsel %vm2149, %v2495, 0.0
    %2497 = vadd.xlane.f32.xlu0 %v2496
    %v2498 = vpop.xlane.xlu0 %2497
    %v2499 = vmul.f32 %v2498, %v670
    %v2500 = vadd.f32 %v2499, 1e-05
    %v2501 = vrsqrt.pop %v2500
    %v2502 = vmul.f32 %v2501, %v2500
    %v2503 = vmul.f32 %v2502, %v2501
    %v2504 = vmul.f32 0.5, %v2503
    %v2505 = vsub.f32 1.5, %v2504
    %v2506 = vmul.f32 %v2501, %v2505
    %vm2507 = vweird.f32 %v2500
    %vm2508 = vweird.f32 %v2501
    %vm2509 = vmor %vm2507, %vm2508
    %v2510 = vsel %vm2509, %v2501, %v2506
    %v2511 = vmul.f32 %v2494, %v2510
    %v2512 = vperm.slane %v2481, 0
    %v2513 = vmul.f32 %v2511, %v2512
    %v2514 = vperm.slane %v2482, 0
    %v2515 = vadd.f32 %v2513, %v2514
    %v2516 = vpack.c.bf16 %v2515, %v2515
    %v2517 = vperm.slane %v2480, 0
    %v2522 = vunpack.c.l.b16 %v2486
    %v2523 = vunpack.c.l.b16 %v2487
    %v2524 = vunpack.c.l.b16 %v2488
    %v2525 = vunpack.c.l.b16 %v2489
    %v2526 = vpack.c.b16 %v2523, %v2522
    %v2527 = vpack.c.b16 %v2525, %v2524
    %v2531 = vsel %vm657, %v2516, 0
    %2533 = vmatpush.bf16.msra.mxu0 0
    %2534 = vmatpush.bf16.msra.mxu0 0
    %2535 = vmatpush.bf16.msra.mxu0 0
    %2536 = vmatpush.bf16.msra.mxu0 0
    %2537 = vmatpush.bf16.msra.mxu0 0
    %2538 = vmatpush.bf16.msra.mxu0 0
    %2539 = vmatpush.bf16.msra.mxu0 %v2527
    %2540 = vmatpush.bf16.msra.mxu0 %v2526
    %2541 = vmatmul.bf16.gmra.mxu0 %v2531
    %v2542 = vpop.f32.mrf.mxu0
    %v2543 = vadd.f32 %v2517, %v2542
    %v2544 = vpop.f32.mrf.mxu0
    %2545 = vdwg.mxu0
    %v2546 = vmax.f32 %v2543, 0.0
    %v2547 = vadd.f32 %v2515, %v2546
    %v2548 = vsel %vm2149, %v2547, 0.0
    %2549 = vadd.xlane.f32.xlu0 %v2548
    %v2550 = vpop.xlane.xlu0 %2549
    %v2551 = vmul.f32 %v2550, %v670
    %v2552 = vsub.f32 %v2547, %v2551
    %v2553 = vmul.f32 %v2552, %v2552
    %v2554 = vsel %vm2149, %v2553, 0.0
    %2555 = vadd.xlane.f32.xlu0 %v2554
    %v2556 = vpop.xlane.xlu0 %2555
    %v2557 = vmul.f32 %v2556, %v670
    %v2558 = vadd.f32 %v2557, 1e-05
    %v2559 = vrsqrt.pop %v2558
    %v2560 = vmul.f32 %v2559, %v2558
    %v2561 = vmul.f32 %v2560, %v2559
    %v2562 = vmul.f32 0.5, %v2561
    %v2563 = vsub.f32 1.5, %v2562
    %v2564 = vmul.f32 %v2559, %v2563
    %vm2565 = vweird.f32 %v2558
    %vm2566 = vweird.f32 %v2559
    %vm2567 = vmor %vm2565, %vm2566
    %v2568 = vsel %vm2567, %v2559, %v2564
    %v2569 = vmul.f32 %v2552, %v2568
    %v2570 = vperm.slane %v2483, 0
    %v2571 = vmul.f32 %v2569, %v2570
    %v2572 = vperm.slane %v2484, 0
    %v2573 = vadd.f32 %v2571, %v2572
    %v2574 = vld [vmem:[%s6] sm:$0xff]
    %v2575 = vld [vmem:[%s6 + $0x8] sm:$0xff]
    %v2576 = vld [vmem:[%s6 + $0x10] sm:$0xff]
    %v2577 = vld [vmem:[%s6 + $0x18] sm:$0xff]
    %v2578 = vld [vmem:[%s6 + $0x20] sm:$0x1]
    %v2579 = vperm.slane %v2578, 0
    %v2581 = vsel %vm657, %v2573, 0
    %2583 = vmatpush.msra.mxu0 0.0
    %2584 = vmatpush.msra.mxu0 0.0
    %2585 = vmatpush.msra.mxu0 0.0
    %2586 = vmatpush.msra.mxu0 0.0
    %2587 = vmatpush.msra.mxu0 0.0
    %2588 = vmatpush.msra.mxu0 0.0
    %2589 = vmatpush.msra.mxu0 0.0
    %2590 = vmatpush.msra.mxu0 0.0
    %2591 = vmatpush.msra.mxu0 0.0
    %2592 = vmatpush.msra.mxu0 0.0
    %2593 = vmatpush.msra.mxu0 0.0
    %2594 = vmatpush.msra.mxu0 0.0
    %2595 = vmatpush.msra.mxu0 %v2577
    %2596 = vmatpush.msra.mxu0 %v2576
    %2597 = vmatpush.msra.mxu0 %v2575
    %2598 = vmatpush.msra.mxu0 %v2574
    %2599 = vmatmul.f32.gmra.mxu0 %v2581
    %v2600 = vpop.f32.mrf.mxu0
    %v2601 = vadd.f32 %v2579, %v2600
    %2602 = vdwg.mxu0
    %v2604 = vrot.slane %v2601, 1
    %2605 = vrot.lane.b32.xlu0 %v2604, 16
    %v2606 = vpop.permute.xlu0 %2605
    %v2608 = vsel %vm78, %v2601, %v2606
    %vm2609 = vcmask 253952
    %2610 = vst.msk [vmem:[%s7] sm:$0x1] %vm2609, %v2608
    // Predicated region
    $region38: #{_lambda_.1} parent=1 // pred_check
      _
    $region39: #{_lambda_.1} parent=1 // pred_check_branch
      %2612 = sbr.rel (0) target = $region41
    $region40: #{_lambda_.1} parent=1 // pred_region
      _
    $region41: #{_lambda_.1} parent=1 // pred_fallthru
      _
    // Predicated region
    $region42: #{_lambda_.1} parent=1 // pred_check
      _
    $region43: #{_lambda_.1} parent=1 // pred_check_branch
      %2614 = sbr.rel (0) target = $region45
    $region44: #{_lambda_.1} parent=1 // pred_region
      _
    $region45: #{_lambda_.1} parent=1 // pred_fallthru
      _
    %2615 = vsyncpa [#allocation3], 1
    %2616 = vsyncpa [#allocation5], 1

</llo_original>
